<compile_context>
chip_gen: v7x
topology: tpu7x:2x2x1
jax: 0.10.0
libtpu: 0.0.40
codegen_flags: <defaults>
</compile_context>

<pallas_src>
import functools

import jax
import jax.numpy as jnp
from jax.experimental import pallas as pl
from jax.experimental.pallas import tpu as pltpu


K_SQ = 3                    # square_kernel_size (module default)
K_BAND = 7                  # band_kernel_size (module default)
PAD = (K_BAND - 1) // 2     # max halo needed on any spatial axis (= 3)


def _inception_dw_kernel(w_all_ref, w_h_ref, w_w_ref, w_d_ref,
                         x_ref, o_ref, xp_ref, *, n_id, gc):
    """One (batch, channel) volume of InceptionDWConv.

    x_ref / o_ref : (1, 1, D, H, W) VMEM blocks  (H -> sublanes, W -> lanes)
    xp_ref        : (D+2*PAD, H+2*PAD, W+2*PAD) f32 VMEM scratch (zero-padded copy)
    w_*_ref       : per-channel depthwise filter taps in SMEM
    """
    c = pl.program_id(1)
    _, _, D, H, W = o_ref.shape

    c_all = n_id              # first channel of the 3x3x3 branch
    c_h = n_id + gc           # first channel of the (7,1,1) branch
    c_w = n_id + 2 * gc       # first channel of the (1,7,1) branch
    c_d = n_id + 3 * gc       # first channel of the (1,1,7) branch

    def load_padded():
        # Fused zero-padding: done once per conv channel entirely in VMEM,
        # so no padded/im2col copy of the input ever hits HBM.
        xp_ref[...] = jnp.zeros_like(xp_ref)
        xp_ref[PAD:PAD + D, PAD:PAD + H, PAD:PAD + W] = (
            x_ref[0, 0].astype(jnp.float32))

    def tap(dd, dh, dw):
        # Shifted interior view of the padded volume; offsets are static ints
        # in [-PAD, PAD], so these are plain static VMEM slices.
        return xp_ref[PAD + dd:PAD + dd + D,
                      PAD + dh:PAD + dh + H,
                      PAD + dw:PAD + dw + W]

    def store(acc):
        o_ref[0, 0] = acc.astype(o_ref.dtype)

    # ---- identity channels: straight pass-through -------------------------
    @pl.when(c < c_all)
    def _():
        o_ref[0, 0] = x_ref[0, 0]

    # ---- depthwise 3x3x3 branch (dwconv_all) -------------------------------
    @pl.when(jnp.logical_and(c >= c_all, c < c_h))
    def _():
        load_padded()
        ci = c - c_all
        r = K_SQ // 2
        acc = jnp.zeros((D, H, W), jnp.float32)
        for kd in range(K_SQ):
            for kh in range(K_SQ):
                for kw in range(K_SQ):
                    wgt = w_all_ref[ci, (kd * K_SQ + kh) * K_SQ + kw]
                    acc = acc + wgt * tap(kd - r, kh - r, kw - r)
        store(acc)

    # ---- depthwise (7,1,1) branch: conv along D (dwconv_h) -----------------
    @pl.when(jnp.logical_and(c >= c_h, c < c_w))
    def _():
        load_padded()
        ci = c - c_h
        acc = jnp.zeros((D, H, W), jnp.float32)
        for k in range(K_BAND):
            acc = acc + w_h_ref[ci, k] * tap(k - PAD, 0, 0)
        store(acc)

    # ---- depthwise (1,7,1) branch: conv along H (dwconv_w) -----------------
    @pl.when(jnp.logical_and(c >= c_w, c < c_d))
    def _():
        load_padded()
        ci = c - c_w
        acc = jnp.zeros((D, H, W), jnp.float32)
        for k in range(K_BAND):
            acc = acc + w_w_ref[ci, k] * tap(0, k - PAD, 0)
        store(acc)

    # ---- depthwise (1,1,7) branch: conv along W / lane axis (dwconv_d) -----
    @pl.when(c >= c_d)
    def _():
        load_padded()
        ci = c - c_d
        acc = jnp.zeros((D, H, W), jnp.float32)
        for k in range(K_BAND):
            acc = acc + w_d_ref[ci, k] * tap(0, 0, k - PAD)
        store(acc)


def inception_dwconv(x, w_all, w_h, w_w, w_d):
    """x: [N, C, D, H, W]; weights in PyTorch depthwise layout (gc, 1, kD, kH, kW)."""
    N, C, D, H, W = x.shape
    gc = w_all.shape[0]
    n_id = C - 4 * gc
    assert n_id >= 0, "in_channels must cover the four depthwise branches"

    # Flatten the tiny per-channel filters for SMEM (long axis last keeps
    # SMEM padding small); cast to f32 once on the host side.
    wa = jnp.asarray(w_all, jnp.float32).reshape(gc, K_SQ ** 3)
    wh = jnp.asarray(w_h, jnp.float32).reshape(gc, K_BAND)
    ww = jnp.asarray(w_w, jnp.float32).reshape(gc, K_BAND)
    wd = jnp.asarray(w_d, jnp.float32).reshape(gc, K_BAND)

    Dp, Hp, Wp = D + 2 * PAD, H + 2 * PAD, W + 2 * PAD

    # VMEM budget: double-buffered in/out blocks + padded scratch + headroom
    # for compiler temporaries of the tap accumulation; capped for v7x (64 MiB).
    blk_bytes = D * H * W * x.dtype.itemsize
    vmem_bytes = int(4 * blk_bytes + Dp * Hp * Wp * 4 + 4 * blk_bytes + (4 << 20))
    vmem_bytes = min(max(vmem_bytes, 32 << 20), 64 << 20)

    kernel = functools.partial(_inception_dw_kernel, n_id=n_id, gc=gc)

    return pl.pallas_call(
        kernel,
        out_shape=jax.ShapeDtypeStruct((N, C, D, H, W), x.dtype),
        grid=(N, C),
        in_specs=[
            pl.BlockSpec(memory_space=pltpu.MemorySpace.SMEM),   # 3x3x3 taps
            pl.BlockSpec(memory_space=pltpu.MemorySpace.SMEM),   # (7,1,1) taps
            pl.BlockSpec(memory_space=pltpu.MemorySpace.SMEM),   # (1,7,1) taps
            pl.BlockSpec(memory_space=pltpu.MemorySpace.SMEM),   # (1,1,7) taps
            pl.BlockSpec((1, 1, D, H, W), lambda b, c: (b, c, 0, 0, 0)),
        ],
        out_specs=pl.BlockSpec((1, 1, D, H, W), lambda b, c: (b, c, 0, 0, 0)),
        scratch_shapes=[pltpu.VMEM((Dp, Hp, Wp), jnp.float32)],
        compiler_params=pltpu.CompilerParams(
            dimension_semantics=("parallel", "parallel"),
            vmem_limit_bytes=vmem_bytes,
        ),
    )(wa, wh, ww, wd, x)


def _reference(x, w_all, w_h, w_w, w_d):
    """Pure-JAX reference: channel split + depthwise Conv3d branches + concat."""
    N, C, D, H, W = x.shape
    gc = w_all.shape[0]
    n_id = C - 4 * gc

    def dw(xb, w, pad):
        return jax.lax.conv_general_dilated(
            xb, w, window_strides=(1, 1, 1), padding=pad,
            dimension_numbers=("NCDHW", "OIDHW", "NCDHW"),
            feature_group_count=gc)

    x_id = x[:, :n_id]
    x_all = x[:, n_id:n_id + gc]
    x_h = x[:, n_id + gc:n_id + 2 * gc]
    x_w = x[:, n_id + 2 * gc:n_id + 3 * gc]
    x_d = x[:, n_id + 3 * gc:]

    y_all = dw(x_all, w_all, ((1, 1), (1, 1), (1, 1)))
    y_h = dw(x_h, w_h, ((3, 3), (0, 0), (0, 0)))
    y_w = dw(x_w, w_w, ((0, 0), (3, 3), (0, 0)))
    y_d = dw(x_d, w_d, ((0, 0), (0, 0), (3, 3)))
    return jnp.concatenate([x_id, y_all, y_h, y_w, y_d], axis=1)


if __name__ == "__main__":
    key = jax.random.PRNGKey(0)
    kx, k1, k2, k3, k4 = jax.random.split(key, 5)

    # Small 3-D shapes consistent with the module: in_channels=20, ratio 0.2 -> gc=4.
    N, C, D, H, W = 2, 20, 8, 8, 16
    gc = int(C * 0.2)

    x = jax.random.normal(kx, (N, C, D, H, W), dtype=jnp.float32)
    w_all = 0.1 * jax.random.normal(k1, (gc, 1, K_SQ, K_SQ, K_SQ), dtype=jnp.float32)
    w_h = 0.1 * jax.random.normal(k2, (gc, 1, K_BAND, 1, 1), dtype=jnp.float32)
    w_w = 0.1 * jax.random.normal(k3, (gc, 1, 1, K_BAND, 1), dtype=jnp.float32)
    w_d = 0.1 * jax.random.normal(k4, (gc, 1, 1, 1, K_BAND), dtype=jnp.float32)

    out = inception_dwconv(x, w_all, w_h, w_w, w_d)
    out = jax.block_until_ready(out)

    ref = _reference(x, w_all, w_h, w_w, w_d)
    assert out.shape == (N, C, D, H, W), out.shape
    assert jnp.allclose(out, ref, atol=1e-4, rtol=1e-4), float(jnp.max(jnp.abs(out - ref)))

    print("KERNEL_OK")
</pallas_src>

<mosaic_0001>
module attributes {stable_mosaic.version = 11 : i64} {
  func.func @_inception_dw_kernel(%arg0: i32, %arg1: i32, %arg2: memref<4x27xf32, #tpu.memory_space<smem>>, %arg3: memref<4x7xf32, #tpu.memory_space<smem>>, %arg4: memref<4x7xf32, #tpu.memory_space<smem>>, %arg5: memref<4x7xf32, #tpu.memory_space<smem>>, %arg6: memref<1x1x8x8x16xf32, #tpu.memory_space<vmem>>, %arg7: memref<1x1x8x8x16xf32, #tpu.memory_space<vmem>>, %arg8: memref<14x14x22xf32, #tpu.memory_space<vmem>>) attributes {dimension_semantics = [#tpu.dimension_semantics<parallel>, #tpu.dimension_semantics<parallel>], iteration_bounds = array<i64: 2, 20>, scalar_prefetch = 0 : i64, scratch_operands = 1 : i64, tpu.core_type = #tpu.core_type<tc>, window_params = [{transform_indices = @transform_0, window_bounds = array<i64: 4, 27>}, {transform_indices = @transform_1, window_bounds = array<i64: 4, 7>}, {transform_indices = @transform_2, window_bounds = array<i64: 4, 7>}, {transform_indices = @transform_3, window_bounds = array<i64: 4, 7>}, {transform_indices = @transform_4, window_bounds = array<i64: 1, 1, 8, 8, 16>}, {transform_indices = @transform_5, window_bounds = array<i64: 1, 1, 8, 8, 16>}]} {
    %c4_i32 = arith.constant 4 : i32
    %0 = arith.cmpi slt, %arg1, %c4_i32 : i32
    %1 = arith.extui %0 : i1 to i32
    %c0_i32 = arith.constant 0 : i32
    %2 = arith.cmpi ne, %1, %c0_i32 : i32
    scf.if %2 {
      %c0 = arith.constant 0 : index
      %c0_8 = arith.constant 0 : index
      %c0_9 = arith.constant 0 : index
      %c0_10 = arith.constant 0 : index
      %c0_11 = arith.constant 0 : index
      %21 = vector.load %arg6[%c0, %c0_8, %c0_9, %c0_10, %c0_11] : memref<1x1x8x8x16xf32, #tpu.memory_space<vmem>>, vector<1x1x8x8x16xf32>
      %22 = vector.shape_cast %21 : vector<1x1x8x8x16xf32> to vector<8x8x16xf32>
      %c0_12 = arith.constant 0 : index
      %c0_13 = arith.constant 0 : index
      %c0_14 = arith.constant 0 : index
      %c0_15 = arith.constant 0 : index
      %c0_16 = arith.constant 0 : index
      %23 = vector.load %arg7[%c0_12, %c0_13, %c0_14, %c0_15, %c0_16] : memref<1x1x8x8x16xf32, #tpu.memory_space<vmem>>, vector<1x1x8x8x16xf32>
      %24 = vector.shape_cast %23 : vector<1x1x8x8x16xf32> to vector<8x8x16xf32>
      %25 = vector.shape_cast %22 : vector<8x8x16xf32> to vector<1x1x8x8x16xf32>
      tpu.vector_store %arg7[%c0_12, %c0_13, %c0_14, %c0_15, %c0_16], %25 {strides = array<i32>} : memref<1x1x8x8x16xf32, #tpu.memory_space<vmem>>, vector<1x1x8x8x16xf32>,
    } else {
    }
    %c4_i32_0 = arith.constant 4 : i32
    %3 = arith.cmpi sge, %arg1, %c4_i32_0 : i32
    %c8_i32 = arith.constant 8 : i32
    %4 = arith.cmpi slt, %arg1, %c8_i32 : i32
    %5 = arith.andi %3, %4 : i1
    %6 = arith.extui %5 : i1 to i32
    %c0_i32_1 = arith.constant 0 : i32
    %7 = arith.cmpi ne, %6, %c0_i32_1 : i32
    scf.if %7 {
      %cst = arith.constant 0.000000e+00 : f32
      %21 = vector.broadcast %cst : f32 to vector<14x14x22xf32>
      %c0 = arith.constant 0 : index
      %c0_8 = arith.constant 0 : index
      %c0_9 = arith.constant 0 : index
      %22 = vector.load %arg8[%c0, %c0_8, %c0_9] : memref<14x14x22xf32, #tpu.memory_space<vmem>>, vector<14x14x22xf32>
      tpu.vector_store %arg8[%c0, %c0_8, %c0_9], %21 {strides = array<i32>} : memref<14x14x22xf32, #tpu.memory_space<vmem>>, vector<14x14x22xf32>,
      %c0_10 = arith.constant 0 : index
      %c0_11 = arith.constant 0 : index
      %c0_12 = arith.constant 0 : index
      %c0_13 = arith.constant 0 : index
      %c0_14 = arith.constant 0 : index
      %23 = vector.load %arg6[%c0_10, %c0_11, %c0_12, %c0_13, %c0_14] : memref<1x1x8x8x16xf32, #tpu.memory_space<vmem>>, vector<1x1x8x8x16xf32>
      %24 = vector.shape_cast %23 : vector<1x1x8x8x16xf32> to vector<8x8x16xf32>
      %c3 = arith.constant 3 : index
      %c3_15 = arith.constant 3 : index
      %c3_16 = arith.constant 3 : index
      %25 = vector.load %arg8[%c3, %c3_15, %c3_16] : memref<14x14x22xf32, #tpu.memory_space<vmem>>, vector<8x8x16xf32>
      tpu.vector_store %arg8[%c3, %c3_15, %c3_16], %24 {strides = array<i32>} : memref<14x14x22xf32, #tpu.memory_space<vmem>>, vector<8x8x16xf32>,
      %c4_i32_17 = arith.constant 4 : i32
      %26 = arith.subi %arg1, %c4_i32_17 : i32
      %cst_18 = arith.constant 0.000000e+00 : f32
      %27 = vector.broadcast %cst_18 : f32 to vector<8x8x16xf32>
      %28 = arith.index_cast %26 : i32 to index
      %c0_19 = arith.constant 0 : index
      %29 = memref.load %arg2[%28, %c0_19] : memref<4x27xf32, #tpu.memory_space<smem>>
      %c2 = arith.constant 2 : index
      %c2_20 = arith.constant 2 : index
      %c2_21 = arith.constant 2 : index
      %30 = vector.load %arg8[%c2, %c2_20, %c2_21] : memref<14x14x22xf32, #tpu.memory_space<vmem>>, vector<8x8x16xf32>
      %31 = vector.broadcast %29 : f32 to vector<8x8x16xf32>
      %32 = arith.mulf %31, %30 : vector<8x8x16xf32>
      %33 = arith.addf %27, %32 : vector<8x8x16xf32>
      %34 = arith.index_cast %26 : i32 to index
      %c1 = arith.constant 1 : index
      %35 = memref.load %arg2[%34, %c1] : memref<4x27xf32, #tpu.memory_space<smem>>
      %c2_22 = arith.constant 2 : index
      %c2_23 = arith.constant 2 : index
      %c3_24 = arith.constant 3 : index
      %36 = vector.load %arg8[%c2_22, %c2_23, %c3_24] : memref<14x14x22xf32, #tpu.memory_space<vmem>>, vector<8x8x16xf32>
      %37 = vector.broadcast %35 : f32 to vector<8x8x16xf32>
      %38 = arith.mulf %37, %36 : vector<8x8x16xf32>
      %39 = arith.addf %33, %38 : vector<8x8x16xf32>
      %40 = arith.index_cast %26 : i32 to index
      %c2_25 = arith.constant 2 : index
      %41 = memref.load %arg2[%40, %c2_25] : memref<4x27xf32, #tpu.memory_space<smem>>
      %c2_26 = arith.constant 2 : index
      %c2_27 = arith.constant 2 : index
      %c4 = arith.constant 4 : index
      %42 = vector.load %arg8[%c2_26, %c2_27, %c4] : memref<14x14x22xf32, #tpu.memory_space<vmem>>, vector<8x8x16xf32>
      %43 = vector.broadcast %41 : f32 to vector<8x8x16xf32>
      %44 = arith.mulf %43, %42 : vector<8x8x16xf32>
      %45 = arith.addf %39, %44 : vector<8x8x16xf32>
      %46 = arith.index_cast %26 : i32 to index
      %c3_28 = arith.constant 3 : index
      %47 = memref.load %arg2[%46, %c3_28] : memref<4x27xf32, #tpu.memory_space<smem>>
      %c2_29 = arith.constant 2 : index
      %c3_30 = arith.constant 3 : index
      %c2_31 = arith.constant 2 : index
      %48 = vector.load %arg8[%c2_29, %c3_30, %c2_31] : memref<14x14x22xf32, #tpu.memory_space<vmem>>, vector<8x8x16xf32>
      %49 = vector.broadcast %47 : f32 to vector<8x8x16xf32>
      %50 = arith.mulf %49, %48 : vector<8x8x16xf32>
      %51 = arith.addf %45, %50 : vector<8x8x16xf32>
      %52 = arith.index_cast %26 : i32 to index
      %c4_32 = arith.constant 4 : index
      %53 = memref.load %arg2[%52, %c4_32] : memref<4x27xf32, #tpu.memory_space<smem>>
      %c2_33 = arith.constant 2 : index
      %c3_34 = arith.constant 3 : index
      %c3_35 = arith.constant 3 : index
      %54 = vector.load %arg8[%c2_33, %c3_34, %c3_35] : memref<14x14x22xf32, #tpu.memory_space<vmem>>, vector<8x8x16xf32>
      %55 = vector.broadcast %53 : f32 to vector<8x8x16xf32>
      %56 = arith.mulf %55, %54 : vector<8x8x16xf32>
      %57 = arith.addf %51, %56 : vector<8x8x16xf32>
      %58 = arith.index_cast %26 : i32 to index
      %c5 = arith.constant 5 : index
      %59 = memref.load %arg2[%58, %c5] : memref<4x27xf32, #tpu.memory_space<smem>>
      %c2_36 = arith.constant 2 : index
      %c3_37 = arith.constant 3 : index
      %c4_38 = arith.constant 4 : index
      %60 = vector.load %arg8[%c2_36, %c3_37, %c4_38] : memref<14x14x22xf32, #tpu.memory_space<vmem>>, vector<8x8x16xf32>
      %61 = vector.broadcast %59 : f32 to vector<8x8x16xf32>
      %62 = arith.mulf %61, %60 : vector<8x8x16xf32>
      %63 = arith.addf %57, %62 : vector<8x8x16xf32>
      %64 = arith.index_cast %26 : i32 to index
      %c6 = arith.constant 6 : index
      %65 = memref.load %arg2[%64, %c6] : memref<4x27xf32, #tpu.memory_space<smem>>
      %c2_39 = arith.constant 2 : index
      %c4_40 = arith.constant 4 : index
      %c2_41 = arith.constant 2 : index
      %66 = vector.load %arg8[%c2_39, %c4_40, %c2_41] : memref<14x14x22xf32, #tpu.memory_space<vmem>>, vector<8x8x16xf32>
      %67 = vector.broadcast %65 : f32 to vector<8x8x16xf32>
      %68 = arith.mulf %67, %66 : vector<8x8x16xf32>
      %69 = arith.addf %63, %68 : vector<8x8x16xf32>
      %70 = arith.index_cast %26 : i32 to index
      %c7 = arith.constant 7 : index
      %71 = memref.load %arg2[%70, %c7] : memref<4x27xf32, #tpu.memory_space<smem>>
      %c2_42 = arith.constant 2 : index
      %c4_43 = arith.constant 4 : index
      %c3_44 = arith.constant 3 : index
      %72 = vector.load %arg8[%c2_42, %c4_43, %c3_44] : memref<14x14x22xf32, #tpu.memory_space<vmem>>, vector<8x8x16xf32>
      %73 = vector.broadcast %71 : f32 to vector<8x8x16xf32>
      %74 = arith.mulf %73, %72 : vector<8x8x16xf32>
      %75 = arith.addf %69, %74 : vector<8x8x16xf32>
      %76 = arith.index_cast %26 : i32 to index
      %c8 = arith.constant 8 : index
      %77 = memref.load %arg2[%76, %c8] : memref<4x27xf32, #tpu.memory_space<smem>>
      %c2_45 = arith.constant 2 : index
      %c4_46 = arith.constant 4 : index
      %c4_47 = arith.constant 4 : index
      %78 = vector.load %arg8[%c2_45, %c4_46, %c4_47] : memref<14x14x22xf32, #tpu.memory_space<vmem>>, vector<8x8x16xf32>
      %79 = vector.broadcast %77 : f32 to vector<8x8x16xf32>
      %80 = arith.mulf %79, %78 : vector<8x8x16xf32>
      %81 = arith.addf %75, %80 : vector<8x8x16xf32>
      %82 = arith.index_cast %26 : i32 to index
      %c9 = arith.constant 9 : index
      %83 = memref.load %arg2[%82, %c9] : memref<4x27xf32, #tpu.memory_space<smem>>
      %c3_48 = arith.constant 3 : index
      %c2_49 = arith.constant 2 : index
      %c2_50 = arith.constant 2 : index
      %84 = vector.load %arg8[%c3_48, %c2_49, %c2_50] : memref<14x14x22xf32, #tpu.memory_space<vmem>>, vector<8x8x16xf32>
      %85 = vector.broadcast %83 : f32 to vector<8x8x16xf32>
      %86 = arith.mulf %85, %84 : vector<8x8x16xf32>
      %87 = arith.addf %81, %86 : vector<8x8x16xf32>
      %88 = arith.index_cast %26 : i32 to index
      %c10 = arith.constant 10 : index
      %89 = memref.load %arg2[%88, %c10] : memref<4x27xf32, #tpu.memory_space<smem>>
      %c3_51 = arith.constant 3 : index
      %c2_52 = arith.constant 2 : index
      %c3_53 = arith.constant 3 : index
      %90 = vector.load %arg8[%c3_51, %c2_52, %c3_53] : memref<14x14x22xf32, #tpu.memory_space<vmem>>, vector<8x8x16xf32>
      %91 = vector.broadcast %89 : f32 to vector<8x8x16xf32>
      %92 = arith.mulf %91, %90 : vector<8x8x16xf32>
      %93 = arith.addf %87, %92 : vector<8x8x16xf32>
      %94 = arith.index_cast %26 : i32 to index
      %c11 = arith.constant 11 : index
      %95 = memref.load %arg2[%94, %c11] : memref<4x27xf32, #tpu.memory_space<smem>>
      %c3_54 = arith.constant 3 : index
      %c2_55 = arith.constant 2 : index
      %c4_56 = arith.constant 4 : index
      %96 = vector.load %arg8[%c3_54, %c2_55, %c4_56] : memref<14x14x22xf32, #tpu.memory_space<vmem>>, vector<8x8x16xf32>
      %97 = vector.broadcast %95 : f32 to vector<8x8x16xf32>
      %98 = arith.mulf %97, %96 : vector<8x8x16xf32>
      %99 = arith.addf %93, %98 : vector<8x8x16xf32>
      %100 = arith.index_cast %26 : i32 to index
      %c12 = arith.constant 12 : index
      %101 = memref.load %arg2[%100, %c12] : memref<4x27xf32, #tpu.memory_space<smem>>
      %c3_57 = arith.constant 3 : index
      %c3_58 = arith.constant 3 : index
      %c2_59 = arith.constant 2 : index
      %102 = vector.load %arg8[%c3_57, %c3_58, %c2_59] : memref<14x14x22xf32, #tpu.memory_space<vmem>>, vector<8x8x16xf32>
      %103 = vector.broadcast %101 : f32 to vector<8x8x16xf32>
      %104 = arith.mulf %103, %102 : vector<8x8x16xf32>
      %105 = arith.addf %99, %104 : vector<8x8x16xf32>
      %106 = arith.index_cast %26 : i32 to index
      %c13 = arith.constant 13 : index
      %107 = memref.load %arg2[%106, %c13] : memref<4x27xf32, #tpu.memory_space<smem>>
      %c3_60 = arith.constant 3 : index
      %c3_61 = arith.constant 3 : index
      %c3_62 = arith.constant 3 : index
      %108 = vector.load %arg8[%c3_60, %c3_61, %c3_62] : memref<14x14x22xf32, #tpu.memory_space<vmem>>, vector<8x8x16xf32>
      %109 = vector.broadcast %107 : f32 to vector<8x8x16xf32>
      %110 = arith.mulf %109, %108 : vector<8x8x16xf32>
      %111 = arith.addf %105, %110 : vector<8x8x16xf32>
      %112 = arith.index_cast %26 : i32 to index
      %c14 = arith.constant 14 : index
      %113 = memref.load %arg2[%112, %c14] : memref<4x27xf32, #tpu.memory_space<smem>>
      %c3_63 = arith.constant 3 : index
      %c3_64 = arith.constant 3 : index
      %c4_65 = arith.constant 4 : index
      %114 = vector.load %arg8[%c3_63, %c3_64, %c4_65] : memref<14x14x22xf32, #tpu.memory_space<vmem>>, vector<8x8x16xf32>
      %115 = vector.broadcast %113 : f32 to vector<8x8x16xf32>
      %116 = arith.mulf %115, %114 : vector<8x8x16xf32>
      %117 = arith.addf %111, %116 : vector<8x8x16xf32>
      %118 = arith.index_cast %26 : i32 to index
      %c15 = arith.constant 15 : index
      %119 = memref.load %arg2[%118, %c15] : memref<4x27xf32, #tpu.memory_space<smem>>
      %c3_66 = arith.constant 3 : index
      %c4_67 = arith.constant 4 : index
      %c2_68 = arith.constant 2 : index
      %120 = vector.load %arg8[%c3_66, %c4_67, %c2_68] : memref<14x14x22xf32, #tpu.memory_space<vmem>>, vector<8x8x16xf32>
      %121 = vector.broadcast %119 : f32 to vector<8x8x16xf32>
      %122 = arith.mulf %121, %120 : vector<8x8x16xf32>
      %123 = arith.addf %117, %122 : vector<8x8x16xf32>
      %124 = arith.index_cast %26 : i32 to index
      %c16 = arith.constant 16 : index
      %125 = memref.load %arg2[%124, %c16] : memref<4x27xf32, #tpu.memory_space<smem>>
      %c3_69 = arith.constant 3 : index
      %c4_70 = arith.constant 4 : index
      %c3_71 = arith.constant 3 : index
      %126 = vector.load %arg8[%c3_69, %c4_70, %c3_71] : memref<14x14x22xf32, #tpu.memory_space<vmem>>, vector<8x8x16xf32>
      %127 = vector.broadcast %125 : f32 to vector<8x8x16xf32>
      %128 = arith.mulf %127, %126 : vector<8x8x16xf32>
      %129 = arith.addf %123, %128 : vector<8x8x16xf32>
      %130 = arith.index_cast %26 : i32 to index
      %c17 = arith.constant 17 : index
      %131 = memref.load %arg2[%130, %c17] : memref<4x27xf32, #tpu.memory_space<smem>>
      %c3_72 = arith.constant 3 : index
      %c4_73 = arith.constant 4 : index
      %c4_74 = arith.constant 4 : index
      %132 = vector.load %arg8[%c3_72, %c4_73, %c4_74] : memref<14x14x22xf32, #tpu.memory_space<vmem>>, vector<8x8x16xf32>
      %133 = vector.broadcast %131 : f32 to vector<8x8x16xf32>
      %134 = arith.mulf %133, %132 : vector<8x8x16xf32>
      %135 = arith.addf %129, %134 : vector<8x8x16xf32>
      %136 = arith.index_cast %26 : i32 to index
      %c18 = arith.constant 18 : index
      %137 = memref.load %arg2[%136, %c18] : memref<4x27xf32, #tpu.memory_space<smem>>
      %c4_75 = arith.constant 4 : index
      %c2_76 = arith.constant 2 : index
      %c2_77 = arith.constant 2 : index
      %138 = vector.load %arg8[%c4_75, %c2_76, %c2_77] : memref<14x14x22xf32, #tpu.memory_space<vmem>>, vector<8x8x16xf32>
      %139 = vector.broadcast %137 : f32 to vector<8x8x16xf32>
      %140 = arith.mulf %139, %138 : vector<8x8x16xf32>
      %141 = arith.addf %135, %140 : vector<8x8x16xf32>
      %142 = arith.index_cast %26 : i32 to index
      %c19 = arith.constant 19 : index
      %143 = memref.load %arg2[%142, %c19] : memref<4x27xf32, #tpu.memory_space<smem>>
      %c4_78 = arith.constant 4 : index
      %c2_79 = arith.constant 2 : index
      %c3_80 = arith.constant 3 : index
      %144 = vector.load %arg8[%c4_78, %c2_79, %c3_80] : memref<14x14x22xf32, #tpu.memory_space<vmem>>, vector<8x8x16xf32>
      %145 = vector.broadcast %143 : f32 to vector<8x8x16xf32>
      %146 = arith.mulf %145, %144 : vector<8x8x16xf32>
      %147 = arith.addf %141, %146 : vector<8x8x16xf32>
      %148 = arith.index_cast %26 : i32 to index
      %c20 = arith.constant 20 : index
      %149 = memref.load %arg2[%148, %c20] : memref<4x27xf32, #tpu.memory_space<smem>>
      %c4_81 = arith.constant 4 : index
      %c2_82 = arith.constant 2 : index
      %c4_83 = arith.constant 4 : index
      %150 = vector.load %arg8[%c4_81, %c2_82, %c4_83] : memref<14x14x22xf32, #tpu.memory_space<vmem>>, vector<8x8x16xf32>
      %151 = vector.broadcast %149 : f32 to vector<8x8x16xf32>
      %152 = arith.mulf %151, %150 : vector<8x8x16xf32>
      %153 = arith.addf %147, %152 : vector<8x8x16xf32>
      %154 = arith.index_cast %26 : i32 to index
      %c21 = arith.constant 21 : index
      %155 = memref.load %arg2[%154, %c21] : memref<4x27xf32, #tpu.memory_space<smem>>
      %c4_84 = arith.constant 4 : index
      %c3_85 = arith.constant 3 : index
      %c2_86 = arith.constant 2 : index
      %156 = vector.load %arg8[%c4_84, %c3_85, %c2_86] : memref<14x14x22xf32, #tpu.memory_space<vmem>>, vector<8x8x16xf32>
      %157 = vector.broadcast %155 : f32 to vector<8x8x16xf32>
      %158 = arith.mulf %157, %156 : vector<8x8x16xf32>
      %159 = arith.addf %153, %158 : vector<8x8x16xf32>
      %160 = arith.index_cast %26 : i32 to index
      %c22 = arith.constant 22 : index
      %161 = memref.load %arg2[%160, %c22] : memref<4x27xf32, #tpu.memory_space<smem>>
      %c4_87 = arith.constant 4 : index
      %c3_88 = arith.constant 3 : index
      %c3_89 = arith.constant 3 : index
      %162 = vector.load %arg8[%c4_87, %c3_88, %c3_89] : memref<14x14x22xf32, #tpu.memory_space<vmem>>, vector<8x8x16xf32>
      %163 = vector.broadcast %161 : f32 to vector<8x8x16xf32>
      %164 = arith.mulf %163, %162 : vector<8x8x16xf32>
      %165 = arith.addf %159, %164 : vector<8x8x16xf32>
      %166 = arith.index_cast %26 : i32 to index
      %c23 = arith.constant 23 : index
      %167 = memref.load %arg2[%166, %c23] : memref<4x27xf32, #tpu.memory_space<smem>>
      %c4_90 = arith.constant 4 : index
      %c3_91 = arith.constant 3 : index
      %c4_92 = arith.constant 4 : index
      %168 = vector.load %arg8[%c4_90, %c3_91, %c4_92] : memref<14x14x22xf32, #tpu.memory_space<vmem>>, vector<8x8x16xf32>
      %169 = vector.broadcast %167 : f32 to vector<8x8x16xf32>
      %170 = arith.mulf %169, %168 : vector<8x8x16xf32>
      %171 = arith.addf %165, %170 : vector<8x8x16xf32>
      %172 = arith.index_cast %26 : i32 to index
      %c24 = arith.constant 24 : index
      %173 = memref.load %arg2[%172, %c24] : memref<4x27xf32, #tpu.memory_space<smem>>
      %c4_93 = arith.constant 4 : index
      %c4_94 = arith.constant 4 : index
      %c2_95 = arith.constant 2 : index
      %174 = vector.load %arg8[%c4_93, %c4_94, %c2_95] : memref<14x14x22xf32, #tpu.memory_space<vmem>>, vector<8x8x16xf32>
      %175 = vector.broadcast %173 : f32 to vector<8x8x16xf32>
      %176 = arith.mulf %175, %174 : vector<8x8x16xf32>
      %177 = arith.addf %171, %176 : vector<8x8x16xf32>
      %178 = arith.index_cast %26 : i32 to index
      %c25 = arith.constant 25 : index
      %179 = memref.load %arg2[%178, %c25] : memref<4x27xf32, #tpu.memory_space<smem>>
      %c4_96 = arith.constant 4 : index
      %c4_97 = arith.constant 4 : index
      %c3_98 = arith.constant 3 : index
      %180 = vector.load %arg8[%c4_96, %c4_97, %c3_98] : memref<14x14x22xf32, #tpu.memory_space<vmem>>, vector<8x8x16xf32>
      %181 = vector.broadcast %179 : f32 to vector<8x8x16xf32>
      %182 = arith.mulf %181, %180 : vector<8x8x16xf32>
      %183 = arith.addf %177, %182 : vector<8x8x16xf32>
      %184 = arith.index_cast %26 : i32 to index
      %c26 = arith.constant 26 : index
      %185 = memref.load %arg2[%184, %c26] : memref<4x27xf32, #tpu.memory_space<smem>>
      %c4_99 = arith.constant 4 : index
      %c4_100 = arith.constant 4 : index
      %c4_101 = arith.constant 4 : index
      %186 = vector.load %arg8[%c4_99, %c4_100, %c4_101] : memref<14x14x22xf32, #tpu.memory_space<vmem>>, vector<8x8x16xf32>
      %187 = vector.broadcast %185 : f32 to vector<8x8x16xf32>
      %188 = arith.mulf %187, %186 : vector<8x8x16xf32>
      %189 = arith.addf %183, %188 : vector<8x8x16xf32>
      %c0_102 = arith.constant 0 : index
      %c0_103 = arith.constant 0 : index
      %c0_104 = arith.constant 0 : index
      %c0_105 = arith.constant 0 : index
      %c0_106 = arith.constant 0 : index
      %190 = vector.load %arg7[%c0_102, %c0_103, %c0_104, %c0_105, %c0_106] : memref<1x1x8x8x16xf32, #tpu.memory_space<vmem>>, vector<1x1x8x8x16xf32>
      %191 = vector.shape_cast %190 : vector<1x1x8x8x16xf32> to vector<8x8x16xf32>
      %192 = vector.shape_cast %189 : vector<8x8x16xf32> to vector<1x1x8x8x16xf32>
      tpu.vector_store %arg7[%c0_102, %c0_103, %c0_104, %c0_105, %c0_106], %192 {strides = array<i32>} : memref<1x1x8x8x16xf32, #tpu.memory_space<vmem>>, vector<1x1x8x8x16xf32>,
    } else {
    }
    %c8_i32_2 = arith.constant 8 : i32
    %8 = arith.cmpi sge, %arg1, %c8_i32_2 : i32
    %c12_i32 = arith.constant 12 : i32
    %9 = arith.cmpi slt, %arg1, %c12_i32 : i32
    %10 = arith.andi %8, %9 : i1
    %11 = arith.extui %10 : i1 to i32
    %c0_i32_3 = arith.constant 0 : i32
    %12 = arith.cmpi ne, %11, %c0_i32_3 : i32
    scf.if %12 {
      %cst = arith.constant 0.000000e+00 : f32
      %21 = vector.broadcast %cst : f32 to vector<14x14x22xf32>
      %c0 = arith.constant 0 : index
      %c0_8 = arith.constant 0 : index
      %c0_9 = arith.constant 0 : index
      %22 = vector.load %arg8[%c0, %c0_8, %c0_9] : memref<14x14x22xf32, #tpu.memory_space<vmem>>, vector<14x14x22xf32>
      tpu.vector_store %arg8[%c0, %c0_8, %c0_9], %21 {strides = array<i32>} : memref<14x14x22xf32, #tpu.memory_space<vmem>>, vector<14x14x22xf32>,
      %c0_10 = arith.constant 0 : index
      %c0_11 = arith.constant 0 : index
      %c0_12 = arith.constant 0 : index
      %c0_13 = arith.constant 0 : index
      %c0_14 = arith.constant 0 : index
      %23 = vector.load %arg6[%c0_10, %c0_11, %c0_12, %c0_13, %c0_14] : memref<1x1x8x8x16xf32, #tpu.memory_space<vmem>>, vector<1x1x8x8x16xf32>
      %24 = vector.shape_cast %23 : vector<1x1x8x8x16xf32> to vector<8x8x16xf32>
      %c3 = arith.constant 3 : index
      %c3_15 = arith.constant 3 : index
      %c3_16 = arith.constant 3 : index
      %25 = vector.load %arg8[%c3, %c3_15, %c3_16] : memref<14x14x22xf32, #tpu.memory_space<vmem>>, vector<8x8x16xf32>
      tpu.vector_store %arg8[%c3, %c3_15, %c3_16], %24 {strides = array<i32>} : memref<14x14x22xf32, #tpu.memory_space<vmem>>, vector<8x8x16xf32>,
      %c8_i32_17 = arith.constant 8 : i32
      %26 = arith.subi %arg1, %c8_i32_17 : i32
      %cst_18 = arith.constant 0.000000e+00 : f32
      %27 = vector.broadcast %cst_18 : f32 to vector<8x8x16xf32>
      %28 = arith.index_cast %26 : i32 to index
      %c0_19 = arith.constant 0 : index
      %29 = memref.load %arg3[%28, %c0_19] : memref<4x7xf32, #tpu.memory_space<smem>>
      %c0_20 = arith.constant 0 : index
      %c3_21 = arith.constant 3 : index
      %c3_22 = arith.constant 3 : index
      %30 = vector.load %arg8[%c0_20, %c3_21, %c3_22] : memref<14x14x22xf32, #tpu.memory_space<vmem>>, vector<8x8x16xf32>
      %31 = vector.broadcast %29 : f32 to vector<8x8x16xf32>
      %32 = arith.mulf %31, %30 : vector<8x8x16xf32>
      %33 = arith.addf %27, %32 : vector<8x8x16xf32>
      %34 = arith.index_cast %26 : i32 to index
      %c1 = arith.constant 1 : index
      %35 = memref.load %arg3[%34, %c1] : memref<4x7xf32, #tpu.memory_space<smem>>
      %c1_23 = arith.constant 1 : index
      %c3_24 = arith.constant 3 : index
      %c3_25 = arith.constant 3 : index
      %36 = vector.load %arg8[%c1_23, %c3_24, %c3_25] : memref<14x14x22xf32, #tpu.memory_space<vmem>>, vector<8x8x16xf32>
      %37 = vector.broadcast %35 : f32 to vector<8x8x16xf32>
      %38 = arith.mulf %37, %36 : vector<8x8x16xf32>
      %39 = arith.addf %33, %38 : vector<8x8x16xf32>
      %40 = arith.index_cast %26 : i32 to index
      %c2 = arith.constant 2 : index
      %41 = memref.load %arg3[%40, %c2] : memref<4x7xf32, #tpu.memory_space<smem>>
      %c2_26 = arith.constant 2 : index
      %c3_27 = arith.constant 3 : index
      %c3_28 = arith.constant 3 : index
      %42 = vector.load %arg8[%c2_26, %c3_27, %c3_28] : memref<14x14x22xf32, #tpu.memory_space<vmem>>, vector<8x8x16xf32>
      %43 = vector.broadcast %41 : f32 to vector<8x8x16xf32>
      %44 = arith.mulf %43, %42 : vector<8x8x16xf32>
      %45 = arith.addf %39, %44 : vector<8x8x16xf32>
      %46 = arith.index_cast %26 : i32 to index
      %c3_29 = arith.constant 3 : index
      %47 = memref.load %arg3[%46, %c3_29] : memref<4x7xf32, #tpu.memory_space<smem>>
      %c3_30 = arith.constant 3 : index
      %c3_31 = arith.constant 3 : index
      %c3_32 = arith.constant 3 : index
      %48 = vector.load %arg8[%c3_30, %c3_31, %c3_32] : memref<14x14x22xf32, #tpu.memory_space<vmem>>, vector<8x8x16xf32>
      %49 = vector.broadcast %47 : f32 to vector<8x8x16xf32>
      %50 = arith.mulf %49, %48 : vector<8x8x16xf32>
      %51 = arith.addf %45, %50 : vector<8x8x16xf32>
      %52 = arith.index_cast %26 : i32 to index
      %c4 = arith.constant 4 : index
      %53 = memref.load %arg3[%52, %c4] : memref<4x7xf32, #tpu.memory_space<smem>>
      %c4_33 = arith.constant 4 : index
      %c3_34 = arith.constant 3 : index
      %c3_35 = arith.constant 3 : index
      %54 = vector.load %arg8[%c4_33, %c3_34, %c3_35] : memref<14x14x22xf32, #tpu.memory_space<vmem>>, vector<8x8x16xf32>
      %55 = vector.broadcast %53 : f32 to vector<8x8x16xf32>
      %56 = arith.mulf %55, %54 : vector<8x8x16xf32>
      %57 = arith.addf %51, %56 : vector<8x8x16xf32>
      %58 = arith.index_cast %26 : i32 to index
      %c5 = arith.constant 5 : index
      %59 = memref.load %arg3[%58, %c5] : memref<4x7xf32, #tpu.memory_space<smem>>
      %c5_36 = arith.constant 5 : index
      %c3_37 = arith.constant 3 : index
      %c3_38 = arith.constant 3 : index
      %60 = vector.load %arg8[%c5_36, %c3_37, %c3_38] : memref<14x14x22xf32, #tpu.memory_space<vmem>>, vector<8x8x16xf32>
      %61 = vector.broadcast %59 : f32 to vector<8x8x16xf32>
      %62 = arith.mulf %61, %60 : vector<8x8x16xf32>
      %63 = arith.addf %57, %62 : vector<8x8x16xf32>
      %64 = arith.index_cast %26 : i32 to index
      %c6 = arith.constant 6 : index
      %65 = memref.load %arg3[%64, %c6] : memref<4x7xf32, #tpu.memory_space<smem>>
      %c6_39 = arith.constant 6 : index
      %c3_40 = arith.constant 3 : index
      %c3_41 = arith.constant 3 : index
      %66 = vector.load %arg8[%c6_39, %c3_40, %c3_41] : memref<14x14x22xf32, #tpu.memory_space<vmem>>, vector<8x8x16xf32>
      %67 = vector.broadcast %65 : f32 to vector<8x8x16xf32>
      %68 = arith.mulf %67, %66 : vector<8x8x16xf32>
      %69 = arith.addf %63, %68 : vector<8x8x16xf32>
      %c0_42 = arith.constant 0 : index
      %c0_43 = arith.constant 0 : index
      %c0_44 = arith.constant 0 : index
      %c0_45 = arith.constant 0 : index
      %c0_46 = arith.constant 0 : index
      %70 = vector.load %arg7[%c0_42, %c0_43, %c0_44, %c0_45, %c0_46] : memref<1x1x8x8x16xf32, #tpu.memory_space<vmem>>, vector<1x1x8x8x16xf32>
      %71 = vector.shape_cast %70 : vector<1x1x8x8x16xf32> to vector<8x8x16xf32>
      %72 = vector.shape_cast %69 : vector<8x8x16xf32> to vector<1x1x8x8x16xf32>
      tpu.vector_store %arg7[%c0_42, %c0_43, %c0_44, %c0_45, %c0_46], %72 {strides = array<i32>} : memref<1x1x8x8x16xf32, #tpu.memory_space<vmem>>, vector<1x1x8x8x16xf32>,
    } else {
    }
    %c12_i32_4 = arith.constant 12 : i32
    %13 = arith.cmpi sge, %arg1, %c12_i32_4 : i32
    %c16_i32 = arith.constant 16 : i32
    %14 = arith.cmpi slt, %arg1, %c16_i32 : i32
    %15 = arith.andi %13, %14 : i1
    %16 = arith.extui %15 : i1 to i32
    %c0_i32_5 = arith.constant 0 : i32
    %17 = arith.cmpi ne, %16, %c0_i32_5 : i32
    scf.if %17 {
      %cst = arith.constant 0.000000e+00 : f32
      %21 = vector.broadcast %cst : f32 to vector<14x14x22xf32>
      %c0 = arith.constant 0 : index
      %c0_8 = arith.constant 0 : index
      %c0_9 = arith.constant 0 : index
      %22 = vector.load %arg8[%c0, %c0_8, %c0_9] : memref<14x14x22xf32, #tpu.memory_space<vmem>>, vector<14x14x22xf32>
      tpu.vector_store %arg8[%c0, %c0_8, %c0_9], %21 {strides = array<i32>} : memref<14x14x22xf32, #tpu.memory_space<vmem>>, vector<14x14x22xf32>,
      %c0_10 = arith.constant 0 : index
      %c0_11 = arith.constant 0 : index
      %c0_12 = arith.constant 0 : index
      %c0_13 = arith.constant 0 : index
      %c0_14 = arith.constant 0 : index
      %23 = vector.load %arg6[%c0_10, %c0_11, %c0_12, %c0_13, %c0_14] : memref<1x1x8x8x16xf32, #tpu.memory_space<vmem>>, vector<1x1x8x8x16xf32>
      %24 = vector.shape_cast %23 : vector<1x1x8x8x16xf32> to vector<8x8x16xf32>
      %c3 = arith.constant 3 : index
      %c3_15 = arith.constant 3 : index
      %c3_16 = arith.constant 3 : index
      %25 = vector.load %arg8[%c3, %c3_15, %c3_16] : memref<14x14x22xf32, #tpu.memory_space<vmem>>, vector<8x8x16xf32>
      tpu.vector_store %arg8[%c3, %c3_15, %c3_16], %24 {strides = array<i32>} : memref<14x14x22xf32, #tpu.memory_space<vmem>>, vector<8x8x16xf32>,
      %c12_i32_17 = arith.constant 12 : i32
      %26 = arith.subi %arg1, %c12_i32_17 : i32
      %cst_18 = arith.constant 0.000000e+00 : f32
      %27 = vector.broadcast %cst_18 : f32 to vector<8x8x16xf32>
      %28 = arith.index_cast %26 : i32 to index
      %c0_19 = arith.constant 0 : index
      %29 = memref.load %arg4[%28, %c0_19] : memref<4x7xf32, #tpu.memory_space<smem>>
      %c3_20 = arith.constant 3 : index
      %c0_21 = arith.constant 0 : index
      %c3_22 = arith.constant 3 : index
      %30 = vector.load %arg8[%c3_20, %c0_21, %c3_22] : memref<14x14x22xf32, #tpu.memory_space<vmem>>, vector<8x8x16xf32>
      %31 = vector.broadcast %29 : f32 to vector<8x8x16xf32>
      %32 = arith.mulf %31, %30 : vector<8x8x16xf32>
      %33 = arith.addf %27, %32 : vector<8x8x16xf32>
      %34 = arith.index_cast %26 : i32 to index
      %c1 = arith.constant 1 : index
      %35 = memref.load %arg4[%34, %c1] : memref<4x7xf32, #tpu.memory_space<smem>>
      %c3_23 = arith.constant 3 : index
      %c1_24 = arith.constant 1 : index
      %c3_25 = arith.constant 3 : index
      %36 = vector.load %arg8[%c3_23, %c1_24, %c3_25] : memref<14x14x22xf32, #tpu.memory_space<vmem>>, vector<8x8x16xf32>
      %37 = vector.broadcast %35 : f32 to vector<8x8x16xf32>
      %38 = arith.mulf %37, %36 : vector<8x8x16xf32>
      %39 = arith.addf %33, %38 : vector<8x8x16xf32>
      %40 = arith.index_cast %26 : i32 to index
      %c2 = arith.constant 2 : index
      %41 = memref.load %arg4[%40, %c2] : memref<4x7xf32, #tpu.memory_space<smem>>
      %c3_26 = arith.constant 3 : index
      %c2_27 = arith.constant 2 : index
      %c3_28 = arith.constant 3 : index
      %42 = vector.load %arg8[%c3_26, %c2_27, %c3_28] : memref<14x14x22xf32, #tpu.memory_space<vmem>>, vector<8x8x16xf32>
      %43 = vector.broadcast %41 : f32 to vector<8x8x16xf32>
      %44 = arith.mulf %43, %42 : vector<8x8x16xf32>
      %45 = arith.addf %39, %44 : vector<8x8x16xf32>
      %46 = arith.index_cast %26 : i32 to index
      %c3_29 = arith.constant 3 : index
      %47 = memref.load %arg4[%46, %c3_29] : memref<4x7xf32, #tpu.memory_space<smem>>
      %c3_30 = arith.constant 3 : index
      %c3_31 = arith.constant 3 : index
      %c3_32 = arith.constant 3 : index
      %48 = vector.load %arg8[%c3_30, %c3_31, %c3_32] : memref<14x14x22xf32, #tpu.memory_space<vmem>>, vector<8x8x16xf32>
      %49 = vector.broadcast %47 : f32 to vector<8x8x16xf32>
      %50 = arith.mulf %49, %48 : vector<8x8x16xf32>
      %51 = arith.addf %45, %50 : vector<8x8x16xf32>
      %52 = arith.index_cast %26 : i32 to index
      %c4 = arith.constant 4 : index
      %53 = memref.load %arg4[%52, %c4] : memref<4x7xf32, #tpu.memory_space<smem>>
      %c3_33 = arith.constant 3 : index
      %c4_34 = arith.constant 4 : index
      %c3_35 = arith.constant 3 : index
      %54 = vector.load %arg8[%c3_33, %c4_34, %c3_35] : memref<14x14x22xf32, #tpu.memory_space<vmem>>, vector<8x8x16xf32>
      %55 = vector.broadcast %53 : f32 to vector<8x8x16xf32>
      %56 = arith.mulf %55, %54 : vector<8x8x16xf32>
      %57 = arith.addf %51, %56 : vector<8x8x16xf32>
      %58 = arith.index_cast %26 : i32 to index
      %c5 = arith.constant 5 : index
      %59 = memref.load %arg4[%58, %c5] : memref<4x7xf32, #tpu.memory_space<smem>>
      %c3_36 = arith.constant 3 : index
      %c5_37 = arith.constant 5 : index
      %c3_38 = arith.constant 3 : index
      %60 = vector.load %arg8[%c3_36, %c5_37, %c3_38] : memref<14x14x22xf32, #tpu.memory_space<vmem>>, vector<8x8x16xf32>
      %61 = vector.broadcast %59 : f32 to vector<8x8x16xf32>
      %62 = arith.mulf %61, %60 : vector<8x8x16xf32>
      %63 = arith.addf %57, %62 : vector<8x8x16xf32>
      %64 = arith.index_cast %26 : i32 to index
      %c6 = arith.constant 6 : index
      %65 = memref.load %arg4[%64, %c6] : memref<4x7xf32, #tpu.memory_space<smem>>
      %c3_39 = arith.constant 3 : index
      %c6_40 = arith.constant 6 : index
      %c3_41 = arith.constant 3 : index
      %66 = vector.load %arg8[%c3_39, %c6_40, %c3_41] : memref<14x14x22xf32, #tpu.memory_space<vmem>>, vector<8x8x16xf32>
      %67 = vector.broadcast %65 : f32 to vector<8x8x16xf32>
      %68 = arith.mulf %67, %66 : vector<8x8x16xf32>
      %69 = arith.addf %63, %68 : vector<8x8x16xf32>
      %c0_42 = arith.constant 0 : index
      %c0_43 = arith.constant 0 : index
      %c0_44 = arith.constant 0 : index
      %c0_45 = arith.constant 0 : index
      %c0_46 = arith.constant 0 : index
      %70 = vector.load %arg7[%c0_42, %c0_43, %c0_44, %c0_45, %c0_46] : memref<1x1x8x8x16xf32, #tpu.memory_space<vmem>>, vector<1x1x8x8x16xf32>
      %71 = vector.shape_cast %70 : vector<1x1x8x8x16xf32> to vector<8x8x16xf32>
      %72 = vector.shape_cast %69 : vector<8x8x16xf32> to vector<1x1x8x8x16xf32>
      tpu.vector_store %arg7[%c0_42, %c0_43, %c0_44, %c0_45, %c0_46], %72 {strides = array<i32>} : memref<1x1x8x8x16xf32, #tpu.memory_space<vmem>>, vector<1x1x8x8x16xf32>,
    } else {
    }
    %c16_i32_6 = arith.constant 16 : i32
    %18 = arith.cmpi sge, %arg1, %c16_i32_6 : i32
    %19 = arith.extui %18 : i1 to i32
    %c0_i32_7 = arith.constant 0 : i32
    %20 = arith.cmpi ne, %19, %c0_i32_7 : i32
    scf.if %20 {
      %cst = arith.constant 0.000000e+00 : f32
      %21 = vector.broadcast %cst : f32 to vector<14x14x22xf32>
      %c0 = arith.constant 0 : index
      %c0_8 = arith.constant 0 : index
      %c0_9 = arith.constant 0 : index
      %22 = vector.load %arg8[%c0, %c0_8, %c0_9] : memref<14x14x22xf32, #tpu.memory_space<vmem>>, vector<14x14x22xf32>
      tpu.vector_store %arg8[%c0, %c0_8, %c0_9], %21 {strides = array<i32>} : memref<14x14x22xf32, #tpu.memory_space<vmem>>, vector<14x14x22xf32>,
      %c0_10 = arith.constant 0 : index
      %c0_11 = arith.constant 0 : index
      %c0_12 = arith.constant 0 : index
      %c0_13 = arith.constant 0 : index
      %c0_14 = arith.constant 0 : index
      %23 = vector.load %arg6[%c0_10, %c0_11, %c0_12, %c0_13, %c0_14] : memref<1x1x8x8x16xf32, #tpu.memory_space<vmem>>, vector<1x1x8x8x16xf32>
      %24 = vector.shape_cast %23 : vector<1x1x8x8x16xf32> to vector<8x8x16xf32>
      %c3 = arith.constant 3 : index
      %c3_15 = arith.constant 3 : index
      %c3_16 = arith.constant 3 : index
      %25 = vector.load %arg8[%c3, %c3_15, %c3_16] : memref<14x14x22xf32, #tpu.memory_space<vmem>>, vector<8x8x16xf32>
      tpu.vector_store %arg8[%c3, %c3_15, %c3_16], %24 {strides = array<i32>} : memref<14x14x22xf32, #tpu.memory_space<vmem>>, vector<8x8x16xf32>,
      %c16_i32_17 = arith.constant 16 : i32
      %26 = arith.subi %arg1, %c16_i32_17 : i32
      %cst_18 = arith.constant 0.000000e+00 : f32
      %27 = vector.broadcast %cst_18 : f32 to vector<8x8x16xf32>
      %28 = arith.index_cast %26 : i32 to index
      %c0_19 = arith.constant 0 : index
      %29 = memref.load %arg5[%28, %c0_19] : memref<4x7xf32, #tpu.memory_space<smem>>
      %c3_20 = arith.constant 3 : index
      %c3_21 = arith.constant 3 : index
      %c0_22 = arith.constant 0 : index
      %30 = vector.load %arg8[%c3_20, %c3_21, %c0_22] : memref<14x14x22xf32, #tpu.memory_space<vmem>>, vector<8x8x16xf32>
      %31 = vector.broadcast %29 : f32 to vector<8x8x16xf32>
      %32 = arith.mulf %31, %30 : vector<8x8x16xf32>
      %33 = arith.addf %27, %32 : vector<8x8x16xf32>
      %34 = arith.index_cast %26 : i32 to index
      %c1 = arith.constant 1 : index
      %35 = memref.load %arg5[%34, %c1] : memref<4x7xf32, #tpu.memory_space<smem>>
      %c3_23 = arith.constant 3 : index
      %c3_24 = arith.constant 3 : index
      %c1_25 = arith.constant 1 : index
      %36 = vector.load %arg8[%c3_23, %c3_24, %c1_25] : memref<14x14x22xf32, #tpu.memory_space<vmem>>, vector<8x8x16xf32>
      %37 = vector.broadcast %35 : f32 to vector<8x8x16xf32>
      %38 = arith.mulf %37, %36 : vector<8x8x16xf32>
      %39 = arith.addf %33, %38 : vector<8x8x16xf32>
      %40 = arith.index_cast %26 : i32 to index
      %c2 = arith.constant 2 : index
      %41 = memref.load %arg5[%40, %c2] : memref<4x7xf32, #tpu.memory_space<smem>>
      %c3_26 = arith.constant 3 : index
      %c3_27 = arith.constant 3 : index
      %c2_28 = arith.constant 2 : index
      %42 = vector.load %arg8[%c3_26, %c3_27, %c2_28] : memref<14x14x22xf32, #tpu.memory_space<vmem>>, vector<8x8x16xf32>
      %43 = vector.broadcast %41 : f32 to vector<8x8x16xf32>
      %44 = arith.mulf %43, %42 : vector<8x8x16xf32>
      %45 = arith.addf %39, %44 : vector<8x8x16xf32>
      %46 = arith.index_cast %26 : i32 to index
      %c3_29 = arith.constant 3 : index
      %47 = memref.load %arg5[%46, %c3_29] : memref<4x7xf32, #tpu.memory_space<smem>>
      %c3_30 = arith.constant 3 : index
      %c3_31 = arith.constant 3 : index
      %c3_32 = arith.constant 3 : index
      %48 = vector.load %arg8[%c3_30, %c3_31, %c3_32] : memref<14x14x22xf32, #tpu.memory_space<vmem>>, vector<8x8x16xf32>
      %49 = vector.broadcast %47 : f32 to vector<8x8x16xf32>
      %50 = arith.mulf %49, %48 : vector<8x8x16xf32>
      %51 = arith.addf %45, %50 : vector<8x8x16xf32>
      %52 = arith.index_cast %26 : i32 to index
      %c4 = arith.constant 4 : index
      %53 = memref.load %arg5[%52, %c4] : memref<4x7xf32, #tpu.memory_space<smem>>
      %c3_33 = arith.constant 3 : index
      %c3_34 = arith.constant 3 : index
      %c4_35 = arith.constant 4 : index
      %54 = vector.load %arg8[%c3_33, %c3_34, %c4_35] : memref<14x14x22xf32, #tpu.memory_space<vmem>>, vector<8x8x16xf32>
      %55 = vector.broadcast %53 : f32 to vector<8x8x16xf32>
      %56 = arith.mulf %55, %54 : vector<8x8x16xf32>
      %57 = arith.addf %51, %56 : vector<8x8x16xf32>
      %58 = arith.index_cast %26 : i32 to index
      %c5 = arith.constant 5 : index
      %59 = memref.load %arg5[%58, %c5] : memref<4x7xf32, #tpu.memory_space<smem>>
      %c3_36 = arith.constant 3 : index
      %c3_37 = arith.constant 3 : index
      %c5_38 = arith.constant 5 : index
      %60 = vector.load %arg8[%c3_36, %c3_37, %c5_38] : memref<14x14x22xf32, #tpu.memory_space<vmem>>, vector<8x8x16xf32>
      %61 = vector.broadcast %59 : f32 to vector<8x8x16xf32>
      %62 = arith.mulf %61, %60 : vector<8x8x16xf32>
      %63 = arith.addf %57, %62 : vector<8x8x16xf32>
      %64 = arith.index_cast %26 : i32 to index
      %c6 = arith.constant 6 : index
      %65 = memref.load %arg5[%64, %c6] : memref<4x7xf32, #tpu.memory_space<smem>>
      %c3_39 = arith.constant 3 : index
      %c3_40 = arith.constant 3 : index
      %c6_41 = arith.constant 6 : index
      %66 = vector.load %arg8[%c3_39, %c3_40, %c6_41] : memref<14x14x22xf32, #tpu.memory_space<vmem>>, vector<8x8x16xf32>
      %67 = vector.broadcast %65 : f32 to vector<8x8x16xf32>
      %68 = arith.mulf %67, %66 : vector<8x8x16xf32>
      %69 = arith.addf %63, %68 : vector<8x8x16xf32>
      %c0_42 = arith.constant 0 : index
      %c0_43 = arith.constant 0 : index
      %c0_44 = arith.constant 0 : index
      %c0_45 = arith.constant 0 : index
      %c0_46 = arith.constant 0 : index
      %70 = vector.load %arg7[%c0_42, %c0_43, %c0_44, %c0_45, %c0_46] : memref<1x1x8x8x16xf32, #tpu.memory_space<vmem>>, vector<1x1x8x8x16xf32>
      %71 = vector.shape_cast %70 : vector<1x1x8x8x16xf32> to vector<8x8x16xf32>
      %72 = vector.shape_cast %69 : vector<8x8x16xf32> to vector<1x1x8x8x16xf32>
      tpu.vector_store %arg7[%c0_42, %c0_43, %c0_44, %c0_45, %c0_46], %72 {strides = array<i32>} : memref<1x1x8x8x16xf32, #tpu.memory_space<vmem>>, vector<1x1x8x8x16xf32>,
    } else {
    }
    return
  }
  func.func @transform_0(%arg0: i32, %arg1: i32) -> (i32, i32) {
    %c0_i32 = arith.constant 0 : i32
    %c0_i32_0 = arith.constant 0 : i32
    %c0_i32_1 = arith.constant 0 : i32
    return %c0_i32, %c0_i32_0 : i32, i32
  }
  func.func @transform_1(%arg0: i32, %arg1: i32) -> (i32, i32) {
    %c0_i32 = arith.constant 0 : i32
    %c0_i32_0 = arith.constant 0 : i32
    %c0_i32_1 = arith.constant 0 : i32
    return %c0_i32, %c0_i32_0 : i32, i32
  }
  func.func @transform_2(%arg0: i32, %arg1: i32) -> (i32, i32) {
    %c0_i32 = arith.constant 0 : i32
    %c0_i32_0 = arith.constant 0 : i32
    %c0_i32_1 = arith.constant 0 : i32
    return %c0_i32, %c0_i32_0 : i32, i32
  }
  func.func @transform_3(%arg0: i32, %arg1: i32) -> (i32, i32) {
    %c0_i32 = arith.constant 0 : i32
    %c0_i32_0 = arith.constant 0 : i32
    %c0_i32_1 = arith.constant 0 : i32
    return %c0_i32, %c0_i32_0 : i32, i32
  }
  func.func @transform_4(%arg0: i32, %arg1: i32) -> (i32, i32, i32, i32, i32) {
    %c0_i32 = arith.constant 0 : i32
    %c0_i32_0 = arith.constant 0 : i32
    %c0_i32_1 = arith.constant 0 : i32
    %c0_i32_2 = arith.constant 0 : i32
    return %arg0, %arg1, %c0_i32, %c0_i32_0, %c0_i32_1 : i32, i32, i32, i32, i32
  }
  func.func @transform_5(%arg0: i32, %arg1: i32) -> (i32, i32, i32, i32, i32) {
    %c0_i32 = arith.constant 0 : i32
    %c0_i32_0 = arith.constant 0 : i32
    %c0_i32_1 = arith.constant 0 : i32
    %c0_i32_2 = arith.constant 0 : i32
    return %arg0, %arg1, %c0_i32, %c0_i32_0, %c0_i32_1 : i32, i32, i32, i32, i32
  }
}

</mosaic_0001>

<llo_original>
// kernel: tpu_custom_call.1
$region0: #{tpu_custom_call.1}
  #allocation0 [shape = 'u32[]', space=smem, size = 0x4, offset = 0x4, fixed_abs, tag = 'smem constant byte address 0x4 - core index']
  #allocation1 [shape = 'u32[144,128]{1,0:T(1,128)}', space=vmem, size = 0x12000, scoped, tag = 'internal scratch']
  #allocation2 [shape = 'f32[14,14,22]{2,1,0:T(8,128)}', space=vmem, size = 0x1c000, scoped, tag = 'scratch operand']
  %s0 = inlined_call_operand.vmem [shape: f32[4,27], index: 0, kind: input, shape index: {}]
  %s1 = inlined_call_operand.vmem [shape: f32[4,7], index: 1, kind: input, shape index: {}]
  %s2 = inlined_call_operand.vmem [shape: f32[4,7], index: 2, kind: input, shape index: {}]
  %s3 = inlined_call_operand.vmem [shape: f32[4,7], index: 3, kind: input, shape index: {}]
  %s4 = inlined_call_operand.vmem [shape: f32[2,20,8,8,16], index: 4, kind: input, shape index: {}]
  %s5 = inlined_call_operand.vmem [shape: f32[2,20,8,8,16], index: 5, kind: output, shape index: {}]
  %s6 = sld [smem:[#allocation0]]
  $region89: #{tpu_custom_call.1} parent=0
    _
  %s8 = ssub.s32 1, %s6
  %s9 = scalar_select 0, %s8, %s6
  $region1: #{tpu_custom_call.1} parent=0
    #allocation3 [shape = 'u8[2048]{0}', space=smem, size = 0x800, scoped, tag = 'input window, operand 0, single buffered']
    #allocation4 [shape = 's32[2]{0}', space=sflag, size = 0x8, scoped, tag = 'scoped memory for tpu_custom_call.1']
    #allocation5 [shape = 'u8[2048]{0}', space=smem, size = 0x800, scoped, tag = 'input window, operand 1, single buffered']
    #allocation6 [shape = 's32[1]{0}', space=sflag, size = 0x4, scoped, tag = 'scoped memory for tpu_custom_call.1']
    #allocation7 [shape = 'u8[2048]{0}', space=smem, size = 0x800, scoped, tag = 'input window, operand 2, single buffered']
    #allocation8 [shape = 'u8[2048]{0}', space=smem, size = 0x800, scoped, tag = 'input window, operand 3, single buffered']
    #allocation9 [shape = 's32[1]{0}', space=sflag, size = 0x4, scoped, tag = 'scoped memory for tpu_custom_call.1']
    %10 = vsyncpa [#allocation4], 0
    %11 = vsyncpa [#allocation6], 0
    %12 = vsyncpa [#allocation9], 0
    loop: start=0, step=1, limit=42
    $region2: #{tpu_custom_call.1} parent=1 // loop_pre_header
      _
    $region3: #{tpu_custom_call.1} parent=1 // loop_header
      %s14 = sphi 0, %s18
      %p15 = scmp.ge.s32.totalorder %s14, 42
      %s21 = sphi 0, %s33
      %s22 = sphi 0, %s29
      %s23 = sphi 0, %s21
      %s24 = sphi 0, %s22
      %s25 = sphi 0, %s23
      %s26 = sphi 0, %s24
      %s34 = sphi 0, %s34
      %s36 = sphi 0, %s34
      %s37 = sphi 0, %s36
      %s51 = sphi 0, %s37
      %s55 = sphi 0, %s55
      %s57 = sphi 0, %s55
      %s58 = sphi 0, %s57
      %s72 = sphi 0, %s58
      %s76 = sphi 0, %s76
      %s78 = sphi 0, %s76
      %s79 = sphi 0, %s78
      %s93 = sphi 0, %s79
      %s97 = sphi 0, %s97
      %s99 = sphi 0, %s97
      %s100 = sphi 0, %s99
      %s114 = sphi 0, %s100
      %s122 = sphi 0, %s124
      %s125 = sphi 0, %s122
      %s126 = sphi 0, %s125
      %s142 = sphi 0, %s126
      %s150 = sphi 0, %s152
      %s153 = sphi 0, %s150
      %s154 = sphi 0, %s153
      %s170 = sphi 0, %s154
    $region4: #{tpu_custom_call.1} parent=1 // loop_header_branch
      %17 = sbr.rel (%p15) target = $region8
    $region5: #{tpu_custom_call.1} parent=1 // loop_body
      %s19 = ssub.s32 %s14, 1
      %s20 = ssub.s32 %s14, 2
      %s27 = sadd.s32 1, %s22
      %p28 = scmp.ge.s32.totalorder %s27, 20
      %s29 = scalar_select %p28, 0, %s27
      %s30 = sadd.s32 1, %s21
      %s31 = scalar_select %p28, %s30, %s21
      %p32 = scmp.ge.s32.totalorder %s31, 2
      %s33 = scalar_select %p32, 0, %s31
      %s35 = sadd.s32 %s34, 1
      %p38 = scmp.eq.s32.totalorder %s14, 39
      %p39 = scmp.ne.s32.totalorder %s34, %s36
      %p40 = scmp.eq.s32.totalorder %s14, 0
      %p41 = por %p39, %p40
      %p42 = scmp.ne.s32.totalorder %s34, %s36
      %p43 = scmp.eq.s32.totalorder %s19, 39
      %p44 = por %p42, %p43
      %p45 = scmp.ne.s32.totalorder %s36, %s37
      %p46 = scmp.eq.s32.totalorder %s19, 0
      %p47 = por %p45, %p46
      %p48 = scmp.ne.s32.totalorder %s36, %s37
      %p49 = scmp.eq.s32.totalorder %s20, 39
      %p50 = por %p48, %p49
      %p52 = scmp.ne.s32.totalorder %s37, %s51
      %p53 = scmp.eq.s32.totalorder %s20, 0
      %p54 = por %p52, %p53
      %s56 = sadd.s32 %s55, 1
      %p59 = scmp.eq.s32.totalorder %s14, 39
      %p60 = scmp.ne.s32.totalorder %s55, %s57
      %p61 = scmp.eq.s32.totalorder %s14, 0
      %p62 = por %p60, %p61
      %p63 = scmp.ne.s32.totalorder %s55, %s57
      %p64 = scmp.eq.s32.totalorder %s19, 39
      %p65 = por %p63, %p64
      %p66 = scmp.ne.s32.totalorder %s57, %s58
      %p67 = scmp.eq.s32.totalorder %s19, 0
      %p68 = por %p66, %p67
      %p69 = scmp.ne.s32.totalorder %s57, %s58
      %p70 = scmp.eq.s32.totalorder %s20, 39
      %p71 = por %p69, %p70
      %p73 = scmp.ne.s32.totalorder %s58, %s72
      %p74 = scmp.eq.s32.totalorder %s20, 0
      %p75 = por %p73, %p74
      %s77 = sadd.s32 %s76, 1
      %p80 = scmp.eq.s32.totalorder %s14, 39
      %p81 = scmp.ne.s32.totalorder %s76, %s78
      %p82 = scmp.eq.s32.totalorder %s14, 0
      %p83 = por %p81, %p82
      %p84 = scmp.ne.s32.totalorder %s76, %s78
      %p85 = scmp.eq.s32.totalorder %s19, 39
      %p86 = por %p84, %p85
      %p87 = scmp.ne.s32.totalorder %s78, %s79
      %p88 = scmp.eq.s32.totalorder %s19, 0
      %p89 = por %p87, %p88
      %p90 = scmp.ne.s32.totalorder %s78, %s79
      %p91 = scmp.eq.s32.totalorder %s20, 39
      %p92 = por %p90, %p91
      %p94 = scmp.ne.s32.totalorder %s79, %s93
      %p95 = scmp.eq.s32.totalorder %s20, 0
      %p96 = por %p94, %p95
      %s98 = sadd.s32 %s97, 1
      %p101 = scmp.eq.s32.totalorder %s14, 39
      %p102 = scmp.ne.s32.totalorder %s97, %s99
      %p103 = scmp.eq.s32.totalorder %s14, 0
      %p104 = por %p102, %p103
      %p105 = scmp.ne.s32.totalorder %s97, %s99
      %p106 = scmp.eq.s32.totalorder %s19, 39
      %p107 = por %p105, %p106
      %p108 = scmp.ne.s32.totalorder %s99, %s100
      %p109 = scmp.eq.s32.totalorder %s19, 0
      %p110 = por %p108, %p109
      %p111 = scmp.ne.s32.totalorder %s99, %s100
      %p112 = scmp.eq.s32.totalorder %s20, 39
      %p113 = por %p111, %p112
      %p115 = scmp.ne.s32.totalorder %s100, %s114
      %p116 = scmp.eq.s32.totalorder %s20, 0
      %p117 = por %p115, %p116
      %s118 = ssub.s32 %s21, %s33
      %s119 = ssub.s32 %s22, %s29
      %s120 = sor.u32 %s118, %s119
      %p121 = scmp.eq.s32.totalorder %s120, 0
      %s123 = sadd.s32 %s122, 1
      %s124 = scalar_select %p121, %s122, %s123
      %p127 = pneg %p121
      %p128 = scmp.eq.s32.totalorder %s14, 39
      %p129 = por %p127, %p128
      %p130 = scmp.ne.s32.totalorder %s122, %s125
      %p131 = scmp.eq.s32.totalorder %s14, 0
      %p132 = por %p130, %p131
      %p133 = scmp.ne.s32.totalorder %s122, %s125
      %p134 = scmp.eq.s32.totalorder %s19, 39
      %p135 = por %p133, %p134
      %p136 = scmp.ne.s32.totalorder %s125, %s126
      %p137 = scmp.eq.s32.totalorder %s19, 0
      %p138 = por %p136, %p137
      %p139 = scmp.ne.s32.totalorder %s125, %s126
      %p140 = scmp.eq.s32.totalorder %s20, 39
      %p141 = por %p139, %p140
      %p143 = scmp.ne.s32.totalorder %s126, %s142
      %p144 = scmp.eq.s32.totalorder %s20, 0
      %p145 = por %p143, %p144
      %s146 = ssub.s32 %s21, %s33
      %s147 = ssub.s32 %s22, %s29
      %s148 = sor.u32 %s146, %s147
      %p149 = scmp.eq.s32.totalorder %s148, 0
      %s151 = sadd.s32 %s150, 1
      %s152 = scalar_select %p149, %s150, %s151
      %p155 = pneg %p149
      %p156 = scmp.eq.s32.totalorder %s14, 39
      %p157 = por %p155, %p156
      %p158 = scmp.ne.s32.totalorder %s150, %s153
      %p159 = scmp.eq.s32.totalorder %s14, 0
      %p160 = por %p158, %p159
      %p161 = scmp.ne.s32.totalorder %s150, %s153
      %p162 = scmp.eq.s32.totalorder %s19, 39
      %p163 = por %p161, %p162
      %p164 = scmp.ne.s32.totalorder %s153, %s154
      %p165 = scmp.eq.s32.totalorder %s19, 0
      %p166 = por %p164, %p165
      %p167 = scmp.ne.s32.totalorder %s153, %s154
      %p168 = scmp.eq.s32.totalorder %s20, 39
      %p169 = por %p167, %p168
      %p171 = scmp.ne.s32.totalorder %s154, %s170
      %p172 = scmp.eq.s32.totalorder %s20, 0
      %p173 = por %p171, %p172
      %p174 = scmp.le.s32.totalorder 1, %s14
      %p175 = scmp.lt.s32.totalorder %s14, 41
      %p176 = pnand %p174, %p175
      %p177 = pneg %p176
      // Predicated region
      $region9: #{tpu_custom_call.1} parent=5 // pred_check
        _
      $region10: #{tpu_custom_call.1} parent=5 // pred_check_branch
        %179 = sbr.rel (%p176) target = $region12
      $region11: #{tpu_custom_call.1} parent=5 // pred_region
        %s180 = ssub.s32 %s14, 1
        // Predicated region
        $region13: #{tpu_custom_call.1} parent=11 // pred_check
          %p181 = pneg %p47
        $region14: #{tpu_custom_call.1} parent=11 // pred_check_branch
          %183 = sbr.rel (%p181) target = $region16
        $region15: #{tpu_custom_call.1} parent=11 // pred_region
          %s185 = ssub.s32 64, 64
          %186 = vsyncadd [#allocation4], %s185
          %s188 = sshll.u32 %s0, 4
          %s189 = int_to_ptr.vmem [resolvable:$true] %s188
          %191 = dma.vmem_to_smem %s189, 64, [#allocation3], [#allocation4]
        $region16: #{tpu_custom_call.1} parent=11 // pred_fallthru
          _
        // Predicated region
        $region17: #{tpu_custom_call.1} parent=11 // pred_check
          %p192 = pneg %p68
        $region18: #{tpu_custom_call.1} parent=11 // pred_check_branch
          %194 = sbr.rel (%p192) target = $region20
        $region19: #{tpu_custom_call.1} parent=11 // pred_region
          %s196 = ssub.s32 64, 64
          %197 = vsyncadd [#allocation6], %s196
          %s199 = sshll.u32 %s1, 4
          %s200 = int_to_ptr.vmem [resolvable:$true] %s199
          %202 = dma.vmem_to_smem %s200, 64, [#allocation5], [#allocation6]
        $region20: #{tpu_custom_call.1} parent=11 // pred_fallthru
          _
        // Predicated region
        $region21: #{tpu_custom_call.1} parent=11 // pred_check
          %p203 = pneg %p89
        $region22: #{tpu_custom_call.1} parent=11 // pred_check_branch
          %205 = sbr.rel (%p203) target = $region24
        $region23: #{tpu_custom_call.1} parent=11 // pred_region
          %s207 = ssub.s32 64, 64
          %208 = vsyncadd [#allocation6], %s207
          %s210 = sshll.u32 %s2, 4
          %s211 = int_to_ptr.vmem [resolvable:$true] %s210
          %213 = dma.vmem_to_smem %s211, 64, [#allocation7], [#allocation6]
        $region24: #{tpu_custom_call.1} parent=11 // pred_fallthru
          _
        // Predicated region
        $region25: #{tpu_custom_call.1} parent=11 // pred_check
          %p214 = pneg %p110
        $region26: #{tpu_custom_call.1} parent=11 // pred_check_branch
          %216 = sbr.rel (%p214) target = $region28
        $region27: #{tpu_custom_call.1} parent=11 // pred_region
          %s218 = ssub.s32 64, 64
          %219 = vsyncadd [#allocation9], %s218
          %s221 = sshll.u32 %s3, 4
          %s222 = int_to_ptr.vmem [resolvable:$true] %s221
          %224 = dma.vmem_to_smem %s222, 64, [#allocation8], [#allocation9]
        $region28: #{tpu_custom_call.1} parent=11 // pred_fallthru
          _
      $region12: #{tpu_custom_call.1} parent=5 // pred_fallthru
        _
      %p225 = scmp.lt.s32.totalorder %s14, 40
      // Predicated region
      $region29: #{tpu_custom_call.1} parent=5 // pred_check
        %p226 = pneg %p225
      $region30: #{tpu_custom_call.1} parent=5 // pred_check_branch
        %228 = sbr.rel (%p226) target = $region32
      $region31: #{tpu_custom_call.1} parent=5 // pred_region
        // Predicated region
        $region33: #{tpu_custom_call.1} parent=31 // pred_check
          %p229 = pneg %p132
        $region34: #{tpu_custom_call.1} parent=31 // pred_check_branch
          %231 = sbr.rel (%p229) target = $region36
        $region35: #{tpu_custom_call.1} parent=31 // pred_region
          %p232 = scmp.lt.s32.totalorder %s21, 1
          %s233 = scalar_select %p232, %s21, 1
          %p234 = scmp.lt.s32.totalorder %s22, 19
          %s235 = scalar_select %p234, %s22, 19
          %s236 = smul.addr %s235, 8
          %s237 = smul.addr %s233, 160
          %s238 = sadd.s32 %s236, %s237
          %s239 = smul.addr %s238, 8
          %s240 = scalar_lea.vmem %s4, %s239
        $region36: #{tpu_custom_call.1} parent=31 // pred_fallthru
          _
      $region32: #{tpu_custom_call.1} parent=5 // pred_fallthru
        _
      %p241 = scmp.le.s32.totalorder 1, %s14
      %p242 = scmp.lt.s32.totalorder %s14, 41
      %p243 = pnand %p241, %p242
      %p244 = pneg %p243
      // Predicated region
      $region37: #{tpu_custom_call.1} parent=5 // pred_check
        _
      $region38: #{tpu_custom_call.1} parent=5 // pred_check_branch
        %246 = sbr.rel (%p243) target = $region40
      $region39: #{tpu_custom_call.1} parent=5 // pred_region
        %s247 = ssub.s32 %s14, 1
        // Predicated region
        $region41: #{tpu_custom_call.1} parent=39 // pred_check
          %p248 = pneg %p47
        $region42: #{tpu_custom_call.1} parent=39 // pred_check_branch
          %250 = sbr.rel (%p248) target = $region44
        $region43: #{tpu_custom_call.1} parent=39 // pred_region
          %251 = dma.done [#allocation4], 64
        $region44: #{tpu_custom_call.1} parent=39 // pred_fallthru
          _
        // Predicated region
        $region45: #{tpu_custom_call.1} parent=39 // pred_check
          %p252 = pneg %p68
        $region46: #{tpu_custom_call.1} parent=39 // pred_check_branch
          %254 = sbr.rel (%p252) target = $region48
        $region47: #{tpu_custom_call.1} parent=39 // pred_region
          %255 = dma.done [#allocation6], 64
        $region48: #{tpu_custom_call.1} parent=39 // pred_fallthru
          _
        // Predicated region
        $region49: #{tpu_custom_call.1} parent=39 // pred_check
          %p256 = pneg %p89
        $region50: #{tpu_custom_call.1} parent=39 // pred_check_branch
          %258 = sbr.rel (%p256) target = $region52
        $region51: #{tpu_custom_call.1} parent=39 // pred_region
          %259 = dma.done [#allocation6], 64
        $region52: #{tpu_custom_call.1} parent=39 // pred_fallthru
          _
        // Predicated region
        $region53: #{tpu_custom_call.1} parent=39 // pred_check
          %p260 = pneg %p110
        $region54: #{tpu_custom_call.1} parent=39 // pred_check_branch
          %262 = sbr.rel (%p260) target = $region56
        $region55: #{tpu_custom_call.1} parent=39 // pred_region
          %263 = dma.done [#allocation9], 64
        $region56: #{tpu_custom_call.1} parent=39 // pred_fallthru
          _
        %264 = sfence
        %p265 = pneg %p47
        %p266 = pneg %p44
        %p267 = pneg %p68
        %p268 = pneg %p65
        %p269 = pneg %p89
        %p270 = pneg %p86
        %p271 = pneg %p110
        %p272 = pneg %p107
        %p273 = scmp.lt.s32.totalorder %s23, 1
        %s274 = scalar_select %p273, %s23, 1
        %p275 = scmp.lt.s32.totalorder %s24, 19
        %s276 = scalar_select %p275, %s24, 19
        %s277 = smul.addr %s276, 8
        %s278 = smul.addr %s274, 160
        %s279 = sadd.s32 %s277, %s278
        %s280 = smul.addr %s279, 8
        %s281 = scalar_lea.vmem %s4, %s280
        %p282 = pneg %p138
        %p283 = pneg %p135
        %p284 = pneg %p166
        %p285 = pneg %p163
        %p286 = scmp.lt.s32.totalorder %s23, 1
        %s287 = scalar_select %p286, %s23, 1
        %p288 = scmp.lt.s32.totalorder %s24, 19
        %s289 = scalar_select %p288, %s24, 19
        %s290 = smul.addr %s289, 8
        %s291 = smul.addr %s287, 160
        %s292 = sadd.s32 %s290, %s291
        %s293 = smul.addr %s292, 8
        %s294 = scalar_lea.vmem %s5, %s293
        %p295 = scmp.lt.s32.totalorder %s23, 1
        %s296 = scalar_select %p295, %s23, 1
        %p297 = scmp.lt.s32.totalorder %s24, 19
        %s298 = scalar_select %p297, %s24, 19
        %s299 = smul.addr %s298, 8
        %s300 = smul.addr %s296, 160
        %s301 = sadd.s32 %s299, %s300
        %s302 = smul.addr %s301, 8
        %s303 = scalar_lea.vmem %s4, %s302
        %p304 = scmp.lt.s32.totalorder %s23, 1
        %s305 = scalar_select %p304, %s23, 1
        %p306 = scmp.lt.s32.totalorder %s24, 19
        %s307 = scalar_select %p306, %s24, 19
        %s308 = smul.addr %s307, 8
        %s309 = smul.addr %s305, 160
        %s310 = sadd.s32 %s308, %s309
        %s311 = smul.addr %s310, 8
        %s312 = scalar_lea.vmem %s5, %s311
        %p313 = scmp.lt.s32.totalorder %s24, 4
        // Predicated region
        $region57: #{tpu_custom_call.1} parent=39 // pred_check
          %p314 = pneg %p313
        $region58: #{tpu_custom_call.1} parent=39 // pred_check_branch
          %316 = sbr.rel (%p314) target = $region60
        $region59: #{tpu_custom_call.1} parent=39 // pred_region
          %v317 = vld [vmem:[%s303] sm:$0xff]
          %v318 = vld [vmem:[%s303 + $0x8] sm:$0xff]
          %v319 = vld [vmem:[%s303 + $0x10] sm:$0xff]
          %v320 = vld [vmem:[%s303 + $0x18] sm:$0xff]
          %v321 = vld [vmem:[%s303 + $0x20] sm:$0xff]
          %v322 = vld [vmem:[%s303 + $0x28] sm:$0xff]
          %v323 = vld [vmem:[%s303 + $0x30] sm:$0xff]
          %v324 = vld [vmem:[%s303 + $0x38] sm:$0xff]
          %vm325 = vcmask 130048
          %326 = vst.msk [vmem:[%s312] sm:$0xff] %vm325, %v317
          %327 = vst.msk [vmem:[%s312 + $0x8] sm:$0xff] %vm325, %v318
          %328 = vst.msk [vmem:[%s312 + $0x10] sm:$0xff] %vm325, %v319
          %329 = vst.msk [vmem:[%s312 + $0x18] sm:$0xff] %vm325, %v320
          %330 = vst.msk [vmem:[%s312 + $0x20] sm:$0xff] %vm325, %v321
          %331 = vst.msk [vmem:[%s312 + $0x28] sm:$0xff] %vm325, %v322
          %332 = vst.msk [vmem:[%s312 + $0x30] sm:$0xff] %vm325, %v323
          %333 = vst.msk [vmem:[%s312 + $0x38] sm:$0xff] %vm325, %v324
        $region60: #{tpu_custom_call.1} parent=39 // pred_fallthru
          _
        %p334 = scmp.ge.s32.totalorder %s24, 4
        %p335 = scmp.lt.s32.totalorder %s24, 8
        %p336 = pnand %p334, %p335
        %p337 = pneg %p336
        // Predicated region
        $region61: #{tpu_custom_call.1} parent=39 // pred_check
          _
        $region62: #{tpu_custom_call.1} parent=39 // pred_check_branch
          %339 = sbr.rel (%p336) target = $region64
        $region63: #{tpu_custom_call.1} parent=39 // pred_region
          %vm340 = vcmask 179200
          %341 = vst.msk [vmem:[#allocation2] sm:$0xff] %vm340, 0.0
          %vm342 = vcmask 177152
          %343 = vst.msk [vmem:[#allocation2 + $0x8] sm:$0x3f] %vm342, 0.0
          %344 = vst.msk [vmem:[#allocation2 + $0x10] sm:$0xff] %vm340, 0.0
          %345 = vst.msk [vmem:[#allocation2 + $0x18] sm:$0x3f] %vm342, 0.0
          %346 = vst.msk [vmem:[#allocation2 + $0x20] sm:$0xff] %vm340, 0.0
          %347 = vst.msk [vmem:[#allocation2 + $0x28] sm:$0x3f] %vm342, 0.0
          %348 = vst.msk [vmem:[#allocation2 + $0x30] sm:$0xff] %vm340, 0.0
          %349 = vst.msk [vmem:[#allocation2 + $0x38] sm:$0x3f] %vm342, 0.0
          %350 = vst.msk [vmem:[#allocation2 + $0x40] sm:$0xff] %vm340, 0.0
          %351 = vst.msk [vmem:[#allocation2 + $0x48] sm:$0x3f] %vm342, 0.0
          %352 = vst.msk [vmem:[#allocation2 + $0x50] sm:$0xff] %vm340, 0.0
          %353 = vst.msk [vmem:[#allocation2 + $0x58] sm:$0x3f] %vm342, 0.0
          %354 = vst.msk [vmem:[#allocation2 + $0x60] sm:$0xff] %vm340, 0.0
          %355 = vst.msk [vmem:[#allocation2 + $0x68] sm:$0x3f] %vm342, 0.0
          %356 = vst.msk [vmem:[#allocation2 + $0x70] sm:$0xff] %vm340, 0.0
          %357 = vst.msk [vmem:[#allocation2 + $0x78] sm:$0x3f] %vm342, 0.0
          %358 = vst.msk [vmem:[#allocation2 + $0x80] sm:$0xff] %vm340, 0.0
          %359 = vst.msk [vmem:[#allocation2 + $0x88] sm:$0x3f] %vm342, 0.0
          %360 = vst.msk [vmem:[#allocation2 + $0x90] sm:$0xff] %vm340, 0.0
          %361 = vst.msk [vmem:[#allocation2 + $0x98] sm:$0x3f] %vm342, 0.0
          %362 = vst.msk [vmem:[#allocation2 + $0xa0] sm:$0xff] %vm340, 0.0
          %363 = vst.msk [vmem:[#allocation2 + $0xa8] sm:$0x3f] %vm342, 0.0
          %364 = vst.msk [vmem:[#allocation2 + $0xb0] sm:$0xff] %vm340, 0.0
          %365 = vst.msk [vmem:[#allocation2 + $0xb8] sm:$0x3f] %vm342, 0.0
          %366 = vst.msk [vmem:[#allocation2 + $0xc0] sm:$0xff] %vm340, 0.0
          %367 = vst.msk [vmem:[#allocation2 + $0xc8] sm:$0x3f] %vm342, 0.0
          %368 = vst.msk [vmem:[#allocation2 + $0xd0] sm:$0xff] %vm340, 0.0
          %369 = vst.msk [vmem:[#allocation2 + $0xd8] sm:$0x3f] %vm342, 0.0
          %v370 = vld [vmem:[%s303] sm:$0xff]
          %v371 = vld [vmem:[%s303 + $0x8] sm:$0xff]
          %v372 = vld [vmem:[%s303 + $0x10] sm:$0xff]
          %v373 = vld [vmem:[%s303 + $0x18] sm:$0xff]
          %v374 = vld [vmem:[%s303 + $0x20] sm:$0xff]
          %v375 = vld [vmem:[%s303 + $0x28] sm:$0xff]
          %v376 = vld [vmem:[%s303 + $0x30] sm:$0xff]
          %v377 = vld [vmem:[%s303 + $0x38] sm:$0xff]
          %386 = vrot.lane.b32.xlu0 %v370, 3
          %v387 = vpop.permute.xlu0 %386
          %388 = vrot.lane.b32.xlu0 %v371, 3
          %v389 = vpop.permute.xlu0 %388
          %390 = vrot.lane.b32.xlu0 %v372, 3
          %v391 = vpop.permute.xlu0 %390
          %392 = vrot.lane.b32.xlu0 %v373, 3
          %v393 = vpop.permute.xlu0 %392
          %394 = vrot.lane.b32.xlu0 %v374, 3
          %v395 = vpop.permute.xlu0 %394
          %396 = vrot.lane.b32.xlu0 %v375, 3
          %v397 = vpop.permute.xlu0 %396
          %398 = vrot.lane.b32.xlu0 %v376, 3
          %v399 = vpop.permute.xlu0 %398
          %400 = vrot.lane.b32.xlu0 %v377, 3
          %v401 = vpop.permute.xlu0 %400
          %s410 = scalar_lea.vmem [#allocation2], 48
          %vm411 = vcmask 154648
          %412 = vst.msk [vmem:[%s410 + $0x3] sm:$0xff] %vm411, %v387
          %413 = vst.msk [vmem:[%s410 + $0x13] sm:$0xff] %vm411, %v389
          %414 = vst.msk [vmem:[%s410 + $0x23] sm:$0xff] %vm411, %v391
          %415 = vst.msk [vmem:[%s410 + $0x33] sm:$0xff] %vm411, %v393
          %416 = vst.msk [vmem:[%s410 + $0x43] sm:$0xff] %vm411, %v395
          %417 = vst.msk [vmem:[%s410 + $0x53] sm:$0xff] %vm411, %v397
          %418 = vst.msk [vmem:[%s410 + $0x63] sm:$0xff] %vm411, %v399
          %419 = vst.msk [vmem:[%s410 + $0x73] sm:$0xff] %vm411, %v401
          %s420 = ssub.s32 %s24, 4
          %s421 = smul.u32 %s420, 128
          %s422 = sld [smem:[#allocation3 + %s421]]
          %s423 = scalar_lea.vmem [#allocation2], 32
          %v424 = vld [vmem:[%s423 + $0x2] sm:$0xff]
          %v425 = vld [vmem:[%s423 + $0x12] sm:$0xff]
          %v426 = vld [vmem:[%s423 + $0x22] sm:$0xff]
          %v427 = vld [vmem:[%s423 + $0x32] sm:$0xff]
          %v428 = vld [vmem:[%s423 + $0x42] sm:$0xff]
          %v429 = vld [vmem:[%s423 + $0x52] sm:$0xff]
          %v430 = vld [vmem:[%s423 + $0x62] sm:$0xff]
          %v431 = vld [vmem:[%s423 + $0x72] sm:$0xff]
          %v432 = vstv %s422
          %v433 = vmul.f32 %v432, %v424
          %v434 = vmul.f32 %v432, %v425
          %v435 = vmul.f32 %v432, %v426
          %v436 = vmul.f32 %v432, %v427
          %v437 = vmul.f32 %v432, %v428
          %v438 = vmul.f32 %v432, %v429
          %v439 = vmul.f32 %v432, %v430
          %v440 = vmul.f32 %v432, %v431
          %v441 = vadd.f32 %v433, 0.0
          %v442 = vadd.f32 %v434, 0.0
          %v443 = vadd.f32 %v435, 0.0
          %v444 = vadd.f32 %v436, 0.0
          %v445 = vadd.f32 %v437, 0.0
          %v446 = vadd.f32 %v438, 0.0
          %v447 = vadd.f32 %v439, 0.0
          %v448 = vadd.f32 %v440, 0.0
          %s449 = sadd.s32 %s421, 1
          %s450 = sld [smem:[#allocation3 + %s449]]
          %v451 = vstv %s450
          %v452 = vmul.f32 %v451, %v424
          %v453 = vmul.f32 %v451, %v425
          %v454 = vmul.f32 %v451, %v426
          %v455 = vmul.f32 %v451, %v427
          %v456 = vmul.f32 %v451, %v428
          %v457 = vmul.f32 %v451, %v429
          %v458 = vmul.f32 %v451, %v430
          %v459 = vmul.f32 %v451, %v431
          %468 = vrot.lane.b32.xlu0 %v452, 127
          %v469 = vpop.permute.xlu0 %468
          %470 = vrot.lane.b32.xlu0 %v453, 127
          %v471 = vpop.permute.xlu0 %470
          %472 = vrot.lane.b32.xlu0 %v454, 127
          %v473 = vpop.permute.xlu0 %472
          %474 = vrot.lane.b32.xlu0 %v455, 127
          %v475 = vpop.permute.xlu0 %474
          %476 = vrot.lane.b32.xlu0 %v456, 127
          %v477 = vpop.permute.xlu0 %476
          %478 = vrot.lane.b32.xlu0 %v457, 127
          %v479 = vpop.permute.xlu0 %478
          %480 = vrot.lane.b32.xlu0 %v458, 127
          %v481 = vpop.permute.xlu0 %480
          %482 = vrot.lane.b32.xlu0 %v459, 127
          %v483 = vpop.permute.xlu0 %482
          %v492 = vadd.f32 %v441, %v469
          %v493 = vadd.f32 %v442, %v471
          %v494 = vadd.f32 %v443, %v473
          %v495 = vadd.f32 %v444, %v475
          %v496 = vadd.f32 %v445, %v477
          %v497 = vadd.f32 %v446, %v479
          %v498 = vadd.f32 %v447, %v481
          %v499 = vadd.f32 %v448, %v483
          %s500 = sadd.s32 %s421, 2
          %s501 = sld [smem:[#allocation3 + %s500]]
          %v502 = vstv %s501
          %v503 = vmul.f32 %v502, %v424
          %v504 = vmul.f32 %v502, %v425
          %v505 = vmul.f32 %v502, %v426
          %v506 = vmul.f32 %v502, %v427
          %v507 = vmul.f32 %v502, %v428
          %v508 = vmul.f32 %v502, %v429
          %v509 = vmul.f32 %v502, %v430
          %v510 = vmul.f32 %v502, %v431
          %519 = vrot.lane.b32.xlu0 %v503, 126
          %v520 = vpop.permute.xlu0 %519
          %521 = vrot.lane.b32.xlu0 %v504, 126
          %v522 = vpop.permute.xlu0 %521
          %523 = vrot.lane.b32.xlu0 %v505, 126
          %v524 = vpop.permute.xlu0 %523
          %525 = vrot.lane.b32.xlu0 %v506, 126
          %v526 = vpop.permute.xlu0 %525
          %527 = vrot.lane.b32.xlu0 %v507, 126
          %v528 = vpop.permute.xlu0 %527
          %529 = vrot.lane.b32.xlu0 %v508, 126
          %v530 = vpop.permute.xlu0 %529
          %531 = vrot.lane.b32.xlu0 %v509, 126
          %v532 = vpop.permute.xlu0 %531
          %533 = vrot.lane.b32.xlu0 %v510, 126
          %v534 = vpop.permute.xlu0 %533
          %v543 = vadd.f32 %v492, %v520
          %v544 = vadd.f32 %v493, %v522
          %v545 = vadd.f32 %v494, %v524
          %v546 = vadd.f32 %v495, %v526
          %v547 = vadd.f32 %v496, %v528
          %v548 = vadd.f32 %v497, %v530
          %v549 = vadd.f32 %v498, %v532
          %v550 = vadd.f32 %v499, %v534
          %s551 = sadd.s32 %s421, 3
          %s552 = sld [smem:[#allocation3 + %s551]]
          %v553 = vld [vmem:[%s423 + $0x3] sm:$0xff]
          %v554 = vld [vmem:[%s423 + $0x13] sm:$0xff]
          %v555 = vld [vmem:[%s423 + $0x23] sm:$0xff]
          %v556 = vld [vmem:[%s423 + $0x33] sm:$0xff]
          %v557 = vld [vmem:[%s423 + $0x43] sm:$0xff]
          %v558 = vld [vmem:[%s423 + $0x53] sm:$0xff]
          %v559 = vld [vmem:[%s423 + $0x63] sm:$0xff]
          %v560 = vld [vmem:[%s423 + $0x73] sm:$0xff]
          %v561 = vstv %s552
          %v562 = vmul.f32 %v561, %v553
          %v563 = vmul.f32 %v561, %v554
          %v564 = vmul.f32 %v561, %v555
          %v565 = vmul.f32 %v561, %v556
          %v566 = vmul.f32 %v561, %v557
          %v567 = vmul.f32 %v561, %v558
          %v568 = vmul.f32 %v561, %v559
          %v569 = vmul.f32 %v561, %v560
          %v570 = vadd.f32 %v543, %v562
          %v571 = vadd.f32 %v544, %v563
          %v572 = vadd.f32 %v545, %v564
          %v573 = vadd.f32 %v546, %v565
          %v574 = vadd.f32 %v547, %v566
          %v575 = vadd.f32 %v548, %v567
          %v576 = vadd.f32 %v549, %v568
          %v577 = vadd.f32 %v550, %v569
          %s578 = sadd.s32 %s421, 4
          %s579 = sld [smem:[#allocation3 + %s578]]
          %v580 = vstv %s579
          %v581 = vmul.f32 %v580, %v553
          %v582 = vmul.f32 %v580, %v554
          %v583 = vmul.f32 %v580, %v555
          %v584 = vmul.f32 %v580, %v556
          %v585 = vmul.f32 %v580, %v557
          %v586 = vmul.f32 %v580, %v558
          %v587 = vmul.f32 %v580, %v559
          %v588 = vmul.f32 %v580, %v560
          %597 = vrot.lane.b32.xlu0 %v581, 127
          %v598 = vpop.permute.xlu0 %597
          %599 = vrot.lane.b32.xlu0 %v582, 127
          %v600 = vpop.permute.xlu0 %599
          %601 = vrot.lane.b32.xlu0 %v583, 127
          %v602 = vpop.permute.xlu0 %601
          %603 = vrot.lane.b32.xlu0 %v584, 127
          %v604 = vpop.permute.xlu0 %603
          %605 = vrot.lane.b32.xlu0 %v585, 127
          %v606 = vpop.permute.xlu0 %605
          %607 = vrot.lane.b32.xlu0 %v586, 127
          %v608 = vpop.permute.xlu0 %607
          %609 = vrot.lane.b32.xlu0 %v587, 127
          %v610 = vpop.permute.xlu0 %609
          %611 = vrot.lane.b32.xlu0 %v588, 127
          %v612 = vpop.permute.xlu0 %611
          %v621 = vadd.f32 %v570, %v598
          %v622 = vadd.f32 %v571, %v600
          %v623 = vadd.f32 %v572, %v602
          %v624 = vadd.f32 %v573, %v604
          %v625 = vadd.f32 %v574, %v606
          %v626 = vadd.f32 %v575, %v608
          %v627 = vadd.f32 %v576, %v610
          %v628 = vadd.f32 %v577, %v612
          %s629 = sadd.s32 %s421, 5
          %s630 = sld [smem:[#allocation3 + %s629]]
          %v631 = vstv %s630
          %v632 = vmul.f32 %v631, %v553
          %v633 = vmul.f32 %v631, %v554
          %v634 = vmul.f32 %v631, %v555
          %v635 = vmul.f32 %v631, %v556
          %v636 = vmul.f32 %v631, %v557
          %v637 = vmul.f32 %v631, %v558
          %v638 = vmul.f32 %v631, %v559
          %v639 = vmul.f32 %v631, %v560
          %648 = vrot.lane.b32.xlu0 %v632, 126
          %v649 = vpop.permute.xlu0 %648
          %650 = vrot.lane.b32.xlu0 %v633, 126
          %v651 = vpop.permute.xlu0 %650
          %652 = vrot.lane.b32.xlu0 %v634, 126
          %v653 = vpop.permute.xlu0 %652
          %654 = vrot.lane.b32.xlu0 %v635, 126
          %v655 = vpop.permute.xlu0 %654
          %656 = vrot.lane.b32.xlu0 %v636, 126
          %v657 = vpop.permute.xlu0 %656
          %658 = vrot.lane.b32.xlu0 %v637, 126
          %v659 = vpop.permute.xlu0 %658
          %660 = vrot.lane.b32.xlu0 %v638, 126
          %v661 = vpop.permute.xlu0 %660
          %662 = vrot.lane.b32.xlu0 %v639, 126
          %v663 = vpop.permute.xlu0 %662
          %v672 = vadd.f32 %v621, %v649
          %v673 = vadd.f32 %v622, %v651
          %v674 = vadd.f32 %v623, %v653
          %v675 = vadd.f32 %v624, %v655
          %v676 = vadd.f32 %v625, %v657
          %v677 = vadd.f32 %v626, %v659
          %v678 = vadd.f32 %v627, %v661
          %v679 = vadd.f32 %v628, %v663
          %s680 = sadd.s32 %s421, 6
          %s681 = sld [smem:[#allocation3 + %s680]]
          %v682 = vld [vmem:[%s423 + $0x4] sm:$0xff]
          %v683 = vld [vmem:[%s423 + $0x14] sm:$0xff]
          %v684 = vld [vmem:[%s423 + $0x24] sm:$0xff]
          %v685 = vld [vmem:[%s423 + $0x34] sm:$0xff]
          %v686 = vld [vmem:[%s423 + $0x44] sm:$0xff]
          %v687 = vld [vmem:[%s423 + $0x54] sm:$0xff]
          %v688 = vld [vmem:[%s423 + $0x64] sm:$0xff]
          %v689 = vld [vmem:[%s423 + $0x74] sm:$0xff]
          %v690 = vstv %s681
          %v691 = vmul.f32 %v690, %v682
          %v692 = vmul.f32 %v690, %v683
          %v693 = vmul.f32 %v690, %v684
          %v694 = vmul.f32 %v690, %v685
          %v695 = vmul.f32 %v690, %v686
          %v696 = vmul.f32 %v690, %v687
          %v697 = vmul.f32 %v690, %v688
          %v698 = vmul.f32 %v690, %v689
          %v699 = vadd.f32 %v672, %v691
          %v700 = vadd.f32 %v673, %v692
          %v701 = vadd.f32 %v674, %v693
          %v702 = vadd.f32 %v675, %v694
          %v703 = vadd.f32 %v676, %v695
          %v704 = vadd.f32 %v677, %v696
          %v705 = vadd.f32 %v678, %v697
          %v706 = vadd.f32 %v679, %v698
          %s707 = sadd.s32 %s421, 7
          %s708 = sld [smem:[#allocation3 + %s707]]
          %v709 = vstv %s708
          %v710 = vmul.f32 %v709, %v682
          %v711 = vmul.f32 %v709, %v683
          %v712 = vmul.f32 %v709, %v684
          %v713 = vmul.f32 %v709, %v685
          %v714 = vmul.f32 %v709, %v686
          %v715 = vmul.f32 %v709, %v687
          %v716 = vmul.f32 %v709, %v688
          %v717 = vmul.f32 %v709, %v689
          %726 = vrot.lane.b32.xlu0 %v710, 127
          %v727 = vpop.permute.xlu0 %726
          %728 = vrot.lane.b32.xlu0 %v711, 127
          %v729 = vpop.permute.xlu0 %728
          %730 = vrot.lane.b32.xlu0 %v712, 127
          %v731 = vpop.permute.xlu0 %730
          %732 = vrot.lane.b32.xlu0 %v713, 127
          %v733 = vpop.permute.xlu0 %732
          %734 = vrot.lane.b32.xlu0 %v714, 127
          %v735 = vpop.permute.xlu0 %734
          %736 = vrot.lane.b32.xlu0 %v715, 127
          %v737 = vpop.permute.xlu0 %736
          %738 = vrot.lane.b32.xlu0 %v716, 127
          %v739 = vpop.permute.xlu0 %738
          %740 = vrot.lane.b32.xlu0 %v717, 127
          %v741 = vpop.permute.xlu0 %740
          %v750 = vadd.f32 %v699, %v727
          %v751 = vadd.f32 %v700, %v729
          %v752 = vadd.f32 %v701, %v731
          %v753 = vadd.f32 %v702, %v733
          %v754 = vadd.f32 %v703, %v735
          %v755 = vadd.f32 %v704, %v737
          %v756 = vadd.f32 %v705, %v739
          %v757 = vadd.f32 %v706, %v741
          %s758 = sadd.s32 %s421, 8
          %s759 = sld [smem:[#allocation3 + %s758]]
          %v760 = vstv %s759
          %v761 = vmul.f32 %v760, %v682
          %v762 = vmul.f32 %v760, %v683
          %v763 = vmul.f32 %v760, %v684
          %v764 = vmul.f32 %v760, %v685
          %v765 = vmul.f32 %v760, %v686
          %v766 = vmul.f32 %v760, %v687
          %v767 = vmul.f32 %v760, %v688
          %v768 = vmul.f32 %v760, %v689
          %777 = vrot.lane.b32.xlu0 %v761, 126
          %v778 = vpop.permute.xlu0 %777
          %779 = vrot.lane.b32.xlu0 %v762, 126
          %v780 = vpop.permute.xlu0 %779
          %781 = vrot.lane.b32.xlu0 %v763, 126
          %v782 = vpop.permute.xlu0 %781
          %783 = vrot.lane.b32.xlu0 %v764, 126
          %v784 = vpop.permute.xlu0 %783
          %785 = vrot.lane.b32.xlu0 %v765, 126
          %v786 = vpop.permute.xlu0 %785
          %787 = vrot.lane.b32.xlu0 %v766, 126
          %v788 = vpop.permute.xlu0 %787
          %789 = vrot.lane.b32.xlu0 %v767, 126
          %v790 = vpop.permute.xlu0 %789
          %791 = vrot.lane.b32.xlu0 %v768, 126
          %v792 = vpop.permute.xlu0 %791
          %v801 = vadd.f32 %v750, %v778
          %v802 = vadd.f32 %v751, %v780
          %v803 = vadd.f32 %v752, %v782
          %v804 = vadd.f32 %v753, %v784
          %v805 = vadd.f32 %v754, %v786
          %v806 = vadd.f32 %v755, %v788
          %v807 = vadd.f32 %v756, %v790
          %v808 = vadd.f32 %v757, %v792
          %s809 = sadd.s32 %s421, 9
          %s810 = sld [smem:[#allocation3 + %s809]]
          %v811 = vld [vmem:[%s410 + $0x2] sm:$0xff]
          %v812 = vld [vmem:[%s410 + $0x12] sm:$0xff]
          %v813 = vld [vmem:[%s410 + $0x22] sm:$0xff]
          %v814 = vld [vmem:[%s410 + $0x32] sm:$0xff]
          %v815 = vld [vmem:[%s410 + $0x42] sm:$0xff]
          %v816 = vld [vmem:[%s410 + $0x52] sm:$0xff]
          %v817 = vld [vmem:[%s410 + $0x62] sm:$0xff]
          %v818 = vld [vmem:[%s410 + $0x72] sm:$0xff]
          %v819 = vstv %s810
          %v820 = vmul.f32 %v819, %v811
          %v821 = vmul.f32 %v819, %v812
          %v822 = vmul.f32 %v819, %v813
          %v823 = vmul.f32 %v819, %v814
          %v824 = vmul.f32 %v819, %v815
          %v825 = vmul.f32 %v819, %v816
          %v826 = vmul.f32 %v819, %v817
          %v827 = vmul.f32 %v819, %v818
          %v828 = vadd.f32 %v801, %v820
          %v829 = vadd.f32 %v802, %v821
          %v830 = vadd.f32 %v803, %v822
          %v831 = vadd.f32 %v804, %v823
          %v832 = vadd.f32 %v805, %v824
          %v833 = vadd.f32 %v806, %v825
          %v834 = vadd.f32 %v807, %v826
          %v835 = vadd.f32 %v808, %v827
          %s836 = sadd.s32 %s421, 10
          %s837 = sld [smem:[#allocation3 + %s836]]
          %v838 = vstv %s837
          %v839 = vmul.f32 %v838, %v811
          %v840 = vmul.f32 %v838, %v812
          %v841 = vmul.f32 %v838, %v813
          %v842 = vmul.f32 %v838, %v814
          %v843 = vmul.f32 %v838, %v815
          %v844 = vmul.f32 %v838, %v816
          %v845 = vmul.f32 %v838, %v817
          %v846 = vmul.f32 %v838, %v818
          %855 = vrot.lane.b32.xlu0 %v839, 127
          %v856 = vpop.permute.xlu0 %855
          %857 = vrot.lane.b32.xlu0 %v840, 127
          %v858 = vpop.permute.xlu0 %857
          %859 = vrot.lane.b32.xlu0 %v841, 127
          %v860 = vpop.permute.xlu0 %859
          %861 = vrot.lane.b32.xlu0 %v842, 127
          %v862 = vpop.permute.xlu0 %861
          %863 = vrot.lane.b32.xlu0 %v843, 127
          %v864 = vpop.permute.xlu0 %863
          %865 = vrot.lane.b32.xlu0 %v844, 127
          %v866 = vpop.permute.xlu0 %865
          %867 = vrot.lane.b32.xlu0 %v845, 127
          %v868 = vpop.permute.xlu0 %867
          %869 = vrot.lane.b32.xlu0 %v846, 127
          %v870 = vpop.permute.xlu0 %869
          %v879 = vadd.f32 %v828, %v856
          %v880 = vadd.f32 %v829, %v858
          %v881 = vadd.f32 %v830, %v860
          %v882 = vadd.f32 %v831, %v862
          %v883 = vadd.f32 %v832, %v864
          %v884 = vadd.f32 %v833, %v866
          %v885 = vadd.f32 %v834, %v868
          %v886 = vadd.f32 %v835, %v870
          %s887 = sadd.s32 %s421, 11
          %s888 = sld [smem:[#allocation3 + %s887]]
          %v889 = vstv %s888
          %v890 = vmul.f32 %v889, %v811
          %v891 = vmul.f32 %v889, %v812
          %v892 = vmul.f32 %v889, %v813
          %v893 = vmul.f32 %v889, %v814
          %v894 = vmul.f32 %v889, %v815
          %v895 = vmul.f32 %v889, %v816
          %v896 = vmul.f32 %v889, %v817
          %v897 = vmul.f32 %v889, %v818
          %906 = vrot.lane.b32.xlu0 %v890, 126
          %v907 = vpop.permute.xlu0 %906
          %908 = vrot.lane.b32.xlu0 %v891, 126
          %v909 = vpop.permute.xlu0 %908
          %910 = vrot.lane.b32.xlu0 %v892, 126
          %v911 = vpop.permute.xlu0 %910
          %912 = vrot.lane.b32.xlu0 %v893, 126
          %v913 = vpop.permute.xlu0 %912
          %914 = vrot.lane.b32.xlu0 %v894, 126
          %v915 = vpop.permute.xlu0 %914
          %916 = vrot.lane.b32.xlu0 %v895, 126
          %v917 = vpop.permute.xlu0 %916
          %918 = vrot.lane.b32.xlu0 %v896, 126
          %v919 = vpop.permute.xlu0 %918
          %920 = vrot.lane.b32.xlu0 %v897, 126
          %v921 = vpop.permute.xlu0 %920
          %v930 = vadd.f32 %v879, %v907
          %v931 = vadd.f32 %v880, %v909
          %v932 = vadd.f32 %v881, %v911
          %v933 = vadd.f32 %v882, %v913
          %v934 = vadd.f32 %v883, %v915
          %v935 = vadd.f32 %v884, %v917
          %v936 = vadd.f32 %v885, %v919
          %v937 = vadd.f32 %v886, %v921
          %s938 = sadd.s32 %s421, 12
          %s939 = sld [smem:[#allocation3 + %s938]]
          %v940 = vld [vmem:[%s410 + $0x3] sm:$0xff]
          %v941 = vld [vmem:[%s410 + $0x13] sm:$0xff]
          %v942 = vld [vmem:[%s410 + $0x23] sm:$0xff]
          %v943 = vld [vmem:[%s410 + $0x33] sm:$0xff]
          %v944 = vld [vmem:[%s410 + $0x43] sm:$0xff]
          %v945 = vld [vmem:[%s410 + $0x53] sm:$0xff]
          %v946 = vld [vmem:[%s410 + $0x63] sm:$0xff]
          %v947 = vld [vmem:[%s410 + $0x73] sm:$0xff]
          %v948 = vstv %s939
          %v949 = vmul.f32 %v948, %v940
          %v950 = vmul.f32 %v948, %v941
          %v951 = vmul.f32 %v948, %v942
          %v952 = vmul.f32 %v948, %v943
          %v953 = vmul.f32 %v948, %v944
          %v954 = vmul.f32 %v948, %v945
          %v955 = vmul.f32 %v948, %v946
          %v956 = vmul.f32 %v948, %v947
          %v957 = vadd.f32 %v930, %v949
          %v958 = vadd.f32 %v931, %v950
          %v959 = vadd.f32 %v932, %v951
          %v960 = vadd.f32 %v933, %v952
          %v961 = vadd.f32 %v934, %v953
          %v962 = vadd.f32 %v935, %v954
          %v963 = vadd.f32 %v936, %v955
          %v964 = vadd.f32 %v937, %v956
          %s965 = sadd.s32 %s421, 13
          %s966 = sld [smem:[#allocation3 + %s965]]
          %v967 = vstv %s966
          %v968 = vmul.f32 %v967, %v940
          %v969 = vmul.f32 %v967, %v941
          %v970 = vmul.f32 %v967, %v942
          %v971 = vmul.f32 %v967, %v943
          %v972 = vmul.f32 %v967, %v944
          %v973 = vmul.f32 %v967, %v945
          %v974 = vmul.f32 %v967, %v946
          %v975 = vmul.f32 %v967, %v947
          %984 = vrot.lane.b32.xlu0 %v968, 127
          %v985 = vpop.permute.xlu0 %984
          %986 = vrot.lane.b32.xlu0 %v969, 127
          %v987 = vpop.permute.xlu0 %986
          %988 = vrot.lane.b32.xlu0 %v970, 127
          %v989 = vpop.permute.xlu0 %988
          %990 = vrot.lane.b32.xlu0 %v971, 127
          %v991 = vpop.permute.xlu0 %990
          %992 = vrot.lane.b32.xlu0 %v972, 127
          %v993 = vpop.permute.xlu0 %992
          %994 = vrot.lane.b32.xlu0 %v973, 127
          %v995 = vpop.permute.xlu0 %994
          %996 = vrot.lane.b32.xlu0 %v974, 127
          %v997 = vpop.permute.xlu0 %996
          %998 = vrot.lane.b32.xlu0 %v975, 127
          %v999 = vpop.permute.xlu0 %998
          %v1008 = vadd.f32 %v957, %v985
          %v1009 = vadd.f32 %v958, %v987
          %v1010 = vadd.f32 %v959, %v989
          %v1011 = vadd.f32 %v960, %v991
          %v1012 = vadd.f32 %v961, %v993
          %v1013 = vadd.f32 %v962, %v995
          %v1014 = vadd.f32 %v963, %v997
          %v1015 = vadd.f32 %v964, %v999
          %s1016 = sadd.s32 %s421, 14
          %s1017 = sld [smem:[#allocation3 + %s1016]]
          %v1018 = vstv %s1017
          %v1019 = vmul.f32 %v1018, %v940
          %v1020 = vmul.f32 %v1018, %v941
          %v1021 = vmul.f32 %v1018, %v942
          %v1022 = vmul.f32 %v1018, %v943
          %v1023 = vmul.f32 %v1018, %v944
          %v1024 = vmul.f32 %v1018, %v945
          %v1025 = vmul.f32 %v1018, %v946
          %v1026 = vmul.f32 %v1018, %v947
          %1035 = vrot.lane.b32.xlu0 %v1019, 126
          %v1036 = vpop.permute.xlu0 %1035
          %1037 = vrot.lane.b32.xlu0 %v1020, 126
          %v1038 = vpop.permute.xlu0 %1037
          %1039 = vrot.lane.b32.xlu0 %v1021, 126
          %v1040 = vpop.permute.xlu0 %1039
          %1041 = vrot.lane.b32.xlu0 %v1022, 126
          %v1042 = vpop.permute.xlu0 %1041
          %1043 = vrot.lane.b32.xlu0 %v1023, 126
          %v1044 = vpop.permute.xlu0 %1043
          %1045 = vrot.lane.b32.xlu0 %v1024, 126
          %v1046 = vpop.permute.xlu0 %1045
          %1047 = vrot.lane.b32.xlu0 %v1025, 126
          %v1048 = vpop.permute.xlu0 %1047
          %1049 = vrot.lane.b32.xlu0 %v1026, 126
          %v1050 = vpop.permute.xlu0 %1049
          %v1059 = vadd.f32 %v1008, %v1036
          %v1060 = vadd.f32 %v1009, %v1038
          %v1061 = vadd.f32 %v1010, %v1040
          %v1062 = vadd.f32 %v1011, %v1042
          %v1063 = vadd.f32 %v1012, %v1044
          %v1064 = vadd.f32 %v1013, %v1046
          %v1065 = vadd.f32 %v1014, %v1048
          %v1066 = vadd.f32 %v1015, %v1050
          %s1067 = sadd.s32 %s421, 15
          %s1068 = sld [smem:[#allocation3 + %s1067]]
          %v1069 = vld [vmem:[%s410 + $0x4] sm:$0xff]
          %v1070 = vld [vmem:[%s410 + $0x14] sm:$0xff]
          %v1071 = vld [vmem:[%s410 + $0x24] sm:$0xff]
          %v1072 = vld [vmem:[%s410 + $0x34] sm:$0xff]
          %v1073 = vld [vmem:[%s410 + $0x44] sm:$0xff]
          %v1074 = vld [vmem:[%s410 + $0x54] sm:$0xff]
          %v1075 = vld [vmem:[%s410 + $0x64] sm:$0xff]
          %v1076 = vld [vmem:[%s410 + $0x74] sm:$0xff]
          %v1077 = vstv %s1068
          %v1078 = vmul.f32 %v1077, %v1069
          %v1079 = vmul.f32 %v1077, %v1070
          %v1080 = vmul.f32 %v1077, %v1071
          %v1081 = vmul.f32 %v1077, %v1072
          %v1082 = vmul.f32 %v1077, %v1073
          %v1083 = vmul.f32 %v1077, %v1074
          %v1084 = vmul.f32 %v1077, %v1075
          %v1085 = vmul.f32 %v1077, %v1076
          %v1086 = vadd.f32 %v1059, %v1078
          %v1087 = vadd.f32 %v1060, %v1079
          %v1088 = vadd.f32 %v1061, %v1080
          %v1089 = vadd.f32 %v1062, %v1081
          %v1090 = vadd.f32 %v1063, %v1082
          %v1091 = vadd.f32 %v1064, %v1083
          %v1092 = vadd.f32 %v1065, %v1084
          %v1093 = vadd.f32 %v1066, %v1085
          %s1094 = sadd.s32 %s421, 16
          %s1095 = sld [smem:[#allocation3 + %s1094]]
          %v1096 = vstv %s1095
          %v1097 = vmul.f32 %v1096, %v1069
          %v1098 = vmul.f32 %v1096, %v1070
          %v1099 = vmul.f32 %v1096, %v1071
          %v1100 = vmul.f32 %v1096, %v1072
          %v1101 = vmul.f32 %v1096, %v1073
          %v1102 = vmul.f32 %v1096, %v1074
          %v1103 = vmul.f32 %v1096, %v1075
          %v1104 = vmul.f32 %v1096, %v1076
          %1113 = vrot.lane.b32.xlu0 %v1097, 127
          %v1114 = vpop.permute.xlu0 %1113
          %1115 = vrot.lane.b32.xlu0 %v1098, 127
          %v1116 = vpop.permute.xlu0 %1115
          %1117 = vrot.lane.b32.xlu0 %v1099, 127
          %v1118 = vpop.permute.xlu0 %1117
          %1119 = vrot.lane.b32.xlu0 %v1100, 127
          %v1120 = vpop.permute.xlu0 %1119
          %1121 = vrot.lane.b32.xlu0 %v1101, 127
          %v1122 = vpop.permute.xlu0 %1121
          %1123 = vrot.lane.b32.xlu0 %v1102, 127
          %v1124 = vpop.permute.xlu0 %1123
          %1125 = vrot.lane.b32.xlu0 %v1103, 127
          %v1126 = vpop.permute.xlu0 %1125
          %1127 = vrot.lane.b32.xlu0 %v1104, 127
          %v1128 = vpop.permute.xlu0 %1127
          %v1137 = vadd.f32 %v1086, %v1114
          %v1138 = vadd.f32 %v1087, %v1116
          %v1139 = vadd.f32 %v1088, %v1118
          %v1140 = vadd.f32 %v1089, %v1120
          %v1141 = vadd.f32 %v1090, %v1122
          %v1142 = vadd.f32 %v1091, %v1124
          %v1143 = vadd.f32 %v1092, %v1126
          %v1144 = vadd.f32 %v1093, %v1128
          %s1145 = sadd.s32 %s421, 17
          %s1146 = sld [smem:[#allocation3 + %s1145]]
          %v1147 = vstv %s1146
          %v1148 = vmul.f32 %v1147, %v1069
          %v1149 = vmul.f32 %v1147, %v1070
          %v1150 = vmul.f32 %v1147, %v1071
          %v1151 = vmul.f32 %v1147, %v1072
          %v1152 = vmul.f32 %v1147, %v1073
          %v1153 = vmul.f32 %v1147, %v1074
          %v1154 = vmul.f32 %v1147, %v1075
          %v1155 = vmul.f32 %v1147, %v1076
          %1164 = vrot.lane.b32.xlu0 %v1148, 126
          %v1165 = vpop.permute.xlu0 %1164
          %1166 = vrot.lane.b32.xlu0 %v1149, 126
          %v1167 = vpop.permute.xlu0 %1166
          %1168 = vrot.lane.b32.xlu0 %v1150, 126
          %v1169 = vpop.permute.xlu0 %1168
          %1170 = vrot.lane.b32.xlu0 %v1151, 126
          %v1171 = vpop.permute.xlu0 %1170
          %1172 = vrot.lane.b32.xlu0 %v1152, 126
          %v1173 = vpop.permute.xlu0 %1172
          %1174 = vrot.lane.b32.xlu0 %v1153, 126
          %v1175 = vpop.permute.xlu0 %1174
          %1176 = vrot.lane.b32.xlu0 %v1154, 126
          %v1177 = vpop.permute.xlu0 %1176
          %1178 = vrot.lane.b32.xlu0 %v1155, 126
          %v1179 = vpop.permute.xlu0 %1178
          %v1188 = vadd.f32 %v1137, %v1165
          %v1189 = vadd.f32 %v1138, %v1167
          %v1190 = vadd.f32 %v1139, %v1169
          %v1191 = vadd.f32 %v1140, %v1171
          %v1192 = vadd.f32 %v1141, %v1173
          %v1193 = vadd.f32 %v1142, %v1175
          %v1194 = vadd.f32 %v1143, %v1177
          %v1195 = vadd.f32 %v1144, %v1179
          %s1196 = sadd.s32 %s421, 18
          %s1197 = sld [smem:[#allocation3 + %s1196]]
          %s1198 = scalar_lea.vmem [#allocation2], 64
          %v1199 = vld [vmem:[%s1198 + $0x2] sm:$0xff]
          %v1200 = vld [vmem:[%s1198 + $0x12] sm:$0xff]
          %v1201 = vld [vmem:[%s1198 + $0x22] sm:$0xff]
          %v1202 = vld [vmem:[%s1198 + $0x32] sm:$0xff]
          %v1203 = vld [vmem:[%s1198 + $0x42] sm:$0xff]
          %v1204 = vld [vmem:[%s1198 + $0x52] sm:$0xff]
          %v1205 = vld [vmem:[%s1198 + $0x62] sm:$0xff]
          %v1206 = vld [vmem:[%s1198 + $0x72] sm:$0xff]
          %v1207 = vstv %s1197
          %v1208 = vmul.f32 %v1207, %v1199
          %v1209 = vmul.f32 %v1207, %v1200
          %v1210 = vmul.f32 %v1207, %v1201
          %v1211 = vmul.f32 %v1207, %v1202
          %v1212 = vmul.f32 %v1207, %v1203
          %v1213 = vmul.f32 %v1207, %v1204
          %v1214 = vmul.f32 %v1207, %v1205
          %v1215 = vmul.f32 %v1207, %v1206
          %v1216 = vadd.f32 %v1188, %v1208
          %v1217 = vadd.f32 %v1189, %v1209
          %v1218 = vadd.f32 %v1190, %v1210
          %v1219 = vadd.f32 %v1191, %v1211
          %v1220 = vadd.f32 %v1192, %v1212
          %v1221 = vadd.f32 %v1193, %v1213
          %v1222 = vadd.f32 %v1194, %v1214
          %v1223 = vadd.f32 %v1195, %v1215
          %s1224 = sadd.s32 %s421, 19
          %s1225 = sld [smem:[#allocation3 + %s1224]]
          %v1226 = vstv %s1225
          %v1227 = vmul.f32 %v1226, %v1199
          %v1228 = vmul.f32 %v1226, %v1200
          %v1229 = vmul.f32 %v1226, %v1201
          %v1230 = vmul.f32 %v1226, %v1202
          %v1231 = vmul.f32 %v1226, %v1203
          %v1232 = vmul.f32 %v1226, %v1204
          %v1233 = vmul.f32 %v1226, %v1205
          %v1234 = vmul.f32 %v1226, %v1206
          %1243 = vrot.lane.b32.xlu0 %v1227, 127
          %v1244 = vpop.permute.xlu0 %1243
          %1245 = vrot.lane.b32.xlu0 %v1228, 127
          %v1246 = vpop.permute.xlu0 %1245
          %1247 = vrot.lane.b32.xlu0 %v1229, 127
          %v1248 = vpop.permute.xlu0 %1247
          %1249 = vrot.lane.b32.xlu0 %v1230, 127
          %v1250 = vpop.permute.xlu0 %1249
          %1251 = vrot.lane.b32.xlu0 %v1231, 127
          %v1252 = vpop.permute.xlu0 %1251
          %1253 = vrot.lane.b32.xlu0 %v1232, 127
          %v1254 = vpop.permute.xlu0 %1253
          %1255 = vrot.lane.b32.xlu0 %v1233, 127
          %v1256 = vpop.permute.xlu0 %1255
          %1257 = vrot.lane.b32.xlu0 %v1234, 127
          %v1258 = vpop.permute.xlu0 %1257
          %v1267 = vadd.f32 %v1216, %v1244
          %v1268 = vadd.f32 %v1217, %v1246
          %v1269 = vadd.f32 %v1218, %v1248
          %v1270 = vadd.f32 %v1219, %v1250
          %v1271 = vadd.f32 %v1220, %v1252
          %v1272 = vadd.f32 %v1221, %v1254
          %v1273 = vadd.f32 %v1222, %v1256
          %v1274 = vadd.f32 %v1223, %v1258
          %s1275 = sadd.s32 %s421, 20
          %s1276 = sld [smem:[#allocation3 + %s1275]]
          %v1277 = vstv %s1276
          %v1278 = vmul.f32 %v1277, %v1199
          %v1279 = vmul.f32 %v1277, %v1200
          %v1280 = vmul.f32 %v1277, %v1201
          %v1281 = vmul.f32 %v1277, %v1202
          %v1282 = vmul.f32 %v1277, %v1203
          %v1283 = vmul.f32 %v1277, %v1204
          %v1284 = vmul.f32 %v1277, %v1205
          %v1285 = vmul.f32 %v1277, %v1206
          %1294 = vrot.lane.b32.xlu0 %v1278, 126
          %v1295 = vpop.permute.xlu0 %1294
          %1296 = vrot.lane.b32.xlu0 %v1279, 126
          %v1297 = vpop.permute.xlu0 %1296
          %1298 = vrot.lane.b32.xlu0 %v1280, 126
          %v1299 = vpop.permute.xlu0 %1298
          %1300 = vrot.lane.b32.xlu0 %v1281, 126
          %v1301 = vpop.permute.xlu0 %1300
          %1302 = vrot.lane.b32.xlu0 %v1282, 126
          %v1303 = vpop.permute.xlu0 %1302
          %1304 = vrot.lane.b32.xlu0 %v1283, 126
          %v1305 = vpop.permute.xlu0 %1304
          %1306 = vrot.lane.b32.xlu0 %v1284, 126
          %v1307 = vpop.permute.xlu0 %1306
          %1308 = vrot.lane.b32.xlu0 %v1285, 126
          %v1309 = vpop.permute.xlu0 %1308
          %v1318 = vadd.f32 %v1267, %v1295
          %v1319 = vadd.f32 %v1268, %v1297
          %v1320 = vadd.f32 %v1269, %v1299
          %v1321 = vadd.f32 %v1270, %v1301
          %v1322 = vadd.f32 %v1271, %v1303
          %v1323 = vadd.f32 %v1272, %v1305
          %v1324 = vadd.f32 %v1273, %v1307
          %v1325 = vadd.f32 %v1274, %v1309
          %s1326 = sadd.s32 %s421, 21
          %s1327 = sld [smem:[#allocation3 + %s1326]]
          %v1328 = vld [vmem:[%s1198 + $0x3] sm:$0xff]
          %v1329 = vld [vmem:[%s1198 + $0x13] sm:$0xff]
          %v1330 = vld [vmem:[%s1198 + $0x23] sm:$0xff]
          %v1331 = vld [vmem:[%s1198 + $0x33] sm:$0xff]
          %v1332 = vld [vmem:[%s1198 + $0x43] sm:$0xff]
          %v1333 = vld [vmem:[%s1198 + $0x53] sm:$0xff]
          %v1334 = vld [vmem:[%s1198 + $0x63] sm:$0xff]
          %v1335 = vld [vmem:[%s1198 + $0x73] sm:$0xff]
          %v1336 = vstv %s1327
          %v1337 = vmul.f32 %v1336, %v1328
          %v1338 = vmul.f32 %v1336, %v1329
          %v1339 = vmul.f32 %v1336, %v1330
          %v1340 = vmul.f32 %v1336, %v1331
          %v1341 = vmul.f32 %v1336, %v1332
          %v1342 = vmul.f32 %v1336, %v1333
          %v1343 = vmul.f32 %v1336, %v1334
          %v1344 = vmul.f32 %v1336, %v1335
          %v1345 = vadd.f32 %v1318, %v1337
          %v1346 = vadd.f32 %v1319, %v1338
          %v1347 = vadd.f32 %v1320, %v1339
          %v1348 = vadd.f32 %v1321, %v1340
          %v1349 = vadd.f32 %v1322, %v1341
          %v1350 = vadd.f32 %v1323, %v1342
          %v1351 = vadd.f32 %v1324, %v1343
          %v1352 = vadd.f32 %v1325, %v1344
          %s1353 = sadd.s32 %s421, 22
          %s1354 = sld [smem:[#allocation3 + %s1353]]
          %v1355 = vstv %s1354
          %v1356 = vmul.f32 %v1355, %v1328
          %v1357 = vmul.f32 %v1355, %v1329
          %v1358 = vmul.f32 %v1355, %v1330
          %v1359 = vmul.f32 %v1355, %v1331
          %v1360 = vmul.f32 %v1355, %v1332
          %v1361 = vmul.f32 %v1355, %v1333
          %v1362 = vmul.f32 %v1355, %v1334
          %v1363 = vmul.f32 %v1355, %v1335
          %1372 = vrot.lane.b32.xlu0 %v1356, 127
          %v1373 = vpop.permute.xlu0 %1372
          %1374 = vrot.lane.b32.xlu0 %v1357, 127
          %v1375 = vpop.permute.xlu0 %1374
          %1376 = vrot.lane.b32.xlu0 %v1358, 127
          %v1377 = vpop.permute.xlu0 %1376
          %1378 = vrot.lane.b32.xlu0 %v1359, 127
          %v1379 = vpop.permute.xlu0 %1378
          %1380 = vrot.lane.b32.xlu0 %v1360, 127
          %v1381 = vpop.permute.xlu0 %1380
          %1382 = vrot.lane.b32.xlu0 %v1361, 127
          %v1383 = vpop.permute.xlu0 %1382
          %1384 = vrot.lane.b32.xlu0 %v1362, 127
          %v1385 = vpop.permute.xlu0 %1384
          %1386 = vrot.lane.b32.xlu0 %v1363, 127
          %v1387 = vpop.permute.xlu0 %1386
          %v1396 = vadd.f32 %v1345, %v1373
          %v1397 = vadd.f32 %v1346, %v1375
          %v1398 = vadd.f32 %v1347, %v1377
          %v1399 = vadd.f32 %v1348, %v1379
          %v1400 = vadd.f32 %v1349, %v1381
          %v1401 = vadd.f32 %v1350, %v1383
          %v1402 = vadd.f32 %v1351, %v1385
          %v1403 = vadd.f32 %v1352, %v1387
          %s1404 = sadd.s32 %s421, 23
          %s1405 = sld [smem:[#allocation3 + %s1404]]
          %v1406 = vstv %s1405
          %v1407 = vmul.f32 %v1406, %v1328
          %v1408 = vmul.f32 %v1406, %v1329
          %v1409 = vmul.f32 %v1406, %v1330
          %v1410 = vmul.f32 %v1406, %v1331
          %v1411 = vmul.f32 %v1406, %v1332
          %v1412 = vmul.f32 %v1406, %v1333
          %v1413 = vmul.f32 %v1406, %v1334
          %v1414 = vmul.f32 %v1406, %v1335
          %1423 = vrot.lane.b32.xlu0 %v1407, 126
          %v1424 = vpop.permute.xlu0 %1423
          %1425 = vrot.lane.b32.xlu0 %v1408, 126
          %v1426 = vpop.permute.xlu0 %1425
          %1427 = vrot.lane.b32.xlu0 %v1409, 126
          %v1428 = vpop.permute.xlu0 %1427
          %1429 = vrot.lane.b32.xlu0 %v1410, 126
          %v1430 = vpop.permute.xlu0 %1429
          %1431 = vrot.lane.b32.xlu0 %v1411, 126
          %v1432 = vpop.permute.xlu0 %1431
          %1433 = vrot.lane.b32.xlu0 %v1412, 126
          %v1434 = vpop.permute.xlu0 %1433
          %1435 = vrot.lane.b32.xlu0 %v1413, 126
          %v1436 = vpop.permute.xlu0 %1435
          %1437 = vrot.lane.b32.xlu0 %v1414, 126
          %v1438 = vpop.permute.xlu0 %1437
          %v1447 = vadd.f32 %v1396, %v1424
          %v1448 = vadd.f32 %v1397, %v1426
          %v1449 = vadd.f32 %v1398, %v1428
          %v1450 = vadd.f32 %v1399, %v1430
          %v1451 = vadd.f32 %v1400, %v1432
          %v1452 = vadd.f32 %v1401, %v1434
          %v1453 = vadd.f32 %v1402, %v1436
          %v1454 = vadd.f32 %v1403, %v1438
          %s1455 = sadd.s32 %s421, 24
          %s1456 = sld [smem:[#allocation3 + %s1455]]
          %v1457 = vld [vmem:[%s1198 + $0x4] sm:$0xff]
          %v1458 = vld [vmem:[%s1198 + $0x14] sm:$0xff]
          %v1459 = vld [vmem:[%s1198 + $0x24] sm:$0xff]
          %v1460 = vld [vmem:[%s1198 + $0x34] sm:$0xff]
          %v1461 = vld [vmem:[%s1198 + $0x44] sm:$0xff]
          %v1462 = vld [vmem:[%s1198 + $0x54] sm:$0xff]
          %v1463 = vld [vmem:[%s1198 + $0x64] sm:$0xff]
          %v1464 = vld [vmem:[%s1198 + $0x74] sm:$0xff]
          %v1465 = vstv %s1456
          %v1466 = vmul.f32 %v1465, %v1457
          %v1467 = vmul.f32 %v1465, %v1458
          %v1468 = vmul.f32 %v1465, %v1459
          %v1469 = vmul.f32 %v1465, %v1460
          %v1470 = vmul.f32 %v1465, %v1461
          %v1471 = vmul.f32 %v1465, %v1462
          %v1472 = vmul.f32 %v1465, %v1463
          %v1473 = vmul.f32 %v1465, %v1464
          %v1474 = vadd.f32 %v1447, %v1466
          %v1475 = vadd.f32 %v1448, %v1467
          %v1476 = vadd.f32 %v1449, %v1468
          %v1477 = vadd.f32 %v1450, %v1469
          %v1478 = vadd.f32 %v1451, %v1470
          %v1479 = vadd.f32 %v1452, %v1471
          %v1480 = vadd.f32 %v1453, %v1472
          %v1481 = vadd.f32 %v1454, %v1473
          %s1482 = sadd.s32 %s421, 25
          %s1483 = sld [smem:[#allocation3 + %s1482]]
          %v1484 = vstv %s1483
          %v1485 = vmul.f32 %v1484, %v1457
          %v1486 = vmul.f32 %v1484, %v1458
          %v1487 = vmul.f32 %v1484, %v1459
          %v1488 = vmul.f32 %v1484, %v1460
          %v1489 = vmul.f32 %v1484, %v1461
          %v1490 = vmul.f32 %v1484, %v1462
          %v1491 = vmul.f32 %v1484, %v1463
          %v1492 = vmul.f32 %v1484, %v1464
          %1501 = vrot.lane.b32.xlu0 %v1485, 127
          %v1502 = vpop.permute.xlu0 %1501
          %1503 = vrot.lane.b32.xlu0 %v1486, 127
          %v1504 = vpop.permute.xlu0 %1503
          %1505 = vrot.lane.b32.xlu0 %v1487, 127
          %v1506 = vpop.permute.xlu0 %1505
          %1507 = vrot.lane.b32.xlu0 %v1488, 127
          %v1508 = vpop.permute.xlu0 %1507
          %1509 = vrot.lane.b32.xlu0 %v1489, 127
          %v1510 = vpop.permute.xlu0 %1509
          %1511 = vrot.lane.b32.xlu0 %v1490, 127
          %v1512 = vpop.permute.xlu0 %1511
          %1513 = vrot.lane.b32.xlu0 %v1491, 127
          %v1514 = vpop.permute.xlu0 %1513
          %1515 = vrot.lane.b32.xlu0 %v1492, 127
          %v1516 = vpop.permute.xlu0 %1515
          %v1525 = vadd.f32 %v1474, %v1502
          %v1526 = vadd.f32 %v1475, %v1504
          %v1527 = vadd.f32 %v1476, %v1506
          %v1528 = vadd.f32 %v1477, %v1508
          %v1529 = vadd.f32 %v1478, %v1510
          %v1530 = vadd.f32 %v1479, %v1512
          %v1531 = vadd.f32 %v1480, %v1514
          %v1532 = vadd.f32 %v1481, %v1516
          %s1533 = sadd.s32 %s421, 26
          %s1534 = sld [smem:[#allocation3 + %s1533]]
          %v1535 = vstv %s1534
          %v1536 = vmul.f32 %v1535, %v1457
          %v1537 = vmul.f32 %v1535, %v1458
          %v1538 = vmul.f32 %v1535, %v1459
          %v1539 = vmul.f32 %v1535, %v1460
          %v1540 = vmul.f32 %v1535, %v1461
          %v1541 = vmul.f32 %v1535, %v1462
          %v1542 = vmul.f32 %v1535, %v1463
          %v1543 = vmul.f32 %v1535, %v1464
          %1552 = vrot.lane.b32.xlu0 %v1536, 126
          %v1553 = vpop.permute.xlu0 %1552
          %1554 = vrot.lane.b32.xlu0 %v1537, 126
          %v1555 = vpop.permute.xlu0 %1554
          %1556 = vrot.lane.b32.xlu0 %v1538, 126
          %v1557 = vpop.permute.xlu0 %1556
          %1558 = vrot.lane.b32.xlu0 %v1539, 126
          %v1559 = vpop.permute.xlu0 %1558
          %1560 = vrot.lane.b32.xlu0 %v1540, 126
          %v1561 = vpop.permute.xlu0 %1560
          %1562 = vrot.lane.b32.xlu0 %v1541, 126
          %v1563 = vpop.permute.xlu0 %1562
          %1564 = vrot.lane.b32.xlu0 %v1542, 126
          %v1565 = vpop.permute.xlu0 %1564
          %1566 = vrot.lane.b32.xlu0 %v1543, 126
          %v1567 = vpop.permute.xlu0 %1566
          %v1576 = vadd.f32 %v1525, %v1553
          %v1577 = vadd.f32 %v1526, %v1555
          %v1578 = vadd.f32 %v1527, %v1557
          %v1579 = vadd.f32 %v1528, %v1559
          %v1580 = vadd.f32 %v1529, %v1561
          %v1581 = vadd.f32 %v1530, %v1563
          %v1582 = vadd.f32 %v1531, %v1565
          %v1583 = vadd.f32 %v1532, %v1567
          %1592 = vrot.lane.b32.xlu0 %v1576, 126
          %v1593 = vpop.permute.xlu0 %1592
          %1594 = vrot.lane.b32.xlu0 %v1577, 126
          %v1595 = vpop.permute.xlu0 %1594
          %1596 = vrot.lane.b32.xlu0 %v1578, 126
          %v1597 = vpop.permute.xlu0 %1596
          %1598 = vrot.lane.b32.xlu0 %v1579, 126
          %v1599 = vpop.permute.xlu0 %1598
          %1600 = vrot.lane.b32.xlu0 %v1580, 126
          %v1601 = vpop.permute.xlu0 %1600
          %1602 = vrot.lane.b32.xlu0 %v1581, 126
          %v1603 = vpop.permute.xlu0 %1602
          %1604 = vrot.lane.b32.xlu0 %v1582, 126
          %v1605 = vpop.permute.xlu0 %1604
          %1606 = vrot.lane.b32.xlu0 %v1583, 126
          %v1607 = vpop.permute.xlu0 %1606
          %vm1616 = vcmask 130048
          %1617 = vst.msk [vmem:[%s312] sm:$0xff] %vm1616, %v1593
          %1618 = vst.msk [vmem:[%s312 + $0x8] sm:$0xff] %vm1616, %v1595
          %1619 = vst.msk [vmem:[%s312 + $0x10] sm:$0xff] %vm1616, %v1597
          %1620 = vst.msk [vmem:[%s312 + $0x18] sm:$0xff] %vm1616, %v1599
          %1621 = vst.msk [vmem:[%s312 + $0x20] sm:$0xff] %vm1616, %v1601
          %1622 = vst.msk [vmem:[%s312 + $0x28] sm:$0xff] %vm1616, %v1603
          %1623 = vst.msk [vmem:[%s312 + $0x30] sm:$0xff] %vm1616, %v1605
          %1624 = vst.msk [vmem:[%s312 + $0x38] sm:$0xff] %vm1616, %v1607
        $region64: #{tpu_custom_call.1} parent=39 // pred_fallthru
          _
        %p1625 = scmp.ge.s32.totalorder %s24, 8
        %p1626 = scmp.lt.s32.totalorder %s24, 12
        %p1627 = pnand %p1625, %p1626
        %p1628 = pneg %p1627
        // Predicated region
        $region65: #{tpu_custom_call.1} parent=39 // pred_check
          _
        $region66: #{tpu_custom_call.1} parent=39 // pred_check_branch
          %1630 = sbr.rel (%p1627) target = $region68
        $region67: #{tpu_custom_call.1} parent=39 // pred_region
          %vm1631 = vcmask 179200
          %1632 = vst.msk [vmem:[#allocation2] sm:$0xff] %vm1631, 0.0
          %vm1633 = vcmask 177152
          %1634 = vst.msk [vmem:[#allocation2 + $0x8] sm:$0x3f] %vm1633, 0.0
          %1635 = vst.msk [vmem:[#allocation2 + $0x10] sm:$0xff] %vm1631, 0.0
          %1636 = vst.msk [vmem:[#allocation2 + $0x18] sm:$0x3f] %vm1633, 0.0
          %1637 = vst.msk [vmem:[#allocation2 + $0x20] sm:$0xff] %vm1631, 0.0
          %1638 = vst.msk [vmem:[#allocation2 + $0x28] sm:$0x3f] %vm1633, 0.0
          %1639 = vst.msk [vmem:[#allocation2 + $0x30] sm:$0xff] %vm1631, 0.0
          %1640 = vst.msk [vmem:[#allocation2 + $0x38] sm:$0x3f] %vm1633, 0.0
          %1641 = vst.msk [vmem:[#allocation2 + $0x40] sm:$0xff] %vm1631, 0.0
          %1642 = vst.msk [vmem:[#allocation2 + $0x48] sm:$0x3f] %vm1633, 0.0
          %1643 = vst.msk [vmem:[#allocation2 + $0x50] sm:$0xff] %vm1631, 0.0
          %1644 = vst.msk [vmem:[#allocation2 + $0x58] sm:$0x3f] %vm1633, 0.0
          %1645 = vst.msk [vmem:[#allocation2 + $0x60] sm:$0xff] %vm1631, 0.0
          %1646 = vst.msk [vmem:[#allocation2 + $0x68] sm:$0x3f] %vm1633, 0.0
          %1647 = vst.msk [vmem:[#allocation2 + $0x70] sm:$0xff] %vm1631, 0.0
          %1648 = vst.msk [vmem:[#allocation2 + $0x78] sm:$0x3f] %vm1633, 0.0
          %1649 = vst.msk [vmem:[#allocation2 + $0x80] sm:$0xff] %vm1631, 0.0
          %1650 = vst.msk [vmem:[#allocation2 + $0x88] sm:$0x3f] %vm1633, 0.0
          %1651 = vst.msk [vmem:[#allocation2 + $0x90] sm:$0xff] %vm1631, 0.0
          %1652 = vst.msk [vmem:[#allocation2 + $0x98] sm:$0x3f] %vm1633, 0.0
          %1653 = vst.msk [vmem:[#allocation2 + $0xa0] sm:$0xff] %vm1631, 0.0
          %1654 = vst.msk [vmem:[#allocation2 + $0xa8] sm:$0x3f] %vm1633, 0.0
          %1655 = vst.msk [vmem:[#allocation2 + $0xb0] sm:$0xff] %vm1631, 0.0
          %1656 = vst.msk [vmem:[#allocation2 + $0xb8] sm:$0x3f] %vm1633, 0.0
          %1657 = vst.msk [vmem:[#allocation2 + $0xc0] sm:$0xff] %vm1631, 0.0
          %1658 = vst.msk [vmem:[#allocation2 + $0xc8] sm:$0x3f] %vm1633, 0.0
          %1659 = vst.msk [vmem:[#allocation2 + $0xd0] sm:$0xff] %vm1631, 0.0
          %1660 = vst.msk [vmem:[#allocation2 + $0xd8] sm:$0x3f] %vm1633, 0.0
          %v1661 = vld [vmem:[%s303] sm:$0xff]
          %v1662 = vld [vmem:[%s303 + $0x8] sm:$0xff]
          %v1663 = vld [vmem:[%s303 + $0x10] sm:$0xff]
          %v1664 = vld [vmem:[%s303 + $0x18] sm:$0xff]
          %v1665 = vld [vmem:[%s303 + $0x20] sm:$0xff]
          %v1666 = vld [vmem:[%s303 + $0x28] sm:$0xff]
          %v1667 = vld [vmem:[%s303 + $0x30] sm:$0xff]
          %v1668 = vld [vmem:[%s303 + $0x38] sm:$0xff]
          %1677 = vrot.lane.b32.xlu0 %v1661, 3
          %v1678 = vpop.permute.xlu0 %1677
          %1679 = vrot.lane.b32.xlu0 %v1662, 3
          %v1680 = vpop.permute.xlu0 %1679
          %1681 = vrot.lane.b32.xlu0 %v1663, 3
          %v1682 = vpop.permute.xlu0 %1681
          %1683 = vrot.lane.b32.xlu0 %v1664, 3
          %v1684 = vpop.permute.xlu0 %1683
          %1685 = vrot.lane.b32.xlu0 %v1665, 3
          %v1686 = vpop.permute.xlu0 %1685
          %1687 = vrot.lane.b32.xlu0 %v1666, 3
          %v1688 = vpop.permute.xlu0 %1687
          %1689 = vrot.lane.b32.xlu0 %v1667, 3
          %v1690 = vpop.permute.xlu0 %1689
          %1691 = vrot.lane.b32.xlu0 %v1668, 3
          %v1692 = vpop.permute.xlu0 %1691
          %s1701 = scalar_lea.vmem [#allocation2], 48
          %vm1702 = vcmask 154648
          %1703 = vst.msk [vmem:[%s1701 + $0x3] sm:$0xff] %vm1702, %v1678
          %1704 = vst.msk [vmem:[%s1701 + $0x13] sm:$0xff] %vm1702, %v1680
          %1705 = vst.msk [vmem:[%s1701 + $0x23] sm:$0xff] %vm1702, %v1682
          %1706 = vst.msk [vmem:[%s1701 + $0x33] sm:$0xff] %vm1702, %v1684
          %1707 = vst.msk [vmem:[%s1701 + $0x43] sm:$0xff] %vm1702, %v1686
          %1708 = vst.msk [vmem:[%s1701 + $0x53] sm:$0xff] %vm1702, %v1688
          %1709 = vst.msk [vmem:[%s1701 + $0x63] sm:$0xff] %vm1702, %v1690
          %1710 = vst.msk [vmem:[%s1701 + $0x73] sm:$0xff] %vm1702, %v1692
          %s1711 = ssub.s32 %s24, 8
          %s1712 = smul.u32 %s1711, 128
          %s1713 = sld [smem:[#allocation5 + %s1712]]
          %v1714 = vld [vmem:[#allocation2 + $0x3] sm:$0xff]
          %v1715 = vld [vmem:[#allocation2 + $0x13] sm:$0xff]
          %v1716 = vld [vmem:[#allocation2 + $0x23] sm:$0xff]
          %v1717 = vld [vmem:[#allocation2 + $0x33] sm:$0xff]
          %v1718 = vld [vmem:[#allocation2 + $0x43] sm:$0xff]
          %v1719 = vld [vmem:[#allocation2 + $0x53] sm:$0xff]
          %v1720 = vld [vmem:[#allocation2 + $0x63] sm:$0xff]
          %v1721 = vld [vmem:[#allocation2 + $0x73] sm:$0xff]
          %v1722 = vstv %s1713
          %v1723 = vmul.f32 %v1722, %v1714
          %v1724 = vmul.f32 %v1722, %v1715
          %v1725 = vmul.f32 %v1722, %v1716
          %v1726 = vmul.f32 %v1722, %v1717
          %v1727 = vmul.f32 %v1722, %v1718
          %v1728 = vmul.f32 %v1722, %v1719
          %v1729 = vmul.f32 %v1722, %v1720
          %v1730 = vmul.f32 %v1722, %v1721
          %v1731 = vadd.f32 %v1723, 0.0
          %v1732 = vadd.f32 %v1724, 0.0
          %v1733 = vadd.f32 %v1725, 0.0
          %v1734 = vadd.f32 %v1726, 0.0
          %v1735 = vadd.f32 %v1727, 0.0
          %v1736 = vadd.f32 %v1728, 0.0
          %v1737 = vadd.f32 %v1729, 0.0
          %v1738 = vadd.f32 %v1730, 0.0
          %s1739 = sadd.s32 %s1712, 1
          %s1740 = sld [smem:[#allocation5 + %s1739]]
          %s1741 = scalar_lea.vmem [#allocation2], 16
          %v1742 = vld [vmem:[%s1741 + $0x3] sm:$0xff]
          %v1743 = vld [vmem:[%s1741 + $0x13] sm:$0xff]
          %v1744 = vld [vmem:[%s1741 + $0x23] sm:$0xff]
          %v1745 = vld [vmem:[%s1741 + $0x33] sm:$0xff]
          %v1746 = vld [vmem:[%s1741 + $0x43] sm:$0xff]
          %v1747 = vld [vmem:[%s1741 + $0x53] sm:$0xff]
          %v1748 = vld [vmem:[%s1741 + $0x63] sm:$0xff]
          %v1749 = vld [vmem:[%s1741 + $0x73] sm:$0xff]
          %v1750 = vstv %s1740
          %v1751 = vmul.f32 %v1750, %v1742
          %v1752 = vmul.f32 %v1750, %v1743
          %v1753 = vmul.f32 %v1750, %v1744
          %v1754 = vmul.f32 %v1750, %v1745
          %v1755 = vmul.f32 %v1750, %v1746
          %v1756 = vmul.f32 %v1750, %v1747
          %v1757 = vmul.f32 %v1750, %v1748
          %v1758 = vmul.f32 %v1750, %v1749
          %v1759 = vadd.f32 %v1731, %v1751
          %v1760 = vadd.f32 %v1732, %v1752
          %v1761 = vadd.f32 %v1733, %v1753
          %v1762 = vadd.f32 %v1734, %v1754
          %v1763 = vadd.f32 %v1735, %v1755
          %v1764 = vadd.f32 %v1736, %v1756
          %v1765 = vadd.f32 %v1737, %v1757
          %v1766 = vadd.f32 %v1738, %v1758
          %s1767 = sadd.s32 %s1712, 2
          %s1768 = sld [smem:[#allocation5 + %s1767]]
          %s1769 = scalar_lea.vmem [#allocation2], 32
          %v1770 = vld [vmem:[%s1769 + $0x3] sm:$0xff]
          %v1771 = vld [vmem:[%s1769 + $0x13] sm:$0xff]
          %v1772 = vld [vmem:[%s1769 + $0x23] sm:$0xff]
          %v1773 = vld [vmem:[%s1769 + $0x33] sm:$0xff]
          %v1774 = vld [vmem:[%s1769 + $0x43] sm:$0xff]
          %v1775 = vld [vmem:[%s1769 + $0x53] sm:$0xff]
          %v1776 = vld [vmem:[%s1769 + $0x63] sm:$0xff]
          %v1777 = vld [vmem:[%s1769 + $0x73] sm:$0xff]
          %v1778 = vstv %s1768
          %v1779 = vmul.f32 %v1778, %v1770
          %v1780 = vmul.f32 %v1778, %v1771
          %v1781 = vmul.f32 %v1778, %v1772
          %v1782 = vmul.f32 %v1778, %v1773
          %v1783 = vmul.f32 %v1778, %v1774
          %v1784 = vmul.f32 %v1778, %v1775
          %v1785 = vmul.f32 %v1778, %v1776
          %v1786 = vmul.f32 %v1778, %v1777
          %v1787 = vadd.f32 %v1759, %v1779
          %v1788 = vadd.f32 %v1760, %v1780
          %v1789 = vadd.f32 %v1761, %v1781
          %v1790 = vadd.f32 %v1762, %v1782
          %v1791 = vadd.f32 %v1763, %v1783
          %v1792 = vadd.f32 %v1764, %v1784
          %v1793 = vadd.f32 %v1765, %v1785
          %v1794 = vadd.f32 %v1766, %v1786
          %s1795 = sadd.s32 %s1712, 3
          %s1796 = sld [smem:[#allocation5 + %s1795]]
          %v1797 = vld [vmem:[%s1701 + $0x3] sm:$0xff]
          %v1798 = vld [vmem:[%s1701 + $0x13] sm:$0xff]
          %v1799 = vld [vmem:[%s1701 + $0x23] sm:$0xff]
          %v1800 = vld [vmem:[%s1701 + $0x33] sm:$0xff]
          %v1801 = vld [vmem:[%s1701 + $0x43] sm:$0xff]
          %v1802 = vld [vmem:[%s1701 + $0x53] sm:$0xff]
          %v1803 = vld [vmem:[%s1701 + $0x63] sm:$0xff]
          %v1804 = vld [vmem:[%s1701 + $0x73] sm:$0xff]
          %v1805 = vstv %s1796
          %v1806 = vmul.f32 %v1805, %v1797
          %v1807 = vmul.f32 %v1805, %v1798
          %v1808 = vmul.f32 %v1805, %v1799
          %v1809 = vmul.f32 %v1805, %v1800
          %v1810 = vmul.f32 %v1805, %v1801
          %v1811 = vmul.f32 %v1805, %v1802
          %v1812 = vmul.f32 %v1805, %v1803
          %v1813 = vmul.f32 %v1805, %v1804
          %v1814 = vadd.f32 %v1787, %v1806
          %v1815 = vadd.f32 %v1788, %v1807
          %v1816 = vadd.f32 %v1789, %v1808
          %v1817 = vadd.f32 %v1790, %v1809
          %v1818 = vadd.f32 %v1791, %v1810
          %v1819 = vadd.f32 %v1792, %v1811
          %v1820 = vadd.f32 %v1793, %v1812
          %v1821 = vadd.f32 %v1794, %v1813
          %s1822 = sadd.s32 %s1712, 4
          %s1823 = sld [smem:[#allocation5 + %s1822]]
          %s1824 = scalar_lea.vmem [#allocation2], 64
          %v1825 = vld [vmem:[%s1824 + $0x3] sm:$0xff]
          %v1826 = vld [vmem:[%s1824 + $0x13] sm:$0xff]
          %v1827 = vld [vmem:[%s1824 + $0x23] sm:$0xff]
          %v1828 = vld [vmem:[%s1824 + $0x33] sm:$0xff]
          %v1829 = vld [vmem:[%s1824 + $0x43] sm:$0xff]
          %v1830 = vld [vmem:[%s1824 + $0x53] sm:$0xff]
          %v1831 = vld [vmem:[%s1824 + $0x63] sm:$0xff]
          %v1832 = vld [vmem:[%s1824 + $0x73] sm:$0xff]
          %v1833 = vstv %s1823
          %v1834 = vmul.f32 %v1833, %v1825
          %v1835 = vmul.f32 %v1833, %v1826
          %v1836 = vmul.f32 %v1833, %v1827
          %v1837 = vmul.f32 %v1833, %v1828
          %v1838 = vmul.f32 %v1833, %v1829
          %v1839 = vmul.f32 %v1833, %v1830
          %v1840 = vmul.f32 %v1833, %v1831
          %v1841 = vmul.f32 %v1833, %v1832
          %v1842 = vadd.f32 %v1814, %v1834
          %v1843 = vadd.f32 %v1815, %v1835
          %v1844 = vadd.f32 %v1816, %v1836
          %v1845 = vadd.f32 %v1817, %v1837
          %v1846 = vadd.f32 %v1818, %v1838
          %v1847 = vadd.f32 %v1819, %v1839
          %v1848 = vadd.f32 %v1820, %v1840
          %v1849 = vadd.f32 %v1821, %v1841
          %s1850 = sadd.s32 %s1712, 5
          %s1851 = sld [smem:[#allocation5 + %s1850]]
          %s1852 = scalar_lea.vmem [#allocation2], 80
          %v1853 = vld [vmem:[%s1852 + $0x3] sm:$0xff]
          %v1854 = vld [vmem:[%s1852 + $0x13] sm:$0xff]
          %v1855 = vld [vmem:[%s1852 + $0x23] sm:$0xff]
          %v1856 = vld [vmem:[%s1852 + $0x33] sm:$0xff]
          %v1857 = vld [vmem:[%s1852 + $0x43] sm:$0xff]
          %v1858 = vld [vmem:[%s1852 + $0x53] sm:$0xff]
          %v1859 = vld [vmem:[%s1852 + $0x63] sm:$0xff]
          %v1860 = vld [vmem:[%s1852 + $0x73] sm:$0xff]
          %v1861 = vstv %s1851
          %v1862 = vmul.f32 %v1861, %v1853
          %v1863 = vmul.f32 %v1861, %v1854
          %v1864 = vmul.f32 %v1861, %v1855
          %v1865 = vmul.f32 %v1861, %v1856
          %v1866 = vmul.f32 %v1861, %v1857
          %v1867 = vmul.f32 %v1861, %v1858
          %v1868 = vmul.f32 %v1861, %v1859
          %v1869 = vmul.f32 %v1861, %v1860
          %v1870 = vadd.f32 %v1842, %v1862
          %v1871 = vadd.f32 %v1843, %v1863
          %v1872 = vadd.f32 %v1844, %v1864
          %v1873 = vadd.f32 %v1845, %v1865
          %v1874 = vadd.f32 %v1846, %v1866
          %v1875 = vadd.f32 %v1847, %v1867
          %v1876 = vadd.f32 %v1848, %v1868
          %v1877 = vadd.f32 %v1849, %v1869
          %s1878 = sadd.s32 %s1712, 6
          %s1879 = sld [smem:[#allocation5 + %s1878]]
          %s1880 = scalar_lea.vmem [#allocation2], 96
          %v1881 = vld [vmem:[%s1880 + $0x3] sm:$0xff]
          %v1882 = vld [vmem:[%s1880 + $0x13] sm:$0xff]
          %v1883 = vld [vmem:[%s1880 + $0x23] sm:$0xff]
          %v1884 = vld [vmem:[%s1880 + $0x33] sm:$0xff]
          %v1885 = vld [vmem:[%s1880 + $0x43] sm:$0xff]
          %v1886 = vld [vmem:[%s1880 + $0x53] sm:$0xff]
          %v1887 = vld [vmem:[%s1880 + $0x63] sm:$0xff]
          %v1888 = vld [vmem:[%s1880 + $0x73] sm:$0xff]
          %v1889 = vstv %s1879
          %v1890 = vmul.f32 %v1889, %v1881
          %v1891 = vmul.f32 %v1889, %v1882
          %v1892 = vmul.f32 %v1889, %v1883
          %v1893 = vmul.f32 %v1889, %v1884
          %v1894 = vmul.f32 %v1889, %v1885
          %v1895 = vmul.f32 %v1889, %v1886
          %v1896 = vmul.f32 %v1889, %v1887
          %v1897 = vmul.f32 %v1889, %v1888
          %v1898 = vadd.f32 %v1870, %v1890
          %v1899 = vadd.f32 %v1871, %v1891
          %v1900 = vadd.f32 %v1872, %v1892
          %v1901 = vadd.f32 %v1873, %v1893
          %v1902 = vadd.f32 %v1874, %v1894
          %v1903 = vadd.f32 %v1875, %v1895
          %v1904 = vadd.f32 %v1876, %v1896
          %v1905 = vadd.f32 %v1877, %v1897
          %1914 = vrot.lane.b32.xlu0 %v1898, 125
          %v1915 = vpop.permute.xlu0 %1914
          %1916 = vrot.lane.b32.xlu0 %v1899, 125
          %v1917 = vpop.permute.xlu0 %1916
          %1918 = vrot.lane.b32.xlu0 %v1900, 125
          %v1919 = vpop.permute.xlu0 %1918
          %1920 = vrot.lane.b32.xlu0 %v1901, 125
          %v1921 = vpop.permute.xlu0 %1920
          %1922 = vrot.lane.b32.xlu0 %v1902, 125
          %v1923 = vpop.permute.xlu0 %1922
          %1924 = vrot.lane.b32.xlu0 %v1903, 125
          %v1925 = vpop.permute.xlu0 %1924
          %1926 = vrot.lane.b32.xlu0 %v1904, 125
          %v1927 = vpop.permute.xlu0 %1926
          %1928 = vrot.lane.b32.xlu0 %v1905, 125
          %v1929 = vpop.permute.xlu0 %1928
          %vm1938 = vcmask 130048
          %1939 = vst.msk [vmem:[%s312] sm:$0xff] %vm1938, %v1915
          %1940 = vst.msk [vmem:[%s312 + $0x8] sm:$0xff] %vm1938, %v1917
          %1941 = vst.msk [vmem:[%s312 + $0x10] sm:$0xff] %vm1938, %v1919
          %1942 = vst.msk [vmem:[%s312 + $0x18] sm:$0xff] %vm1938, %v1921
          %1943 = vst.msk [vmem:[%s312 + $0x20] sm:$0xff] %vm1938, %v1923
          %1944 = vst.msk [vmem:[%s312 + $0x28] sm:$0xff] %vm1938, %v1925
          %1945 = vst.msk [vmem:[%s312 + $0x30] sm:$0xff] %vm1938, %v1927
          %1946 = vst.msk [vmem:[%s312 + $0x38] sm:$0xff] %vm1938, %v1929
        $region68: #{tpu_custom_call.1} parent=39 // pred_fallthru
          _
        %p1947 = scmp.ge.s32.totalorder %s24, 12
        %p1948 = scmp.lt.s32.totalorder %s24, 16
        %p1949 = pnand %p1947, %p1948
        %p1950 = pneg %p1949
        // Predicated region
        $region69: #{tpu_custom_call.1} parent=39 // pred_check
          _
        $region70: #{tpu_custom_call.1} parent=39 // pred_check_branch
          %1952 = sbr.rel (%p1949) target = $region72
        $region71: #{tpu_custom_call.1} parent=39 // pred_region
          %vm1953 = vcmask 179200
          %1954 = vst.msk [vmem:[#allocation2] sm:$0xff] %vm1953, 0.0
          %vm1955 = vcmask 177152
          %1956 = vst.msk [vmem:[#allocation2 + $0x8] sm:$0x3f] %vm1955, 0.0
          %1957 = vst.msk [vmem:[#allocation2 + $0x10] sm:$0xff] %vm1953, 0.0
          %1958 = vst.msk [vmem:[#allocation2 + $0x18] sm:$0x3f] %vm1955, 0.0
          %1959 = vst.msk [vmem:[#allocation2 + $0x20] sm:$0xff] %vm1953, 0.0
          %1960 = vst.msk [vmem:[#allocation2 + $0x28] sm:$0x3f] %vm1955, 0.0
          %1961 = vst.msk [vmem:[#allocation2 + $0x30] sm:$0xff] %vm1953, 0.0
          %1962 = vst.msk [vmem:[#allocation2 + $0x38] sm:$0x3f] %vm1955, 0.0
          %1963 = vst.msk [vmem:[#allocation2 + $0x40] sm:$0xff] %vm1953, 0.0
          %1964 = vst.msk [vmem:[#allocation2 + $0x48] sm:$0x3f] %vm1955, 0.0
          %1965 = vst.msk [vmem:[#allocation2 + $0x50] sm:$0xff] %vm1953, 0.0
          %1966 = vst.msk [vmem:[#allocation2 + $0x58] sm:$0x3f] %vm1955, 0.0
          %1967 = vst.msk [vmem:[#allocation2 + $0x60] sm:$0xff] %vm1953, 0.0
          %1968 = vst.msk [vmem:[#allocation2 + $0x68] sm:$0x3f] %vm1955, 0.0
          %1969 = vst.msk [vmem:[#allocation2 + $0x70] sm:$0xff] %vm1953, 0.0
          %1970 = vst.msk [vmem:[#allocation2 + $0x78] sm:$0x3f] %vm1955, 0.0
          %1971 = vst.msk [vmem:[#allocation2 + $0x80] sm:$0xff] %vm1953, 0.0
          %1972 = vst.msk [vmem:[#allocation2 + $0x88] sm:$0x3f] %vm1955, 0.0
          %1973 = vst.msk [vmem:[#allocation2 + $0x90] sm:$0xff] %vm1953, 0.0
          %1974 = vst.msk [vmem:[#allocation2 + $0x98] sm:$0x3f] %vm1955, 0.0
          %1975 = vst.msk [vmem:[#allocation2 + $0xa0] sm:$0xff] %vm1953, 0.0
          %1976 = vst.msk [vmem:[#allocation2 + $0xa8] sm:$0x3f] %vm1955, 0.0
          %1977 = vst.msk [vmem:[#allocation2 + $0xb0] sm:$0xff] %vm1953, 0.0
          %1978 = vst.msk [vmem:[#allocation2 + $0xb8] sm:$0x3f] %vm1955, 0.0
          %1979 = vst.msk [vmem:[#allocation2 + $0xc0] sm:$0xff] %vm1953, 0.0
          %1980 = vst.msk [vmem:[#allocation2 + $0xc8] sm:$0x3f] %vm1955, 0.0
          %1981 = vst.msk [vmem:[#allocation2 + $0xd0] sm:$0xff] %vm1953, 0.0
          %1982 = vst.msk [vmem:[#allocation2 + $0xd8] sm:$0x3f] %vm1955, 0.0
          %v1983 = vld [vmem:[%s303] sm:$0xff]
          %v1984 = vld [vmem:[%s303 + $0x8] sm:$0xff]
          %v1985 = vld [vmem:[%s303 + $0x10] sm:$0xff]
          %v1986 = vld [vmem:[%s303 + $0x18] sm:$0xff]
          %v1987 = vld [vmem:[%s303 + $0x20] sm:$0xff]
          %v1988 = vld [vmem:[%s303 + $0x28] sm:$0xff]
          %v1989 = vld [vmem:[%s303 + $0x30] sm:$0xff]
          %v1990 = vld [vmem:[%s303 + $0x38] sm:$0xff]
          %1999 = vrot.lane.b32.xlu0 %v1983, 3
          %v2000 = vpop.permute.xlu0 %1999
          %2001 = vrot.lane.b32.xlu0 %v1984, 3
          %v2002 = vpop.permute.xlu0 %2001
          %2003 = vrot.lane.b32.xlu0 %v1985, 3
          %v2004 = vpop.permute.xlu0 %2003
          %2005 = vrot.lane.b32.xlu0 %v1986, 3
          %v2006 = vpop.permute.xlu0 %2005
          %2007 = vrot.lane.b32.xlu0 %v1987, 3
          %v2008 = vpop.permute.xlu0 %2007
          %2009 = vrot.lane.b32.xlu0 %v1988, 3
          %v2010 = vpop.permute.xlu0 %2009
          %2011 = vrot.lane.b32.xlu0 %v1989, 3
          %v2012 = vpop.permute.xlu0 %2011
          %2013 = vrot.lane.b32.xlu0 %v1990, 3
          %v2014 = vpop.permute.xlu0 %2013
          %s2023 = scalar_lea.vmem [#allocation2], 48
          %vm2024 = vcmask 154648
          %2025 = vst.msk [vmem:[%s2023 + $0x3] sm:$0xff] %vm2024, %v2000
          %2026 = vst.msk [vmem:[%s2023 + $0x13] sm:$0xff] %vm2024, %v2002
          %2027 = vst.msk [vmem:[%s2023 + $0x23] sm:$0xff] %vm2024, %v2004
          %2028 = vst.msk [vmem:[%s2023 + $0x33] sm:$0xff] %vm2024, %v2006
          %2029 = vst.msk [vmem:[%s2023 + $0x43] sm:$0xff] %vm2024, %v2008
          %2030 = vst.msk [vmem:[%s2023 + $0x53] sm:$0xff] %vm2024, %v2010
          %2031 = vst.msk [vmem:[%s2023 + $0x63] sm:$0xff] %vm2024, %v2012
          %2032 = vst.msk [vmem:[%s2023 + $0x73] sm:$0xff] %vm2024, %v2014
          %s2033 = ssub.s32 %s24, 12
          %s2034 = smul.u32 %s2033, 128
          %s2035 = sld [smem:[#allocation7 + %s2034]]
          %v2036 = vld [vmem:[%s2023] sm:$0xff]
          %v2037 = vld [vmem:[%s2023 + $0x10] sm:$0xff]
          %v2038 = vld [vmem:[%s2023 + $0x20] sm:$0xff]
          %v2039 = vld [vmem:[%s2023 + $0x30] sm:$0xff]
          %v2040 = vld [vmem:[%s2023 + $0x40] sm:$0xff]
          %v2041 = vld [vmem:[%s2023 + $0x50] sm:$0xff]
          %v2042 = vld [vmem:[%s2023 + $0x60] sm:$0xff]
          %v2043 = vld [vmem:[%s2023 + $0x70] sm:$0xff]
          %v2044 = vstv %s2035
          %v2045 = vmul.f32 %v2044, %v2036
          %v2046 = vmul.f32 %v2044, %v2037
          %v2047 = vmul.f32 %v2044, %v2038
          %v2048 = vmul.f32 %v2044, %v2039
          %v2049 = vmul.f32 %v2044, %v2040
          %v2050 = vmul.f32 %v2044, %v2041
          %v2051 = vmul.f32 %v2044, %v2042
          %v2052 = vmul.f32 %v2044, %v2043
          %v2053 = vadd.f32 %v2045, 0.0
          %v2054 = vadd.f32 %v2046, 0.0
          %v2055 = vadd.f32 %v2047, 0.0
          %v2056 = vadd.f32 %v2048, 0.0
          %v2057 = vadd.f32 %v2049, 0.0
          %v2058 = vadd.f32 %v2050, 0.0
          %v2059 = vadd.f32 %v2051, 0.0
          %v2060 = vadd.f32 %v2052, 0.0
          %s2061 = sadd.s32 %s2034, 1
          %s2062 = sld [smem:[#allocation7 + %s2061]]
          %v2063 = vld [vmem:[%s2023 + $0x1] sm:$0xff]
          %v2064 = vld [vmem:[%s2023 + $0x11] sm:$0xff]
          %v2065 = vld [vmem:[%s2023 + $0x21] sm:$0xff]
          %v2066 = vld [vmem:[%s2023 + $0x31] sm:$0xff]
          %v2067 = vld [vmem:[%s2023 + $0x41] sm:$0xff]
          %v2068 = vld [vmem:[%s2023 + $0x51] sm:$0xff]
          %v2069 = vld [vmem:[%s2023 + $0x61] sm:$0xff]
          %v2070 = vld [vmem:[%s2023 + $0x71] sm:$0xff]
          %v2071 = vstv %s2062
          %v2072 = vmul.f32 %v2071, %v2063
          %v2073 = vmul.f32 %v2071, %v2064
          %v2074 = vmul.f32 %v2071, %v2065
          %v2075 = vmul.f32 %v2071, %v2066
          %v2076 = vmul.f32 %v2071, %v2067
          %v2077 = vmul.f32 %v2071, %v2068
          %v2078 = vmul.f32 %v2071, %v2069
          %v2079 = vmul.f32 %v2071, %v2070
          %v2080 = vadd.f32 %v2053, %v2072
          %v2081 = vadd.f32 %v2054, %v2073
          %v2082 = vadd.f32 %v2055, %v2074
          %v2083 = vadd.f32 %v2056, %v2075
          %v2084 = vadd.f32 %v2057, %v2076
          %v2085 = vadd.f32 %v2058, %v2077
          %v2086 = vadd.f32 %v2059, %v2078
          %v2087 = vadd.f32 %v2060, %v2079
          %s2088 = sadd.s32 %s2034, 2
          %s2089 = sld [smem:[#allocation7 + %s2088]]
          %v2090 = vld [vmem:[%s2023 + $0x2] sm:$0xff]
          %v2091 = vld [vmem:[%s2023 + $0x12] sm:$0xff]
          %v2092 = vld [vmem:[%s2023 + $0x22] sm:$0xff]
          %v2093 = vld [vmem:[%s2023 + $0x32] sm:$0xff]
          %v2094 = vld [vmem:[%s2023 + $0x42] sm:$0xff]
          %v2095 = vld [vmem:[%s2023 + $0x52] sm:$0xff]
          %v2096 = vld [vmem:[%s2023 + $0x62] sm:$0xff]
          %v2097 = vld [vmem:[%s2023 + $0x72] sm:$0xff]
          %v2098 = vstv %s2089
          %v2099 = vmul.f32 %v2098, %v2090
          %v2100 = vmul.f32 %v2098, %v2091
          %v2101 = vmul.f32 %v2098, %v2092
          %v2102 = vmul.f32 %v2098, %v2093
          %v2103 = vmul.f32 %v2098, %v2094
          %v2104 = vmul.f32 %v2098, %v2095
          %v2105 = vmul.f32 %v2098, %v2096
          %v2106 = vmul.f32 %v2098, %v2097
          %v2107 = vadd.f32 %v2080, %v2099
          %v2108 = vadd.f32 %v2081, %v2100
          %v2109 = vadd.f32 %v2082, %v2101
          %v2110 = vadd.f32 %v2083, %v2102
          %v2111 = vadd.f32 %v2084, %v2103
          %v2112 = vadd.f32 %v2085, %v2104
          %v2113 = vadd.f32 %v2086, %v2105
          %v2114 = vadd.f32 %v2087, %v2106
          %s2115 = sadd.s32 %s2034, 3
          %s2116 = sld [smem:[#allocation7 + %s2115]]
          %v2117 = vld [vmem:[%s2023 + $0x3] sm:$0xff]
          %v2118 = vld [vmem:[%s2023 + $0x13] sm:$0xff]
          %v2119 = vld [vmem:[%s2023 + $0x23] sm:$0xff]
          %v2120 = vld [vmem:[%s2023 + $0x33] sm:$0xff]
          %v2121 = vld [vmem:[%s2023 + $0x43] sm:$0xff]
          %v2122 = vld [vmem:[%s2023 + $0x53] sm:$0xff]
          %v2123 = vld [vmem:[%s2023 + $0x63] sm:$0xff]
          %v2124 = vld [vmem:[%s2023 + $0x73] sm:$0xff]
          %v2125 = vstv %s2116
          %v2126 = vmul.f32 %v2125, %v2117
          %v2127 = vmul.f32 %v2125, %v2118
          %v2128 = vmul.f32 %v2125, %v2119
          %v2129 = vmul.f32 %v2125, %v2120
          %v2130 = vmul.f32 %v2125, %v2121
          %v2131 = vmul.f32 %v2125, %v2122
          %v2132 = vmul.f32 %v2125, %v2123
          %v2133 = vmul.f32 %v2125, %v2124
          %v2134 = vadd.f32 %v2107, %v2126
          %v2135 = vadd.f32 %v2108, %v2127
          %v2136 = vadd.f32 %v2109, %v2128
          %v2137 = vadd.f32 %v2110, %v2129
          %v2138 = vadd.f32 %v2111, %v2130
          %v2139 = vadd.f32 %v2112, %v2131
          %v2140 = vadd.f32 %v2113, %v2132
          %v2141 = vadd.f32 %v2114, %v2133
          %s2142 = sadd.s32 %s2034, 4
          %s2143 = sld [smem:[#allocation7 + %s2142]]
          %v2144 = vld [vmem:[%s2023 + $0x4] sm:$0xff]
          %v2145 = vld [vmem:[%s2023 + $0x14] sm:$0xff]
          %v2146 = vld [vmem:[%s2023 + $0x24] sm:$0xff]
          %v2147 = vld [vmem:[%s2023 + $0x34] sm:$0xff]
          %v2148 = vld [vmem:[%s2023 + $0x44] sm:$0xff]
          %v2149 = vld [vmem:[%s2023 + $0x54] sm:$0xff]
          %v2150 = vld [vmem:[%s2023 + $0x64] sm:$0xff]
          %v2151 = vld [vmem:[%s2023 + $0x74] sm:$0xff]
          %v2152 = vstv %s2143
          %v2153 = vmul.f32 %v2152, %v2144
          %v2154 = vmul.f32 %v2152, %v2145
          %v2155 = vmul.f32 %v2152, %v2146
          %v2156 = vmul.f32 %v2152, %v2147
          %v2157 = vmul.f32 %v2152, %v2148
          %v2158 = vmul.f32 %v2152, %v2149
          %v2159 = vmul.f32 %v2152, %v2150
          %v2160 = vmul.f32 %v2152, %v2151
          %v2161 = vadd.f32 %v2134, %v2153
          %v2162 = vadd.f32 %v2135, %v2154
          %v2163 = vadd.f32 %v2136, %v2155
          %v2164 = vadd.f32 %v2137, %v2156
          %v2165 = vadd.f32 %v2138, %v2157
          %v2166 = vadd.f32 %v2139, %v2158
          %v2167 = vadd.f32 %v2140, %v2159
          %v2168 = vadd.f32 %v2141, %v2160
          %s2169 = sadd.s32 %s2034, 5
          %s2170 = sld [smem:[#allocation7 + %s2169]]
          %v2171 = vld [vmem:[%s2023 + $0x5] sm:$0xff]
          %v2172 = vld [vmem:[%s2023 + $0x15] sm:$0xff]
          %v2173 = vld [vmem:[%s2023 + $0x25] sm:$0xff]
          %v2174 = vld [vmem:[%s2023 + $0x35] sm:$0xff]
          %v2175 = vld [vmem:[%s2023 + $0x45] sm:$0xff]
          %v2176 = vld [vmem:[%s2023 + $0x55] sm:$0xff]
          %v2177 = vld [vmem:[%s2023 + $0x65] sm:$0xff]
          %v2178 = vld [vmem:[%s2023 + $0x75] sm:$0xff]
          %v2179 = vstv %s2170
          %v2180 = vmul.f32 %v2179, %v2171
          %v2181 = vmul.f32 %v2179, %v2172
          %v2182 = vmul.f32 %v2179, %v2173
          %v2183 = vmul.f32 %v2179, %v2174
          %v2184 = vmul.f32 %v2179, %v2175
          %v2185 = vmul.f32 %v2179, %v2176
          %v2186 = vmul.f32 %v2179, %v2177
          %v2187 = vmul.f32 %v2179, %v2178
          %v2188 = vadd.f32 %v2161, %v2180
          %v2189 = vadd.f32 %v2162, %v2181
          %v2190 = vadd.f32 %v2163, %v2182
          %v2191 = vadd.f32 %v2164, %v2183
          %v2192 = vadd.f32 %v2165, %v2184
          %v2193 = vadd.f32 %v2166, %v2185
          %v2194 = vadd.f32 %v2167, %v2186
          %v2195 = vadd.f32 %v2168, %v2187
          %s2196 = sadd.s32 %s2034, 6
          %s2197 = sld [smem:[#allocation7 + %s2196]]
          %v2198 = vld [vmem:[%s2023 + $0x6] sm:$0xff]
          %v2199 = vld [vmem:[%s2023 + $0x16] sm:$0xff]
          %v2200 = vld [vmem:[%s2023 + $0x26] sm:$0xff]
          %v2201 = vld [vmem:[%s2023 + $0x36] sm:$0xff]
          %v2202 = vld [vmem:[%s2023 + $0x46] sm:$0xff]
          %v2203 = vld [vmem:[%s2023 + $0x56] sm:$0xff]
          %v2204 = vld [vmem:[%s2023 + $0x66] sm:$0xff]
          %v2205 = vld [vmem:[%s2023 + $0x76] sm:$0xff]
          %v2206 = vstv %s2197
          %v2207 = vmul.f32 %v2206, %v2198
          %v2208 = vmul.f32 %v2206, %v2199
          %v2209 = vmul.f32 %v2206, %v2200
          %v2210 = vmul.f32 %v2206, %v2201
          %v2211 = vmul.f32 %v2206, %v2202
          %v2212 = vmul.f32 %v2206, %v2203
          %v2213 = vmul.f32 %v2206, %v2204
          %v2214 = vmul.f32 %v2206, %v2205
          %v2215 = vadd.f32 %v2188, %v2207
          %v2216 = vadd.f32 %v2189, %v2208
          %v2217 = vadd.f32 %v2190, %v2209
          %v2218 = vadd.f32 %v2191, %v2210
          %v2219 = vadd.f32 %v2192, %v2211
          %v2220 = vadd.f32 %v2193, %v2212
          %v2221 = vadd.f32 %v2194, %v2213
          %v2222 = vadd.f32 %v2195, %v2214
          %2231 = vrot.lane.b32.xlu0 %v2215, 125
          %v2232 = vpop.permute.xlu0 %2231
          %2233 = vrot.lane.b32.xlu0 %v2216, 125
          %v2234 = vpop.permute.xlu0 %2233
          %2235 = vrot.lane.b32.xlu0 %v2217, 125
          %v2236 = vpop.permute.xlu0 %2235
          %2237 = vrot.lane.b32.xlu0 %v2218, 125
          %v2238 = vpop.permute.xlu0 %2237
          %2239 = vrot.lane.b32.xlu0 %v2219, 125
          %v2240 = vpop.permute.xlu0 %2239
          %2241 = vrot.lane.b32.xlu0 %v2220, 125
          %v2242 = vpop.permute.xlu0 %2241
          %2243 = vrot.lane.b32.xlu0 %v2221, 125
          %v2244 = vpop.permute.xlu0 %2243
          %2245 = vrot.lane.b32.xlu0 %v2222, 125
          %v2246 = vpop.permute.xlu0 %2245
          %vm2255 = vcmask 130048
          %2256 = vst.msk [vmem:[%s312] sm:$0xff] %vm2255, %v2232
          %2257 = vst.msk [vmem:[%s312 + $0x8] sm:$0xff] %vm2255, %v2234
          %2258 = vst.msk [vmem:[%s312 + $0x10] sm:$0xff] %vm2255, %v2236
          %2259 = vst.msk [vmem:[%s312 + $0x18] sm:$0xff] %vm2255, %v2238
          %2260 = vst.msk [vmem:[%s312 + $0x20] sm:$0xff] %vm2255, %v2240
          %2261 = vst.msk [vmem:[%s312 + $0x28] sm:$0xff] %vm2255, %v2242
          %2262 = vst.msk [vmem:[%s312 + $0x30] sm:$0xff] %vm2255, %v2244
          %2263 = vst.msk [vmem:[%s312 + $0x38] sm:$0xff] %vm2255, %v2246
        $region72: #{tpu_custom_call.1} parent=39 // pred_fallthru
          _
        %p2264 = scmp.ge.s32.totalorder %s24, 16
        // Predicated region
        $region73: #{tpu_custom_call.1} parent=39 // pred_check
          %p2265 = pneg %p2264
        $region74: #{tpu_custom_call.1} parent=39 // pred_check_branch
          %2267 = sbr.rel (%p2265) target = $region76
        $region75: #{tpu_custom_call.1} parent=39 // pred_region
          %vm2268 = vcmask 179200
          %2269 = vst.msk [vmem:[#allocation2] sm:$0xff] %vm2268, 0.0
          %vm2270 = vcmask 177152
          %2271 = vst.msk [vmem:[#allocation2 + $0x8] sm:$0x3f] %vm2270, 0.0
          %2272 = vst.msk [vmem:[#allocation2 + $0x10] sm:$0xff] %vm2268, 0.0
          %2273 = vst.msk [vmem:[#allocation2 + $0x18] sm:$0x3f] %vm2270, 0.0
          %2274 = vst.msk [vmem:[#allocation2 + $0x20] sm:$0xff] %vm2268, 0.0
          %2275 = vst.msk [vmem:[#allocation2 + $0x28] sm:$0x3f] %vm2270, 0.0
          %2276 = vst.msk [vmem:[#allocation2 + $0x30] sm:$0xff] %vm2268, 0.0
          %2277 = vst.msk [vmem:[#allocation2 + $0x38] sm:$0x3f] %vm2270, 0.0
          %2278 = vst.msk [vmem:[#allocation2 + $0x40] sm:$0xff] %vm2268, 0.0
          %2279 = vst.msk [vmem:[#allocation2 + $0x48] sm:$0x3f] %vm2270, 0.0
          %2280 = vst.msk [vmem:[#allocation2 + $0x50] sm:$0xff] %vm2268, 0.0
          %2281 = vst.msk [vmem:[#allocation2 + $0x58] sm:$0x3f] %vm2270, 0.0
          %2282 = vst.msk [vmem:[#allocation2 + $0x60] sm:$0xff] %vm2268, 0.0
          %2283 = vst.msk [vmem:[#allocation2 + $0x68] sm:$0x3f] %vm2270, 0.0
          %2284 = vst.msk [vmem:[#allocation2 + $0x70] sm:$0xff] %vm2268, 0.0
          %2285 = vst.msk [vmem:[#allocation2 + $0x78] sm:$0x3f] %vm2270, 0.0
          %2286 = vst.msk [vmem:[#allocation2 + $0x80] sm:$0xff] %vm2268, 0.0
          %2287 = vst.msk [vmem:[#allocation2 + $0x88] sm:$0x3f] %vm2270, 0.0
          %2288 = vst.msk [vmem:[#allocation2 + $0x90] sm:$0xff] %vm2268, 0.0
          %2289 = vst.msk [vmem:[#allocation2 + $0x98] sm:$0x3f] %vm2270, 0.0
          %2290 = vst.msk [vmem:[#allocation2 + $0xa0] sm:$0xff] %vm2268, 0.0
          %2291 = vst.msk [vmem:[#allocation2 + $0xa8] sm:$0x3f] %vm2270, 0.0
          %2292 = vst.msk [vmem:[#allocation2 + $0xb0] sm:$0xff] %vm2268, 0.0
          %2293 = vst.msk [vmem:[#allocation2 + $0xb8] sm:$0x3f] %vm2270, 0.0
          %2294 = vst.msk [vmem:[#allocation2 + $0xc0] sm:$0xff] %vm2268, 0.0
          %2295 = vst.msk [vmem:[#allocation2 + $0xc8] sm:$0x3f] %vm2270, 0.0
          %2296 = vst.msk [vmem:[#allocation2 + $0xd0] sm:$0xff] %vm2268, 0.0
          %2297 = vst.msk [vmem:[#allocation2 + $0xd8] sm:$0x3f] %vm2270, 0.0
          %v2298 = vld [vmem:[%s303] sm:$0xff]
          %v2299 = vld [vmem:[%s303 + $0x8] sm:$0xff]
          %v2300 = vld [vmem:[%s303 + $0x10] sm:$0xff]
          %v2301 = vld [vmem:[%s303 + $0x18] sm:$0xff]
          %v2302 = vld [vmem:[%s303 + $0x20] sm:$0xff]
          %v2303 = vld [vmem:[%s303 + $0x28] sm:$0xff]
          %v2304 = vld [vmem:[%s303 + $0x30] sm:$0xff]
          %v2305 = vld [vmem:[%s303 + $0x38] sm:$0xff]
          %2314 = vrot.lane.b32.xlu0 %v2298, 3
          %v2315 = vpop.permute.xlu0 %2314
          %2316 = vrot.lane.b32.xlu0 %v2299, 3
          %v2317 = vpop.permute.xlu0 %2316
          %2318 = vrot.lane.b32.xlu0 %v2300, 3
          %v2319 = vpop.permute.xlu0 %2318
          %2320 = vrot.lane.b32.xlu0 %v2301, 3
          %v2321 = vpop.permute.xlu0 %2320
          %2322 = vrot.lane.b32.xlu0 %v2302, 3
          %v2323 = vpop.permute.xlu0 %2322
          %2324 = vrot.lane.b32.xlu0 %v2303, 3
          %v2325 = vpop.permute.xlu0 %2324
          %2326 = vrot.lane.b32.xlu0 %v2304, 3
          %v2327 = vpop.permute.xlu0 %2326
          %2328 = vrot.lane.b32.xlu0 %v2305, 3
          %v2329 = vpop.permute.xlu0 %2328
          %s2338 = scalar_lea.vmem [#allocation2], 48
          %vm2339 = vcmask 154648
          %2340 = vst.msk [vmem:[%s2338 + $0x3] sm:$0xff] %vm2339, %v2315
          %2341 = vst.msk [vmem:[%s2338 + $0x13] sm:$0xff] %vm2339, %v2317
          %2342 = vst.msk [vmem:[%s2338 + $0x23] sm:$0xff] %vm2339, %v2319
          %2343 = vst.msk [vmem:[%s2338 + $0x33] sm:$0xff] %vm2339, %v2321
          %2344 = vst.msk [vmem:[%s2338 + $0x43] sm:$0xff] %vm2339, %v2323
          %2345 = vst.msk [vmem:[%s2338 + $0x53] sm:$0xff] %vm2339, %v2325
          %2346 = vst.msk [vmem:[%s2338 + $0x63] sm:$0xff] %vm2339, %v2327
          %2347 = vst.msk [vmem:[%s2338 + $0x73] sm:$0xff] %vm2339, %v2329
          %s2348 = ssub.s32 %s24, 16
          %s2349 = smul.u32 %s2348, 128
          %s2350 = sld [smem:[#allocation8 + %s2349]]
          %v2351 = vld [vmem:[%s2338 + $0x3] sm:$0xff]
          %v2352 = vld [vmem:[%s2338 + $0x13] sm:$0xff]
          %v2353 = vld [vmem:[%s2338 + $0x23] sm:$0xff]
          %v2354 = vld [vmem:[%s2338 + $0x33] sm:$0xff]
          %v2355 = vld [vmem:[%s2338 + $0x43] sm:$0xff]
          %v2356 = vld [vmem:[%s2338 + $0x53] sm:$0xff]
          %v2357 = vld [vmem:[%s2338 + $0x63] sm:$0xff]
          %v2358 = vld [vmem:[%s2338 + $0x73] sm:$0xff]
          %v2359 = vstv %s2350
          %v2360 = vmul.f32 %v2359, %v2351
          %v2361 = vmul.f32 %v2359, %v2352
          %v2362 = vmul.f32 %v2359, %v2353
          %v2363 = vmul.f32 %v2359, %v2354
          %v2364 = vmul.f32 %v2359, %v2355
          %v2365 = vmul.f32 %v2359, %v2356
          %v2366 = vmul.f32 %v2359, %v2357
          %v2367 = vmul.f32 %v2359, %v2358
          %v2368 = vadd.f32 %v2360, 0.0
          %v2369 = vadd.f32 %v2361, 0.0
          %v2370 = vadd.f32 %v2362, 0.0
          %v2371 = vadd.f32 %v2363, 0.0
          %v2372 = vadd.f32 %v2364, 0.0
          %v2373 = vadd.f32 %v2365, 0.0
          %v2374 = vadd.f32 %v2366, 0.0
          %v2375 = vadd.f32 %v2367, 0.0
          %s2376 = sadd.s32 %s2349, 1
          %s2377 = sld [smem:[#allocation8 + %s2376]]
          %v2378 = vstv %s2377
          %v2379 = vmul.f32 %v2378, %v2351
          %v2380 = vmul.f32 %v2378, %v2352
          %v2381 = vmul.f32 %v2378, %v2353
          %v2382 = vmul.f32 %v2378, %v2354
          %v2383 = vmul.f32 %v2378, %v2355
          %v2384 = vmul.f32 %v2378, %v2356
          %v2385 = vmul.f32 %v2378, %v2357
          %v2386 = vmul.f32 %v2378, %v2358
          %2395 = vrot.lane.b32.xlu0 %v2379, 127
          %v2396 = vpop.permute.xlu0 %2395
          %2397 = vrot.lane.b32.xlu0 %v2380, 127
          %v2398 = vpop.permute.xlu0 %2397
          %2399 = vrot.lane.b32.xlu0 %v2381, 127
          %v2400 = vpop.permute.xlu0 %2399
          %2401 = vrot.lane.b32.xlu0 %v2382, 127
          %v2402 = vpop.permute.xlu0 %2401
          %2403 = vrot.lane.b32.xlu0 %v2383, 127
          %v2404 = vpop.permute.xlu0 %2403
          %2405 = vrot.lane.b32.xlu0 %v2384, 127
          %v2406 = vpop.permute.xlu0 %2405
          %2407 = vrot.lane.b32.xlu0 %v2385, 127
          %v2408 = vpop.permute.xlu0 %2407
          %2409 = vrot.lane.b32.xlu0 %v2386, 127
          %v2410 = vpop.permute.xlu0 %2409
          %v2419 = vadd.f32 %v2368, %v2396
          %v2420 = vadd.f32 %v2369, %v2398
          %v2421 = vadd.f32 %v2370, %v2400
          %v2422 = vadd.f32 %v2371, %v2402
          %v2423 = vadd.f32 %v2372, %v2404
          %v2424 = vadd.f32 %v2373, %v2406
          %v2425 = vadd.f32 %v2374, %v2408
          %v2426 = vadd.f32 %v2375, %v2410
          %s2427 = sadd.s32 %s2349, 2
          %s2428 = sld [smem:[#allocation8 + %s2427]]
          %v2429 = vstv %s2428
          %v2430 = vmul.f32 %v2429, %v2351
          %v2431 = vmul.f32 %v2429, %v2352
          %v2432 = vmul.f32 %v2429, %v2353
          %v2433 = vmul.f32 %v2429, %v2354
          %v2434 = vmul.f32 %v2429, %v2355
          %v2435 = vmul.f32 %v2429, %v2356
          %v2436 = vmul.f32 %v2429, %v2357
          %v2437 = vmul.f32 %v2429, %v2358
          %2446 = vrot.lane.b32.xlu0 %v2430, 126
          %v2447 = vpop.permute.xlu0 %2446
          %2448 = vrot.lane.b32.xlu0 %v2431, 126
          %v2449 = vpop.permute.xlu0 %2448
          %2450 = vrot.lane.b32.xlu0 %v2432, 126
          %v2451 = vpop.permute.xlu0 %2450
          %2452 = vrot.lane.b32.xlu0 %v2433, 126
          %v2453 = vpop.permute.xlu0 %2452
          %2454 = vrot.lane.b32.xlu0 %v2434, 126
          %v2455 = vpop.permute.xlu0 %2454
          %2456 = vrot.lane.b32.xlu0 %v2435, 126
          %v2457 = vpop.permute.xlu0 %2456
          %2458 = vrot.lane.b32.xlu0 %v2436, 126
          %v2459 = vpop.permute.xlu0 %2458
          %2460 = vrot.lane.b32.xlu0 %v2437, 126
          %v2461 = vpop.permute.xlu0 %2460
          %v2470 = vadd.f32 %v2419, %v2447
          %v2471 = vadd.f32 %v2420, %v2449
          %v2472 = vadd.f32 %v2421, %v2451
          %v2473 = vadd.f32 %v2422, %v2453
          %v2474 = vadd.f32 %v2423, %v2455
          %v2475 = vadd.f32 %v2424, %v2457
          %v2476 = vadd.f32 %v2425, %v2459
          %v2477 = vadd.f32 %v2426, %v2461
          %s2478 = sadd.s32 %s2349, 3
          %s2479 = sld [smem:[#allocation8 + %s2478]]
          %v2480 = vstv %s2479
          %v2481 = vmul.f32 %v2480, %v2351
          %v2482 = vmul.f32 %v2480, %v2352
          %v2483 = vmul.f32 %v2480, %v2353
          %v2484 = vmul.f32 %v2480, %v2354
          %v2485 = vmul.f32 %v2480, %v2355
          %v2486 = vmul.f32 %v2480, %v2356
          %v2487 = vmul.f32 %v2480, %v2357
          %v2488 = vmul.f32 %v2480, %v2358
          %2497 = vrot.lane.b32.xlu0 %v2481, 125
          %v2498 = vpop.permute.xlu0 %2497
          %2499 = vrot.lane.b32.xlu0 %v2482, 125
          %v2500 = vpop.permute.xlu0 %2499
          %2501 = vrot.lane.b32.xlu0 %v2483, 125
          %v2502 = vpop.permute.xlu0 %2501
          %2503 = vrot.lane.b32.xlu0 %v2484, 125
          %v2504 = vpop.permute.xlu0 %2503
          %2505 = vrot.lane.b32.xlu0 %v2485, 125
          %v2506 = vpop.permute.xlu0 %2505
          %2507 = vrot.lane.b32.xlu0 %v2486, 125
          %v2508 = vpop.permute.xlu0 %2507
          %2509 = vrot.lane.b32.xlu0 %v2487, 125
          %v2510 = vpop.permute.xlu0 %2509
          %2511 = vrot.lane.b32.xlu0 %v2488, 125
          %v2512 = vpop.permute.xlu0 %2511
          %v2521 = vadd.f32 %v2470, %v2498
          %v2522 = vadd.f32 %v2471, %v2500
          %v2523 = vadd.f32 %v2472, %v2502
          %v2524 = vadd.f32 %v2473, %v2504
          %v2525 = vadd.f32 %v2474, %v2506
          %v2526 = vadd.f32 %v2475, %v2508
          %v2527 = vadd.f32 %v2476, %v2510
          %v2528 = vadd.f32 %v2477, %v2512
          %s2529 = sadd.s32 %s2349, 4
          %s2530 = sld [smem:[#allocation8 + %s2529]]
          %v2531 = vstv %s2530
          %v2532 = vmul.f32 %v2531, %v2351
          %v2533 = vmul.f32 %v2531, %v2352
          %v2534 = vmul.f32 %v2531, %v2353
          %v2535 = vmul.f32 %v2531, %v2354
          %v2536 = vmul.f32 %v2531, %v2355
          %v2537 = vmul.f32 %v2531, %v2356
          %v2538 = vmul.f32 %v2531, %v2357
          %v2539 = vmul.f32 %v2531, %v2358
          %2548 = vrot.lane.b32.xlu0 %v2532, 124
          %v2549 = vpop.permute.xlu0 %2548
          %2550 = vrot.lane.b32.xlu0 %v2533, 124
          %v2551 = vpop.permute.xlu0 %2550
          %2552 = vrot.lane.b32.xlu0 %v2534, 124
          %v2553 = vpop.permute.xlu0 %2552
          %2554 = vrot.lane.b32.xlu0 %v2535, 124
          %v2555 = vpop.permute.xlu0 %2554
          %2556 = vrot.lane.b32.xlu0 %v2536, 124
          %v2557 = vpop.permute.xlu0 %2556
          %2558 = vrot.lane.b32.xlu0 %v2537, 124
          %v2559 = vpop.permute.xlu0 %2558
          %2560 = vrot.lane.b32.xlu0 %v2538, 124
          %v2561 = vpop.permute.xlu0 %2560
          %2562 = vrot.lane.b32.xlu0 %v2539, 124
          %v2563 = vpop.permute.xlu0 %2562
          %v2572 = vadd.f32 %v2521, %v2549
          %v2573 = vadd.f32 %v2522, %v2551
          %v2574 = vadd.f32 %v2523, %v2553
          %v2575 = vadd.f32 %v2524, %v2555
          %v2576 = vadd.f32 %v2525, %v2557
          %v2577 = vadd.f32 %v2526, %v2559
          %v2578 = vadd.f32 %v2527, %v2561
          %v2579 = vadd.f32 %v2528, %v2563
          %s2580 = sadd.s32 %s2349, 5
          %s2581 = sld [smem:[#allocation8 + %s2580]]
          %v2582 = vstv %s2581
          %v2583 = vmul.f32 %v2582, %v2351
          %v2584 = vmul.f32 %v2582, %v2352
          %v2585 = vmul.f32 %v2582, %v2353
          %v2586 = vmul.f32 %v2582, %v2354
          %v2587 = vmul.f32 %v2582, %v2355
          %v2588 = vmul.f32 %v2582, %v2356
          %v2589 = vmul.f32 %v2582, %v2357
          %v2590 = vmul.f32 %v2582, %v2358
          %2599 = vrot.lane.b32.xlu0 %v2583, 123
          %v2600 = vpop.permute.xlu0 %2599
          %2601 = vrot.lane.b32.xlu0 %v2584, 123
          %v2602 = vpop.permute.xlu0 %2601
          %2603 = vrot.lane.b32.xlu0 %v2585, 123
          %v2604 = vpop.permute.xlu0 %2603
          %2605 = vrot.lane.b32.xlu0 %v2586, 123
          %v2606 = vpop.permute.xlu0 %2605
          %2607 = vrot.lane.b32.xlu0 %v2587, 123
          %v2608 = vpop.permute.xlu0 %2607
          %2609 = vrot.lane.b32.xlu0 %v2588, 123
          %v2610 = vpop.permute.xlu0 %2609
          %2611 = vrot.lane.b32.xlu0 %v2589, 123
          %v2612 = vpop.permute.xlu0 %2611
          %2613 = vrot.lane.b32.xlu0 %v2590, 123
          %v2614 = vpop.permute.xlu0 %2613
          %v2623 = vadd.f32 %v2572, %v2600
          %v2624 = vadd.f32 %v2573, %v2602
          %v2625 = vadd.f32 %v2574, %v2604
          %v2626 = vadd.f32 %v2575, %v2606
          %v2627 = vadd.f32 %v2576, %v2608
          %v2628 = vadd.f32 %v2577, %v2610
          %v2629 = vadd.f32 %v2578, %v2612
          %v2630 = vadd.f32 %v2579, %v2614
          %s2631 = sadd.s32 %s2349, 6
          %s2632 = sld [smem:[#allocation8 + %s2631]]
          %v2633 = vstv %s2632
          %v2634 = vmul.f32 %v2633, %v2351
          %v2635 = vmul.f32 %v2633, %v2352
          %v2636 = vmul.f32 %v2633, %v2353
          %v2637 = vmul.f32 %v2633, %v2354
          %v2638 = vmul.f32 %v2633, %v2355
          %v2639 = vmul.f32 %v2633, %v2356
          %v2640 = vmul.f32 %v2633, %v2357
          %v2641 = vmul.f32 %v2633, %v2358
          %2650 = vrot.lane.b32.xlu0 %v2634, 122
          %v2651 = vpop.permute.xlu0 %2650
          %2652 = vrot.lane.b32.xlu0 %v2635, 122
          %v2653 = vpop.permute.xlu0 %2652
          %2654 = vrot.lane.b32.xlu0 %v2636, 122
          %v2655 = vpop.permute.xlu0 %2654
          %2656 = vrot.lane.b32.xlu0 %v2637, 122
          %v2657 = vpop.permute.xlu0 %2656
          %2658 = vrot.lane.b32.xlu0 %v2638, 122
          %v2659 = vpop.permute.xlu0 %2658
          %2660 = vrot.lane.b32.xlu0 %v2639, 122
          %v2661 = vpop.permute.xlu0 %2660
          %2662 = vrot.lane.b32.xlu0 %v2640, 122
          %v2663 = vpop.permute.xlu0 %2662
          %2664 = vrot.lane.b32.xlu0 %v2641, 122
          %v2665 = vpop.permute.xlu0 %2664
          %v2674 = vadd.f32 %v2623, %v2651
          %v2675 = vadd.f32 %v2624, %v2653
          %v2676 = vadd.f32 %v2625, %v2655
          %v2677 = vadd.f32 %v2626, %v2657
          %v2678 = vadd.f32 %v2627, %v2659
          %v2679 = vadd.f32 %v2628, %v2661
          %v2680 = vadd.f32 %v2629, %v2663
          %v2681 = vadd.f32 %v2630, %v2665
          %vm2682 = vcmask 130048
          %2683 = vst.msk [vmem:[%s312] sm:$0xff] %vm2682, %v2674
          %2684 = vst.msk [vmem:[%s312 + $0x8] sm:$0xff] %vm2682, %v2675
          %2685 = vst.msk [vmem:[%s312 + $0x10] sm:$0xff] %vm2682, %v2676
          %2686 = vst.msk [vmem:[%s312 + $0x18] sm:$0xff] %vm2682, %v2677
          %2687 = vst.msk [vmem:[%s312 + $0x20] sm:$0xff] %vm2682, %v2678
          %2688 = vst.msk [vmem:[%s312 + $0x28] sm:$0xff] %vm2682, %v2679
          %2689 = vst.msk [vmem:[%s312 + $0x30] sm:$0xff] %vm2682, %v2680
          %2690 = vst.msk [vmem:[%s312 + $0x38] sm:$0xff] %vm2682, %v2681
        $region76: #{tpu_custom_call.1} parent=39 // pred_fallthru
          _
        %p2691 = scmp.lt.s32.totalorder %s23, 1
        %s2692 = scalar_select %p2691, %s23, 1
        %p2693 = scmp.lt.s32.totalorder %s24, 19
        %s2694 = scalar_select %p2693, %s24, 19
        %s2695 = smul.addr %s2694, 8
        %s2696 = smul.addr %s2692, 160
        %s2697 = sadd.s32 %s2695, %s2696
        %s2698 = smul.addr %s2697, 8
        %s2699 = scalar_lea.vmem %s5, %s2698
        // Predicated region
        $region77: #{tpu_custom_call.1} parent=39 // pred_check
          %p2700 = pneg %p163
        $region78: #{tpu_custom_call.1} parent=39 // pred_check_branch
          %2702 = sbr.rel (%p2700) target = $region80
        $region79: #{tpu_custom_call.1} parent=39 // pred_region
          _
        $region80: #{tpu_custom_call.1} parent=39 // pred_fallthru
          _
      $region40: #{tpu_custom_call.1} parent=5 // pred_fallthru
        _
      %p2703 = scmp.le.s32.totalorder 2, %s14
      // Predicated region
      $region81: #{tpu_custom_call.1} parent=5 // pred_check
        %p2704 = pneg %p2703
      $region82: #{tpu_custom_call.1} parent=5 // pred_check_branch
        %2706 = sbr.rel (%p2704) target = $region84
      $region83: #{tpu_custom_call.1} parent=5 // pred_region
        %s2707 = ssub.s32 %s14, 2
        // Predicated region
        $region85: #{tpu_custom_call.1} parent=83 // pred_check
          %p2708 = pneg %p169
        $region86: #{tpu_custom_call.1} parent=83 // pred_check_branch
          %2710 = sbr.rel (%p2708) target = $region88
        $region87: #{tpu_custom_call.1} parent=83 // pred_region
          %p2711 = scmp.lt.s32.totalorder %s25, 1
          %s2712 = scalar_select %p2711, %s25, 1
          %p2713 = scmp.lt.s32.totalorder %s26, 19
          %s2714 = scalar_select %p2713, %s26, 19
          %s2715 = smul.addr %s2714, 8
          %s2716 = smul.addr %s2712, 160
          %s2717 = sadd.s32 %s2715, %s2716
          %s2718 = smul.addr %s2717, 8
          %s2719 = scalar_lea.vmem %s5, %s2718
        $region88: #{tpu_custom_call.1} parent=83 // pred_fallthru
          _
      $region84: #{tpu_custom_call.1} parent=5 // pred_fallthru
        _
    $region6: #{tpu_custom_call.1} parent=1 // loop_footer
      %s18 = sadd.s32 1, %s14
    $region7: #{tpu_custom_call.1} parent=1 // loop_footer_branch
      %13 = sbr.rel target = $region3
    $region8: #{tpu_custom_call.1} parent=1 // loop_exit
      _
    %2720 = vsyncpa [#allocation4], 1
    %s2721 = scalar_lea.sflag [#allocation4], 1
    %2722 = vsyncpa %s2721, 1
    %2723 = vsyncpa [#allocation6], 1
    %2724 = vsyncpa [#allocation9], 1

</llo_original>
